<compile_context>
chip_gen: v7x
topology: tpu7x:2x2x1
jax: 0.10.0
libtpu: 0.0.40
codegen_flags: <defaults>
</compile_context>

<pallas_src>
import jax
import jax.numpy as jnp
from jax.experimental import pallas as pl
from jax.experimental.pallas import tpu as pltpu

_EPS = 1e-5
_LANE = 128
_VMEM_LIMIT = 48 * 1024 * 1024   # sized for v7x (64 MiB physical VMEM per TC)


def _round_up(n, m):
    return ((n + m - 1) // m) * m


def _pick_tile_h(h, w, cin_p, cout_p):
    """Largest row-tile TH dividing H (preferring >=2 tiles) whose working set
    (double-buffered bf16 slab, 9x im2col patch, double-buffered f32 conv tile,
    weights) fits comfortably inside the scoped-VMEM budget."""
    def fits(th):
        slab = (th + 2) * (w + 2) * cin_p * 2 * 2      # bf16 input, 2 buffers
        patch = th * w * 9 * cin_p * 2                 # bf16 im2col temporary
        conv = th * w * cout_p * 4 * 2                 # f32 output, 2 buffers
        wgt = 9 * cin_p * cout_p * 2 * 2               # bf16 weights
        return slab + patch + conv + wgt < _VMEM_LIMIT // 2
    for th in (256, 128, 64, 32, 16, 8, 4, 2):
        if th < h and h % th == 0 and fits(th):
            return th
    return h


# --------------------------------------------------------------------------
# Kernels
# --------------------------------------------------------------------------
def _conv_stats_kernel(xslab_ref, w_ref, conv_ref, stats_ref):
    """3x3 'same' conv of one (TILE_H, W) row-tile as a single K=9*Cin matmul
    (bf16 x bf16 -> f32 on the MXU), plus per-tile per-channel sum / sumsq."""
    th, w, cout = conv_ref.shape
    cin = xslab_ref.shape[-1]

    # im2col fold: 9 shifted windows concatenated along the contraction dim.
    taps = []
    for dy in range(3):
        for dx in range(3):
            taps.append(xslab_ref[dy:dy + th, dx:dx + w, :].reshape(th * w, cin))
    patch = jnp.concatenate(taps, axis=-1)                       # (th*w, 9*cin)

    acc = jnp.dot(patch, w_ref[...], preferred_element_type=jnp.float32)
    conv_ref[...] = acc.reshape(th, w, cout)                     # f32 pre-BN

    # Partial BatchNorm statistics for this tile (finalised in the wrapper).
    s = jnp.sum(acc, axis=0, keepdims=True)                      # (1, cout)
    ss = jnp.sum(acc * acc, axis=0, keepdims=True)               # (1, cout)
    stats_ref[...] = jnp.concatenate(
        [s, ss, jnp.zeros((6, cout), jnp.float32)], axis=0)      # (8, cout)


def _bn_relu_kernel(conv_ref, scale_ref, shift_ref, o_ref):
    """Per-channel affine (BatchNorm with batch statistics) + ReLU."""
    y = conv_ref[...] * scale_ref[...] + shift_ref[...]
    o_ref[...] = jnp.maximum(y, 0.0).astype(o_ref.dtype)


# --------------------------------------------------------------------------
# One Conv -> BN -> ReLU layer
# --------------------------------------------------------------------------
def _conv_bn_relu_layer(x, w9, gamma_p, beta_p, *, out_dtype):
    """x: (N,H,W,Cin_p) bf16 (lane-padded channels); w9: (9*Cin_p, Cout_p) bf16;
    gamma_p/beta_p: (Cout_p,) f32.  Returns (N,H,W,Cout_p) in out_dtype."""
    n, h, w, cin_p = x.shape
    cout_p = w9.shape[1]
    th = _pick_tile_h(h, w, cin_p, cout_p)
    num_h = h // th

    # Overlapping row slabs with a 1-row / 1-col zero halo, gathered once so
    # each grid step gets a private, non-overlapping block (BlockSpec-friendly).
    xp = jnp.pad(x, ((0, 0), (1, 1), (1, 1), (0, 0)))
    rows = jnp.arange(num_h)[:, None] * th + jnp.arange(th + 2)[None, :]
    slabs = xp[:, rows]                            # (N, num_h, th+2, w+2, cin_p)

    cparams = pltpu.CompilerParams(
        dimension_semantics=("parallel", "parallel"),
        vmem_limit_bytes=_VMEM_LIMIT)

    conv_out, stats = pl.pallas_call(
        _conv_stats_kernel,
        grid=(n, num_h),
        in_specs=[
            pl.BlockSpec((None, None, th + 2, w + 2, cin_p),
                         lambda i, j: (i, j, 0, 0, 0)),
            pl.BlockSpec((9 * cin_p, cout_p), lambda i, j: (0, 0)),
        ],
        out_specs=[
            pl.BlockSpec((None, th, w, cout_p), lambda i, j: (i, j, 0, 0)),
            pl.BlockSpec((None, None, 8, cout_p), lambda i, j: (i, j, 0, 0)),
        ],
        out_shape=[
            jax.ShapeDtypeStruct((n, h, w, cout_p), jnp.float32),
            jax.ShapeDtypeStruct((n, num_h, 8, cout_p), jnp.float32),
        ],
        compiler_params=cparams,
    )(slabs, w9)

    # BatchNorm finalisation (training mode: biased variance over N*H*W), f32.
    count = jnp.float32(n * h * w)
    ch_sum = jnp.sum(stats[:, :, 0, :], axis=(0, 1))
    ch_sumsq = jnp.sum(stats[:, :, 1, :], axis=(0, 1))
    mean = ch_sum / count
    var = jnp.maximum(ch_sumsq / count - mean * mean, 0.0)
    scale = gamma_p * jax.lax.rsqrt(var + _EPS)
    shift = beta_p - mean * scale

    out = pl.pallas_call(
        _bn_relu_kernel,
        grid=(n, num_h),
        in_specs=[
            pl.BlockSpec((None, th, w, cout_p), lambda i, j: (i, j, 0, 0)),
            pl.BlockSpec((1, cout_p), lambda i, j: (0, 0)),
            pl.BlockSpec((1, cout_p), lambda i, j: (0, 0)),
        ],
        out_specs=pl.BlockSpec((None, th, w, cout_p), lambda i, j: (i, j, 0, 0)),
        out_shape=jax.ShapeDtypeStruct((n, h, w, cout_p), out_dtype),
        compiler_params=cparams,
    )(conv_out, scale.reshape(1, cout_p), shift.reshape(1, cout_p))
    return out


# --------------------------------------------------------------------------
# Parameter handling + full forward
# --------------------------------------------------------------------------
def _prep_weight(w_hwio, cin_p, cout_p):
    """(3,3,Cin,Cout) HWIO -> zero-padded (9*Cin_p, Cout_p) bf16 (K-folded)."""
    kh, kw, cin, cout = w_hwio.shape
    wp = jnp.zeros((kh, kw, cin_p, cout_p), jnp.float32)
    wp = wp.at[:, :, :cin, :cout].set(w_hwio)
    return wp.reshape(kh * kw * cin_p, cout_p).astype(jnp.bfloat16)


def _pad_channel_vec(v, c_p):
    return jnp.zeros((c_p,), jnp.float32).at[:v.shape[0]].set(v)


def init_conv_block_params(key, in_channels, out_channels):
    """Deterministic synthetic params (shapes mirror nn.Conv2d / nn.BatchNorm2d)."""
    k1, k2, k3, k4 = jax.random.split(key, 4)
    return {
        "w1": jax.random.normal(k1, (3, 3, in_channels, out_channels), jnp.float32) * 0.1,
        "b1": jax.random.normal(k2, (out_channels,), jnp.float32) * 0.1,
        "g1": jnp.ones((out_channels,), jnp.float32),
        "be1": jnp.zeros((out_channels,), jnp.float32),
        "w2": jax.random.normal(k3, (3, 3, out_channels, out_channels), jnp.float32) * 0.1,
        "b2": jax.random.normal(k4, (out_channels,), jnp.float32) * 0.1,
        "g2": jnp.ones((out_channels,), jnp.float32),
        "be2": jnp.zeros((out_channels,), jnp.float32),
    }


@jax.jit
def conv_block_forward(x_nchw, params):
    """Matches conv_block.forward (training-mode BN): NCHW in, NCHW out (f32)."""
    n, cin, h, w = x_nchw.shape
    cout = params["w1"].shape[-1]
    cin_p = _round_up(cin, _LANE)
    cout_p = _round_up(cout, _LANE)

    # NCHW -> NHWC, lane-pad channels, bf16 activations for the MXU.
    x = jnp.transpose(x_nchw, (0, 2, 3, 1)).astype(jnp.bfloat16)
    x = jnp.pad(x, ((0, 0), (0, 0), (0, 0), (0, cin_p - cin)))

    # Conv biases b1/b2 are exactly cancelled by training-mode BatchNorm's mean
    # subtraction, so they are not plumbed into the kernels.
    w1 = _prep_weight(params["w1"], cin_p, cout_p)
    w2 = _prep_weight(params["w2"], cout_p, cout_p)
    g1 = _pad_channel_vec(params["g1"], cout_p)
    be1 = _pad_channel_vec(params["be1"], cout_p)
    g2 = _pad_channel_vec(params["g2"], cout_p)
    be2 = _pad_channel_vec(params["be2"], cout_p)

    h1 = _conv_bn_relu_layer(x, w1, g1, be1, out_dtype=jnp.bfloat16)
    h2 = _conv_bn_relu_layer(h1, w2, g2, be2, out_dtype=jnp.float32)

    return jnp.transpose(h2[..., :cout], (0, 3, 1, 2))


# --------------------------------------------------------------------------
# Pure-JAX reference (same precision policy: bf16 conv operands, f32 stats,
# bf16 inter-layer intermediate).  The conv bias IS applied here, which also
# demonstrates that training-mode BN cancels it exactly.
# --------------------------------------------------------------------------
def _reference(x_nchw, params):
    def layer(x, w_hwio, b, g, be):
        xb = x.astype(jnp.bfloat16).astype(jnp.float32)
        wb = w_hwio.astype(jnp.bfloat16).astype(jnp.float32)
        y = jax.lax.conv_general_dilated(
            xb, wb, window_strides=(1, 1), padding="SAME",
            dimension_numbers=("NHWC", "HWIO", "NHWC")) + b
        m = jnp.mean(y, axis=(0, 1, 2))
        v = jnp.mean(jnp.square(y - m), axis=(0, 1, 2))
        return jnp.maximum((y - m) * jax.lax.rsqrt(v + _EPS) * g + be, 0.0)

    x = jnp.transpose(x_nchw, (0, 2, 3, 1)).astype(jnp.float32)
    h1 = layer(x, params["w1"], params["b1"], params["g1"], params["be1"])
    h1 = h1.astype(jnp.bfloat16).astype(jnp.float32)
    h2 = layer(h1, params["w2"], params["b2"], params["g2"], params["be2"])
    return jnp.transpose(h2, (0, 3, 1, 2))


if __name__ == "__main__":
    key = jax.random.PRNGKey(0)
    kx, kp = jax.random.split(key)

    batch, in_channels, out_channels, height, width = 2, 4, 8, 16, 16
    x = jax.random.normal(kx, (batch, in_channels, height, width), jnp.float32)
    params = init_conv_block_params(kp, in_channels, out_channels)

    out = conv_block_forward(x, params)
    jax.block_until_ready(out)

    assert out.shape == (batch, out_channels, height, width), out.shape
    assert out.dtype == jnp.float32

    ref = _reference(x, params)
    max_err = float(jnp.max(jnp.abs(out - ref)))
    assert max_err < 2e-2, f"max abs err vs reference = {max_err}"

    print("KERNEL_OK")
</pallas_src>

<mosaic_0001>
module attributes {stable_mosaic.version = 11 : i64} {
  func.func @_conv_stats_kernel(%arg0: i32, %arg1: i32, %arg2: memref<1x1x10x18x128xbf16, #tpu.memory_space<vmem>>, %arg3: memref<1152x128xbf16, #tpu.memory_space<vmem>>, %arg4: memref<1x8x16x128xf32, #tpu.memory_space<vmem>>, %arg5: memref<1x1x8x128xf32, #tpu.memory_space<vmem>>) attributes {dimension_semantics = [#tpu.dimension_semantics<parallel>, #tpu.dimension_semantics<parallel>], iteration_bounds = array<i64: 2, 2>, scalar_prefetch = 0 : i64, scratch_operands = 0 : i64, tpu.core_type = #tpu.core_type<tc>, window_params = [{transform_indices = @transform_0, window_bounds = array<i64: 1, 1, 10, 18, 128>}, {pipeline_mode = #tpu.pipeline_mode<synchronous>, transform_indices = @transform_1, window_bounds = array<i64: 1152, 128>}, {transform_indices = @transform_2, window_bounds = array<i64: 1, 8, 16, 128>}, {transform_indices = @transform_3, window_bounds = array<i64: 1, 1, 8, 128>}]} {
    %c0 = arith.constant 0 : index
    %c0_0 = arith.constant 0 : index
    %c0_1 = arith.constant 0 : index
    %c0_2 = arith.constant 0 : index
    %c0_3 = arith.constant 0 : index
    %0 = vector.load %arg2[%c0, %c0_0, %c0_1, %c0_2, %c0_3] : memref<1x1x10x18x128xbf16, #tpu.memory_space<vmem>>, vector<1x1x8x16x128xbf16>
    %1 = vector.shape_cast %0 : vector<1x1x8x16x128xbf16> to vector<8x16x128xbf16>
    %2 = vector.shape_cast %1 : vector<8x16x128xbf16> to vector<128x128xbf16>
    %c0_4 = arith.constant 0 : index
    %c0_5 = arith.constant 0 : index
    %c0_6 = arith.constant 0 : index
    %c1 = arith.constant 1 : index
    %c0_7 = arith.constant 0 : index
    %3 = vector.load %arg2[%c0_4, %c0_5, %c0_6, %c1, %c0_7] : memref<1x1x10x18x128xbf16, #tpu.memory_space<vmem>>, vector<1x1x8x16x128xbf16>
    %4 = vector.shape_cast %3 : vector<1x1x8x16x128xbf16> to vector<8x16x128xbf16>
    %5 = vector.shape_cast %4 : vector<8x16x128xbf16> to vector<128x128xbf16>
    %c0_8 = arith.constant 0 : index
    %c0_9 = arith.constant 0 : index
    %c0_10 = arith.constant 0 : index
    %c2 = arith.constant 2 : index
    %c0_11 = arith.constant 0 : index
    %6 = vector.load %arg2[%c0_8, %c0_9, %c0_10, %c2, %c0_11] : memref<1x1x10x18x128xbf16, #tpu.memory_space<vmem>>, vector<1x1x8x16x128xbf16>
    %7 = vector.shape_cast %6 : vector<1x1x8x16x128xbf16> to vector<8x16x128xbf16>
    %8 = vector.shape_cast %7 : vector<8x16x128xbf16> to vector<128x128xbf16>
    %c0_12 = arith.constant 0 : index
    %c0_13 = arith.constant 0 : index
    %c1_14 = arith.constant 1 : index
    %c0_15 = arith.constant 0 : index
    %c0_16 = arith.constant 0 : index
    %9 = vector.load %arg2[%c0_12, %c0_13, %c1_14, %c0_15, %c0_16] : memref<1x1x10x18x128xbf16, #tpu.memory_space<vmem>>, vector<1x1x8x16x128xbf16>
    %10 = vector.shape_cast %9 : vector<1x1x8x16x128xbf16> to vector<8x16x128xbf16>
    %11 = vector.shape_cast %10 : vector<8x16x128xbf16> to vector<128x128xbf16>
    %c0_17 = arith.constant 0 : index
    %c0_18 = arith.constant 0 : index
    %c1_19 = arith.constant 1 : index
    %c1_20 = arith.constant 1 : index
    %c0_21 = arith.constant 0 : index
    %12 = vector.load %arg2[%c0_17, %c0_18, %c1_19, %c1_20, %c0_21] : memref<1x1x10x18x128xbf16, #tpu.memory_space<vmem>>, vector<1x1x8x16x128xbf16>
    %13 = vector.shape_cast %12 : vector<1x1x8x16x128xbf16> to vector<8x16x128xbf16>
    %14 = vector.shape_cast %13 : vector<8x16x128xbf16> to vector<128x128xbf16>
    %c0_22 = arith.constant 0 : index
    %c0_23 = arith.constant 0 : index
    %c1_24 = arith.constant 1 : index
    %c2_25 = arith.constant 2 : index
    %c0_26 = arith.constant 0 : index
    %15 = vector.load %arg2[%c0_22, %c0_23, %c1_24, %c2_25, %c0_26] : memref<1x1x10x18x128xbf16, #tpu.memory_space<vmem>>, vector<1x1x8x16x128xbf16>
    %16 = vector.shape_cast %15 : vector<1x1x8x16x128xbf16> to vector<8x16x128xbf16>
    %17 = vector.shape_cast %16 : vector<8x16x128xbf16> to vector<128x128xbf16>
    %c0_27 = arith.constant 0 : index
    %c0_28 = arith.constant 0 : index
    %c2_29 = arith.constant 2 : index
    %c0_30 = arith.constant 0 : index
    %c0_31 = arith.constant 0 : index
    %18 = vector.load %arg2[%c0_27, %c0_28, %c2_29, %c0_30, %c0_31] : memref<1x1x10x18x128xbf16, #tpu.memory_space<vmem>>, vector<1x1x8x16x128xbf16>
    %19 = vector.shape_cast %18 : vector<1x1x8x16x128xbf16> to vector<8x16x128xbf16>
    %20 = vector.shape_cast %19 : vector<8x16x128xbf16> to vector<128x128xbf16>
    %c0_32 = arith.constant 0 : index
    %c0_33 = arith.constant 0 : index
    %c2_34 = arith.constant 2 : index
    %c1_35 = arith.constant 1 : index
    %c0_36 = arith.constant 0 : index
    %21 = vector.load %arg2[%c0_32, %c0_33, %c2_34, %c1_35, %c0_36] : memref<1x1x10x18x128xbf16, #tpu.memory_space<vmem>>, vector<1x1x8x16x128xbf16>
    %22 = vector.shape_cast %21 : vector<1x1x8x16x128xbf16> to vector<8x16x128xbf16>
    %23 = vector.shape_cast %22 : vector<8x16x128xbf16> to vector<128x128xbf16>
    %c0_37 = arith.constant 0 : index
    %c0_38 = arith.constant 0 : index
    %c2_39 = arith.constant 2 : index
    %c2_40 = arith.constant 2 : index
    %c0_41 = arith.constant 0 : index
    %24 = vector.load %arg2[%c0_37, %c0_38, %c2_39, %c2_40, %c0_41] : memref<1x1x10x18x128xbf16, #tpu.memory_space<vmem>>, vector<1x1x8x16x128xbf16>
    %25 = vector.shape_cast %24 : vector<1x1x8x16x128xbf16> to vector<8x16x128xbf16>
    %26 = vector.shape_cast %25 : vector<8x16x128xbf16> to vector<128x128xbf16>
    %27 = tpu.concatenate %2, %5, %8, %11, %14, %17, %20, %23, %26 in 1 : vector<128x128xbf16>, vector<128x128xbf16>, vector<128x128xbf16>, vector<128x128xbf16>, vector<128x128xbf16>, vector<128x128xbf16>, vector<128x128xbf16>, vector<128x128xbf16>, vector<128x128xbf16> -> vector<128x1152xbf16>
    %c0_42 = arith.constant 0 : index
    %c0_43 = arith.constant 0 : index
    %28 = vector.load %arg3[%c0_42, %c0_43] : memref<1152x128xbf16, #tpu.memory_space<vmem>>, vector<1152x128xbf16>
    %cst = arith.constant dense<0.000000e+00> : vector<128x128xf32>
    %29 = tpu.matmul %27, %28, %cst {dimension_numbers = #tpu.dot_dimension_numbers<[1], [0], [0], [1], [0, 0, 1, 1], [], []>} : vector<128x1152xbf16>, vector<1152x128xbf16>, vector<128x128xf32> -> vector<128x128xf32>
    %30 = vector.shape_cast %29 : vector<128x128xf32> to vector<8x16x128xf32>
    %c0_44 = arith.constant 0 : index
    %c0_45 = arith.constant 0 : index
    %c0_46 = arith.constant 0 : index
    %c0_47 = arith.constant 0 : index
    %31 = vector.load %arg4[%c0_44, %c0_45, %c0_46, %c0_47] : memref<1x8x16x128xf32, #tpu.memory_space<vmem>>, vector<1x8x16x128xf32>
    %32 = vector.shape_cast %31 : vector<1x8x16x128xf32> to vector<8x16x128xf32>
    %33 = vector.shape_cast %30 : vector<8x16x128xf32> to vector<1x8x16x128xf32>
    tpu.vector_store %arg4[%c0_44, %c0_45, %c0_46, %c0_47], %33 {strides = array<i32>} : memref<1x8x16x128xf32, #tpu.memory_space<vmem>>, vector<1x8x16x128xf32>,
    %cst_48 = arith.constant dense<0.000000e+00> : vector<128xf32>
    %34 = vector.multi_reduction <add>, %29, %cst_48 [0] : vector<128x128xf32> to vector<128xf32>
    %35 = vector.shape_cast %34 : vector<128xf32> to vector<1x128xf32>
    %36 = arith.mulf %29, %29 : vector<128x128xf32>
    %cst_49 = arith.constant dense<0.000000e+00> : vector<128xf32>
    %37 = vector.multi_reduction <add>, %36, %cst_49 [0] : vector<128x128xf32> to vector<128xf32>
    %38 = vector.shape_cast %37 : vector<128xf32> to vector<1x128xf32>
    %cst_50 = arith.constant 0.000000e+00 : f32
    %39 = vector.broadcast %cst_50 : f32 to vector<6x128xf32>
    %40 = tpu.concatenate %35, %38, %39 in 0 : vector<1x128xf32>, vector<1x128xf32>, vector<6x128xf32> -> vector<8x128xf32>
    %c0_51 = arith.constant 0 : index
    %c0_52 = arith.constant 0 : index
    %c0_53 = arith.constant 0 : index
    %c0_54 = arith.constant 0 : index
    %41 = vector.load %arg5[%c0_51, %c0_52, %c0_53, %c0_54] : memref<1x1x8x128xf32, #tpu.memory_space<vmem>>, vector<1x1x8x128xf32>
    %42 = vector.shape_cast %41 : vector<1x1x8x128xf32> to vector<8x128xf32>
    %43 = vector.shape_cast %40 : vector<8x128xf32> to vector<1x1x8x128xf32>
    tpu.vector_store %arg5[%c0_51, %c0_52, %c0_53, %c0_54], %43 {strides = array<i32>} : memref<1x1x8x128xf32, #tpu.memory_space<vmem>>, vector<1x1x8x128xf32>,
    return
  }
  func.func @transform_0(%arg0: i32, %arg1: i32) -> (i32, i32, i32, i32, i32) {
    %c0_i32 = arith.constant 0 : i32
    %c0_i32_0 = arith.constant 0 : i32
    %c0_i32_1 = arith.constant 0 : i32
    %c0_i32_2 = arith.constant 0 : i32
    return %arg0, %arg1, %c0_i32, %c0_i32_0, %c0_i32_1 : i32, i32, i32, i32, i32
  }
  func.func @transform_1(%arg0: i32, %arg1: i32) -> (i32, i32) {
    %c0_i32 = arith.constant 0 : i32
    %c0_i32_0 = arith.constant 0 : i32
    %c0_i32_1 = arith.constant 0 : i32
    return %c0_i32, %c0_i32_0 : i32, i32
  }
  func.func @transform_2(%arg0: i32, %arg1: i32) -> (i32, i32, i32, i32) {
    %c0_i32 = arith.constant 0 : i32
    %c0_i32_0 = arith.constant 0 : i32
    %c0_i32_1 = arith.constant 0 : i32
    return %arg0, %arg1, %c0_i32, %c0_i32_0 : i32, i32, i32, i32
  }
  func.func @transform_3(%arg0: i32, %arg1: i32) -> (i32, i32, i32, i32) {
    %c0_i32 = arith.constant 0 : i32
    %c0_i32_0 = arith.constant 0 : i32
    %c0_i32_1 = arith.constant 0 : i32
    return %arg0, %arg1, %c0_i32, %c0_i32_0 : i32, i32, i32, i32
  }
}

module attributes {stable_mosaic.version = 11 : i64} {
  func.func @_bn_relu_kernel(%arg0: i32, %arg1: i32, %arg2: memref<1x8x16x128xf32, #tpu.memory_space<vmem>>, %arg3: memref<1x128xf32, #tpu.memory_space<vmem>>, %arg4: memref<1x128xf32, #tpu.memory_space<vmem>>, %arg5: memref<1x8x16x128xbf16, #tpu.memory_space<vmem>>) attributes {dimension_semantics = [#tpu.dimension_semantics<parallel>, #tpu.dimension_semantics<parallel>], iteration_bounds = array<i64: 2, 2>, scalar_prefetch = 0 : i64, scratch_operands = 0 : i64, tpu.core_type = #tpu.core_type<tc>, window_params = [{transform_indices = @transform_0, window_bounds = array<i64: 1, 8, 16, 128>}, {pipeline_mode = #tpu.pipeline_mode<synchronous>, transform_indices = @transform_1, window_bounds = array<i64: 1, 128>}, {pipeline_mode = #tpu.pipeline_mode<synchronous>, transform_indices = @transform_2, window_bounds = array<i64: 1, 128>}, {transform_indices = @transform_3, window_bounds = array<i64: 1, 8, 16, 128>}]} {
    %c0 = arith.constant 0 : index
    %c0_0 = arith.constant 0 : index
    %c0_1 = arith.constant 0 : index
    %c0_2 = arith.constant 0 : index
    %0 = vector.load %arg2[%c0, %c0_0, %c0_1, %c0_2] : memref<1x8x16x128xf32, #tpu.memory_space<vmem>>, vector<1x8x16x128xf32>
    %1 = vector.shape_cast %0 : vector<1x8x16x128xf32> to vector<8x16x128xf32>
    %c0_3 = arith.constant 0 : index
    %c0_4 = arith.constant 0 : index
    %2 = vector.load %arg3[%c0_3, %c0_4] : memref<1x128xf32, #tpu.memory_space<vmem>>, vector<1x128xf32>
    %3 = vector.shape_cast %2 : vector<1x128xf32> to vector<1x1x128xf32>
    %4 = vector.broadcast %3 : vector<1x1x128xf32> to vector<8x16x128xf32>
    %5 = arith.mulf %1, %4 : vector<8x16x128xf32>
    %c0_5 = arith.constant 0 : index
    %c0_6 = arith.constant 0 : index
    %6 = vector.load %arg4[%c0_5, %c0_6] : memref<1x128xf32, #tpu.memory_space<vmem>>, vector<1x128xf32>
    %7 = vector.shape_cast %6 : vector<1x128xf32> to vector<1x1x128xf32>
    %8 = vector.broadcast %7 : vector<1x1x128xf32> to vector<8x16x128xf32>
    %9 = arith.addf %5, %8 : vector<8x16x128xf32>
    %cst = arith.constant 0.000000e+00 : f32
    %10 = vector.broadcast %cst : f32 to vector<8x16x128xf32>
    %11 = arith.maximumf %9, %10 : vector<8x16x128xf32>
    %12 = arith.truncf %11 : vector<8x16x128xf32> to vector<8x16x128xbf16>
    %c0_7 = arith.constant 0 : index
    %c0_8 = arith.constant 0 : index
    %c0_9 = arith.constant 0 : index
    %c0_10 = arith.constant 0 : index
    %13 = vector.load %arg5[%c0_7, %c0_8, %c0_9, %c0_10] : memref<1x8x16x128xbf16, #tpu.memory_space<vmem>>, vector<1x8x16x128xbf16>
    %14 = vector.shape_cast %13 : vector<1x8x16x128xbf16> to vector<8x16x128xbf16>
    %15 = vector.shape_cast %12 : vector<8x16x128xbf16> to vector<1x8x16x128xbf16>
    tpu.vector_store %arg5[%c0_7, %c0_8, %c0_9, %c0_10], %15 {strides = array<i32>} : memref<1x8x16x128xbf16, #tpu.memory_space<vmem>>, vector<1x8x16x128xbf16>,
    return
  }
  func.func @transform_0(%arg0: i32, %arg1: i32) -> (i32, i32, i32, i32) {
    %c0_i32 = arith.constant 0 : i32
    %c0_i32_0 = arith.constant 0 : i32
    %c0_i32_1 = arith.constant 0 : i32
    return %arg0, %arg1, %c0_i32, %c0_i32_0 : i32, i32, i32, i32
  }
  func.func @transform_1(%arg0: i32, %arg1: i32) -> (i32, i32) {
    %c0_i32 = arith.constant 0 : i32
    %c0_i32_0 = arith.constant 0 : i32
    %c0_i32_1 = arith.constant 0 : i32
    return %c0_i32, %c0_i32_0 : i32, i32
  }
  func.func @transform_2(%arg0: i32, %arg1: i32) -> (i32, i32) {
    %c0_i32 = arith.constant 0 : i32
    %c0_i32_0 = arith.constant 0 : i32
    %c0_i32_1 = arith.constant 0 : i32
    return %c0_i32, %c0_i32_0 : i32, i32
  }
  func.func @transform_3(%arg0: i32, %arg1: i32) -> (i32, i32, i32, i32) {
    %c0_i32 = arith.constant 0 : i32
    %c0_i32_0 = arith.constant 0 : i32
    %c0_i32_1 = arith.constant 0 : i32
    return %arg0, %arg1, %c0_i32, %c0_i32_0 : i32, i32, i32, i32
  }
}

module attributes {stable_mosaic.version = 11 : i64} {
  func.func @_bn_relu_kernel(%arg0: i32, %arg1: i32, %arg2: memref<1x8x16x128xf32, #tpu.memory_space<vmem>>, %arg3: memref<1x128xf32, #tpu.memory_space<vmem>>, %arg4: memref<1x128xf32, #tpu.memory_space<vmem>>, %arg5: memref<1x8x16x128xf32, #tpu.memory_space<vmem>>) attributes {dimension_semantics = [#tpu.dimension_semantics<parallel>, #tpu.dimension_semantics<parallel>], iteration_bounds = array<i64: 2, 2>, scalar_prefetch = 0 : i64, scratch_operands = 0 : i64, tpu.core_type = #tpu.core_type<tc>, window_params = [{transform_indices = @transform_0, window_bounds = array<i64: 1, 8, 16, 128>}, {pipeline_mode = #tpu.pipeline_mode<synchronous>, transform_indices = @transform_1, window_bounds = array<i64: 1, 128>}, {pipeline_mode = #tpu.pipeline_mode<synchronous>, transform_indices = @transform_2, window_bounds = array<i64: 1, 128>}, {transform_indices = @transform_3, window_bounds = array<i64: 1, 8, 16, 128>}]} {
    %c0 = arith.constant 0 : index
    %c0_0 = arith.constant 0 : index
    %c0_1 = arith.constant 0 : index
    %c0_2 = arith.constant 0 : index
    %0 = vector.load %arg2[%c0, %c0_0, %c0_1, %c0_2] : memref<1x8x16x128xf32, #tpu.memory_space<vmem>>, vector<1x8x16x128xf32>
    %1 = vector.shape_cast %0 : vector<1x8x16x128xf32> to vector<8x16x128xf32>
    %c0_3 = arith.constant 0 : index
    %c0_4 = arith.constant 0 : index
    %2 = vector.load %arg3[%c0_3, %c0_4] : memref<1x128xf32, #tpu.memory_space<vmem>>, vector<1x128xf32>
    %3 = vector.shape_cast %2 : vector<1x128xf32> to vector<1x1x128xf32>
    %4 = vector.broadcast %3 : vector<1x1x128xf32> to vector<8x16x128xf32>
    %5 = arith.mulf %1, %4 : vector<8x16x128xf32>
    %c0_5 = arith.constant 0 : index
    %c0_6 = arith.constant 0 : index
    %6 = vector.load %arg4[%c0_5, %c0_6] : memref<1x128xf32, #tpu.memory_space<vmem>>, vector<1x128xf32>
    %7 = vector.shape_cast %6 : vector<1x128xf32> to vector<1x1x128xf32>
    %8 = vector.broadcast %7 : vector<1x1x128xf32> to vector<8x16x128xf32>
    %9 = arith.addf %5, %8 : vector<8x16x128xf32>
    %cst = arith.constant 0.000000e+00 : f32
    %10 = vector.broadcast %cst : f32 to vector<8x16x128xf32>
    %11 = arith.maximumf %9, %10 : vector<8x16x128xf32>
    %c0_7 = arith.constant 0 : index
    %c0_8 = arith.constant 0 : index
    %c0_9 = arith.constant 0 : index
    %c0_10 = arith.constant 0 : index
    %12 = vector.load %arg5[%c0_7, %c0_8, %c0_9, %c0_10] : memref<1x8x16x128xf32, #tpu.memory_space<vmem>>, vector<1x8x16x128xf32>
    %13 = vector.shape_cast %12 : vector<1x8x16x128xf32> to vector<8x16x128xf32>
    %14 = vector.shape_cast %11 : vector<8x16x128xf32> to vector<1x8x16x128xf32>
    tpu.vector_store %arg5[%c0_7, %c0_8, %c0_9, %c0_10], %14 {strides = array<i32>} : memref<1x8x16x128xf32, #tpu.memory_space<vmem>>, vector<1x8x16x128xf32>,
    return
  }
  func.func @transform_0(%arg0: i32, %arg1: i32) -> (i32, i32, i32, i32) {
    %c0_i32 = arith.constant 0 : i32
    %c0_i32_0 = arith.constant 0 : i32
    %c0_i32_1 = arith.constant 0 : i32
    return %arg0, %arg1, %c0_i32, %c0_i32_0 : i32, i32, i32, i32
  }
  func.func @transform_1(%arg0: i32, %arg1: i32) -> (i32, i32) {
    %c0_i32 = arith.constant 0 : i32
    %c0_i32_0 = arith.constant 0 : i32
    %c0_i32_1 = arith.constant 0 : i32
    return %c0_i32, %c0_i32_0 : i32, i32
  }
  func.func @transform_2(%arg0: i32, %arg1: i32) -> (i32, i32) {
    %c0_i32 = arith.constant 0 : i32
    %c0_i32_0 = arith.constant 0 : i32
    %c0_i32_1 = arith.constant 0 : i32
    return %c0_i32, %c0_i32_0 : i32, i32
  }
  func.func @transform_3(%arg0: i32, %arg1: i32) -> (i32, i32, i32, i32) {
    %c0_i32 = arith.constant 0 : i32
    %c0_i32_0 = arith.constant 0 : i32
    %c0_i32_1 = arith.constant 0 : i32
    return %arg0, %arg1, %c0_i32, %c0_i32_0 : i32, i32, i32, i32
  }
}

</mosaic_0001>

<llo_original>
// kernel: conv_block_forward.5
$region0: #{conv_block_forward.5}
  #allocation0 [shape = 'u32[]', space=smem, size = 0x4, offset = 0x4, fixed_abs, tag = 'smem constant byte address 0x4 - core index']
  #allocation1 [shape = 'u32[144,128]{1,0:T(1,128)}', space=vmem, size = 0x12000, scoped, tag = 'internal scratch']
  %s0 = inlined_call_operand.vmem [shape: f32[2,16,16,128], index: 0, kind: input, shape index: {}]
  %s1 = inlined_call_operand.vmem [shape: f32[1,128], index: 1, kind: input, shape index: {}]
  %s2 = inlined_call_operand.vmem [shape: f32[1,128], index: 2, kind: input, shape index: {}]
  %s3 = inlined_call_operand.vmem [shape: bf16[2,16,16,128], index: 3, kind: output, shape index: {}]
  %s4 = sld [smem:[#allocation0]]
  $region45: #{conv_block_forward.5} parent=0
    _
  %s6 = ssub.s32 1, %s4
  %s7 = scalar_select 0, %s6, %s4
  loop: start=0, step=1, limit=6
  $region2: #{conv_block_forward.5} parent=0 // loop_pre_header
    _
  $region3: #{conv_block_forward.5} parent=0 // loop_header
    %s9 = sphi 0, %s13
    %p10 = scmp.ge.s32.totalorder %s9, 6
    %s16 = sphi 0, %s28
    %s17 = sphi 0, %s24
    %s18 = sphi 0, %s16
    %s19 = sphi 0, %s17
    %s20 = sphi 0, %s18
    %s21 = sphi 0, %s19
    %s33 = sphi 0, %s35
    %s36 = sphi 0, %s33
    %s37 = sphi 0, %s36
    %s53 = sphi 0, %s37
    %s57 = sphi 0, %s57
    %s59 = sphi 0, %s57
    %s60 = sphi 0, %s59
    %s74 = sphi 0, %s60
    %s78 = sphi 0, %s78
    %s80 = sphi 0, %s78
    %s81 = sphi 0, %s80
    %s95 = sphi 0, %s81
    %s103 = sphi 0, %s105
    %s106 = sphi 0, %s103
    %s107 = sphi 0, %s106
    %s123 = sphi 0, %s107
  $region4: #{conv_block_forward.5} parent=0 // loop_header_branch
    %12 = sbr.rel (%p10) target = $region8
  $region5: #{conv_block_forward.5} parent=0 // loop_body
    %s14 = ssub.s32 %s9, 1
    %s15 = ssub.s32 %s9, 2
    %s22 = sadd.s32 1, %s17
    %p23 = scmp.ge.s32.totalorder %s22, 2
    %s24 = scalar_select %p23, 0, %s22
    %s25 = sadd.s32 1, %s16
    %s26 = scalar_select %p23, %s25, %s16
    %p27 = scmp.ge.s32.totalorder %s26, 2
    %s28 = scalar_select %p27, 0, %s26
    %s29 = ssub.s32 %s16, %s28
    %s30 = ssub.s32 %s17, %s24
    %s31 = sor.u32 %s29, %s30
    %p32 = scmp.eq.s32.totalorder %s31, 0
    %s34 = sadd.s32 %s33, 1
    %s35 = scalar_select %p32, %s33, %s34
    %p38 = pneg %p32
    %p39 = scmp.eq.s32.totalorder %s9, 3
    %p40 = por %p38, %p39
    %p41 = scmp.ne.s32.totalorder %s33, %s36
    %p42 = scmp.eq.s32.totalorder %s9, 0
    %p43 = por %p41, %p42
    %p44 = scmp.ne.s32.totalorder %s33, %s36
    %p45 = scmp.eq.s32.totalorder %s14, 3
    %p46 = por %p44, %p45
    %p47 = scmp.ne.s32.totalorder %s36, %s37
    %p48 = scmp.eq.s32.totalorder %s14, 0
    %p49 = por %p47, %p48
    %p50 = scmp.ne.s32.totalorder %s36, %s37
    %p51 = scmp.eq.s32.totalorder %s15, 3
    %p52 = por %p50, %p51
    %p54 = scmp.ne.s32.totalorder %s37, %s53
    %p55 = scmp.eq.s32.totalorder %s15, 0
    %p56 = por %p54, %p55
    %s58 = sadd.s32 %s57, 1
    %p61 = scmp.eq.s32.totalorder %s9, 3
    %p62 = scmp.ne.s32.totalorder %s57, %s59
    %p63 = scmp.eq.s32.totalorder %s9, 0
    %p64 = por %p62, %p63
    %p65 = scmp.ne.s32.totalorder %s57, %s59
    %p66 = scmp.eq.s32.totalorder %s14, 3
    %p67 = por %p65, %p66
    %p68 = scmp.ne.s32.totalorder %s59, %s60
    %p69 = scmp.eq.s32.totalorder %s14, 0
    %p70 = por %p68, %p69
    %p71 = scmp.ne.s32.totalorder %s59, %s60
    %p72 = scmp.eq.s32.totalorder %s15, 3
    %p73 = por %p71, %p72
    %p75 = scmp.ne.s32.totalorder %s60, %s74
    %p76 = scmp.eq.s32.totalorder %s15, 0
    %p77 = por %p75, %p76
    %s79 = sadd.s32 %s78, 1
    %p82 = scmp.eq.s32.totalorder %s9, 3
    %p83 = scmp.ne.s32.totalorder %s78, %s80
    %p84 = scmp.eq.s32.totalorder %s9, 0
    %p85 = por %p83, %p84
    %p86 = scmp.ne.s32.totalorder %s78, %s80
    %p87 = scmp.eq.s32.totalorder %s14, 3
    %p88 = por %p86, %p87
    %p89 = scmp.ne.s32.totalorder %s80, %s81
    %p90 = scmp.eq.s32.totalorder %s14, 0
    %p91 = por %p89, %p90
    %p92 = scmp.ne.s32.totalorder %s80, %s81
    %p93 = scmp.eq.s32.totalorder %s15, 3
    %p94 = por %p92, %p93
    %p96 = scmp.ne.s32.totalorder %s81, %s95
    %p97 = scmp.eq.s32.totalorder %s15, 0
    %p98 = por %p96, %p97
    %s99 = ssub.s32 %s16, %s28
    %s100 = ssub.s32 %s17, %s24
    %s101 = sor.u32 %s99, %s100
    %p102 = scmp.eq.s32.totalorder %s101, 0
    %s104 = sadd.s32 %s103, 1
    %s105 = scalar_select %p102, %s103, %s104
    %p108 = pneg %p102
    %p109 = scmp.eq.s32.totalorder %s9, 3
    %p110 = por %p108, %p109
    %p111 = scmp.ne.s32.totalorder %s103, %s106
    %p112 = scmp.eq.s32.totalorder %s9, 0
    %p113 = por %p111, %p112
    %p114 = scmp.ne.s32.totalorder %s103, %s106
    %p115 = scmp.eq.s32.totalorder %s14, 3
    %p116 = por %p114, %p115
    %p117 = scmp.ne.s32.totalorder %s106, %s107
    %p118 = scmp.eq.s32.totalorder %s14, 0
    %p119 = por %p117, %p118
    %p120 = scmp.ne.s32.totalorder %s106, %s107
    %p121 = scmp.eq.s32.totalorder %s15, 3
    %p122 = por %p120, %p121
    %p124 = scmp.ne.s32.totalorder %s107, %s123
    %p125 = scmp.eq.s32.totalorder %s15, 0
    %p126 = por %p124, %p125
    %p127 = scmp.le.s32.totalorder 1, %s9
    %p128 = scmp.lt.s32.totalorder %s9, 5
    %p129 = pnand %p127, %p128
    %p130 = pneg %p129
    // Predicated region
    $region9: #{conv_block_forward.5} parent=5 // pred_check
      _
    $region10: #{conv_block_forward.5} parent=5 // pred_check_branch
      %132 = sbr.rel (%p129) target = $region12
    $region11: #{conv_block_forward.5} parent=5 // pred_region
      %s133 = ssub.s32 %s9, 1
      // Predicated region
      $region13: #{conv_block_forward.5} parent=11 // pred_check
        %p134 = pneg %p70
      $region14: #{conv_block_forward.5} parent=11 // pred_check_branch
        %136 = sbr.rel (%p134) target = $region16
      $region15: #{conv_block_forward.5} parent=11 // pred_region
        _
      $region16: #{conv_block_forward.5} parent=11 // pred_fallthru
        _
      // Predicated region
      $region17: #{conv_block_forward.5} parent=11 // pred_check
        %p137 = pneg %p91
      $region18: #{conv_block_forward.5} parent=11 // pred_check_branch
        %139 = sbr.rel (%p137) target = $region20
      $region19: #{conv_block_forward.5} parent=11 // pred_region
        _
      $region20: #{conv_block_forward.5} parent=11 // pred_fallthru
        _
    $region12: #{conv_block_forward.5} parent=5 // pred_fallthru
      _
    %p140 = scmp.lt.s32.totalorder %s9, 4
    // Predicated region
    $region21: #{conv_block_forward.5} parent=5 // pred_check
      %p141 = pneg %p140
    $region22: #{conv_block_forward.5} parent=5 // pred_check_branch
      %143 = sbr.rel (%p141) target = $region24
    $region23: #{conv_block_forward.5} parent=5 // pred_region
      // Predicated region
      $region25: #{conv_block_forward.5} parent=23 // pred_check
        %p144 = pneg %p43
      $region26: #{conv_block_forward.5} parent=23 // pred_check_branch
        %146 = sbr.rel (%p144) target = $region28
      $region27: #{conv_block_forward.5} parent=23 // pred_region
        %s147 = smul.u32 8, %s17
        %p148 = scmp.lt.s32.totalorder %s16, 1
        %s149 = scalar_select %p148, %s16, 1
        %p150 = scmp.lt.s32.totalorder %s147, 15
        %s151 = scalar_select %p150, %s147, 15
        %s152 = smul.addr %s151, 2
        %s153 = smul.addr %s149, 32
        %s154 = sadd.s32 %s152, %s153
        %s155 = smul.addr %s154, 8
        %s156 = scalar_lea.vmem %s0, %s155
        %s157 = smul.u32 8, %s17
      $region28: #{conv_block_forward.5} parent=23 // pred_fallthru
        _
    $region24: #{conv_block_forward.5} parent=5 // pred_fallthru
      _
    %p158 = scmp.le.s32.totalorder 1, %s9
    %p159 = scmp.lt.s32.totalorder %s9, 5
    %p160 = pnand %p158, %p159
    %p161 = pneg %p160
    // Predicated region
    $region29: #{conv_block_forward.5} parent=5 // pred_check
      _
    $region30: #{conv_block_forward.5} parent=5 // pred_check_branch
      %163 = sbr.rel (%p160) target = $region32
    $region31: #{conv_block_forward.5} parent=5 // pred_region
      %s164 = ssub.s32 %s9, 1
      %s165 = smul.u32 8, %s19
      %p166 = scmp.lt.s32.totalorder %s18, 1
      %s167 = scalar_select %p166, %s18, 1
      %p168 = scmp.lt.s32.totalorder %s165, 15
      %s169 = scalar_select %p168, %s165, 15
      %s170 = smul.addr %s169, 2
      %s171 = smul.addr %s167, 32
      %s172 = sadd.s32 %s170, %s171
      %s173 = smul.addr %s172, 8
      %s174 = scalar_lea.vmem %s0, %s173
      %p175 = pneg %p49
      %p176 = pneg %p46
      %p177 = pneg %p70
      %p178 = pneg %p67
      %p179 = pneg %p91
      %p180 = pneg %p88
      %p181 = pneg %p119
      %p182 = pneg %p116
      %s183 = smul.u32 8, %s19
      %p184 = scmp.lt.s32.totalorder %s18, 1
      %s185 = scalar_select %p184, %s18, 1
      %p186 = scmp.lt.s32.totalorder %s183, 15
      %s187 = scalar_select %p186, %s183, 15
      %s188 = smul.addr %s187, 2
      %s189 = smul.addr %s185, 32
      %s190 = sadd.s32 %s188, %s189
      %s191 = smul.addr %s190, 4
      %s192 = scalar_lea.vmem %s3, %s191
      %s193 = smul.u32 8, %s19
      %p194 = scmp.lt.s32.totalorder %s18, 1
      %s195 = scalar_select %p194, %s18, 1
      %p196 = scmp.lt.s32.totalorder %s193, 15
      %s197 = scalar_select %p196, %s193, 15
      %s198 = smul.addr %s197, 2
      %s199 = smul.addr %s195, 32
      %s200 = sadd.s32 %s198, %s199
      %s201 = smul.addr %s200, 8
      %s202 = scalar_lea.vmem %s0, %s201
      %s203 = smul.u32 8, %s19
      %s204 = smul.u32 8, %s19
      %p205 = scmp.lt.s32.totalorder %s18, 1
      %s206 = scalar_select %p205, %s18, 1
      %p207 = scmp.lt.s32.totalorder %s204, 15
      %s208 = scalar_select %p207, %s204, 15
      %s209 = smul.addr %s208, 2
      %s210 = smul.addr %s206, 32
      %s211 = sadd.s32 %s209, %s210
      %s212 = smul.addr %s211, 4
      %s213 = scalar_lea.vmem %s3, %s212
      %s214 = smul.u32 8, %s19
      %v215 = vld [vmem:[%s202] sm:$0xff]
      %v216 = vld [vmem:[%s202 + $0x8] sm:$0xff]
      %v217 = vld [vmem:[%s202 + $0x10] sm:$0xff]
      %v218 = vld [vmem:[%s202 + $0x18] sm:$0xff]
      %v219 = vld [vmem:[%s202 + $0x20] sm:$0xff]
      %v220 = vld [vmem:[%s202 + $0x28] sm:$0xff]
      %v221 = vld [vmem:[%s202 + $0x30] sm:$0xff]
      %v222 = vld [vmem:[%s202 + $0x38] sm:$0xff]
      %v223 = vld [vmem:[%s202 + $0x40] sm:$0xff]
      %v224 = vld [vmem:[%s202 + $0x48] sm:$0xff]
      %v225 = vld [vmem:[%s202 + $0x50] sm:$0xff]
      %v226 = vld [vmem:[%s202 + $0x58] sm:$0xff]
      %v227 = vld [vmem:[%s202 + $0x60] sm:$0xff]
      %v228 = vld [vmem:[%s202 + $0x68] sm:$0xff]
      %v229 = vld [vmem:[%s202 + $0x70] sm:$0xff]
      %v230 = vld [vmem:[%s202 + $0x78] sm:$0xff]
      %v231 = vld [vmem:[%s1] sm:$0x1]
      %v233 = vlaneseq
      %v234 = vshrl.u32 %v233, 7
      %v235 = vsub.s32 0, %v234
      %v236 = vrot.slane %v231, %v235
      %v238 = vmul.f32 %v215, %v236
      %v239 = vmul.f32 %v216, %v236
      %v240 = vmul.f32 %v217, %v236
      %v241 = vmul.f32 %v218, %v236
      %v242 = vmul.f32 %v219, %v236
      %v243 = vmul.f32 %v220, %v236
      %v244 = vmul.f32 %v221, %v236
      %v245 = vmul.f32 %v222, %v236
      %v246 = vmul.f32 %v223, %v236
      %v247 = vmul.f32 %v224, %v236
      %v248 = vmul.f32 %v225, %v236
      %v249 = vmul.f32 %v226, %v236
      %v250 = vmul.f32 %v227, %v236
      %v251 = vmul.f32 %v228, %v236
      %v252 = vmul.f32 %v229, %v236
      %v253 = vmul.f32 %v230, %v236
      %v254 = vld [vmem:[%s2] sm:$0x1]
      %v256 = vlaneseq
      %v257 = vshrl.u32 %v256, 7
      %v258 = vsub.s32 0, %v257
      %v259 = vrot.slane %v254, %v258
      %v261 = vadd.f32 %v238, %v259
      %v262 = vadd.f32 %v239, %v259
      %v263 = vadd.f32 %v240, %v259
      %v264 = vadd.f32 %v241, %v259
      %v265 = vadd.f32 %v242, %v259
      %v266 = vadd.f32 %v243, %v259
      %v267 = vadd.f32 %v244, %v259
      %v268 = vadd.f32 %v245, %v259
      %v269 = vadd.f32 %v246, %v259
      %v270 = vadd.f32 %v247, %v259
      %v271 = vadd.f32 %v248, %v259
      %v272 = vadd.f32 %v249, %v259
      %v273 = vadd.f32 %v250, %v259
      %v274 = vadd.f32 %v251, %v259
      %v275 = vadd.f32 %v252, %v259
      %v276 = vadd.f32 %v253, %v259
      %v277 = vmax.f32 %v261, 0.0
      %v278 = vmax.f32 %v262, 0.0
      %v279 = vmax.f32 %v263, 0.0
      %v280 = vmax.f32 %v264, 0.0
      %v281 = vmax.f32 %v265, 0.0
      %v282 = vmax.f32 %v266, 0.0
      %v283 = vmax.f32 %v267, 0.0
      %v284 = vmax.f32 %v268, 0.0
      %v285 = vmax.f32 %v269, 0.0
      %v286 = vmax.f32 %v270, 0.0
      %v287 = vmax.f32 %v271, 0.0
      %v288 = vmax.f32 %v272, 0.0
      %v289 = vmax.f32 %v273, 0.0
      %v290 = vmax.f32 %v274, 0.0
      %v291 = vmax.f32 %v275, 0.0
      %v292 = vmax.f32 %v276, 0.0
      %v293 = vpack.c.bf16 %v278, %v277
      %v294 = vpack.c.bf16 %v280, %v279
      %v295 = vpack.c.bf16 %v282, %v281
      %v296 = vpack.c.bf16 %v284, %v283
      %v297 = vpack.c.bf16 %v286, %v285
      %v298 = vpack.c.bf16 %v288, %v287
      %v299 = vpack.c.bf16 %v290, %v289
      %v300 = vpack.c.bf16 %v292, %v291
      %v309 = vunpack.c.l.b16 %v293
      %v310 = vunpack.c.h.b16 %v293
      %v311 = vunpack.c.l.b16 %v294
      %v312 = vunpack.c.h.b16 %v294
      %v313 = vunpack.c.l.b16 %v295
      %v314 = vunpack.c.h.b16 %v295
      %v315 = vunpack.c.l.b16 %v296
      %v316 = vunpack.c.h.b16 %v296
      %v317 = vunpack.c.l.b16 %v297
      %v318 = vunpack.c.h.b16 %v297
      %v319 = vunpack.c.l.b16 %v298
      %v320 = vunpack.c.h.b16 %v298
      %v321 = vunpack.c.l.b16 %v299
      %v322 = vunpack.c.h.b16 %v299
      %v323 = vunpack.c.l.b16 %v300
      %v324 = vunpack.c.h.b16 %v300
      %v325 = vpack.c.b16 %v309, %v309
      %v326 = vpack.c.b16 %v310, %v310
      %v327 = vpack.c.b16 %v311, %v311
      %v328 = vpack.c.b16 %v312, %v312
      %v329 = vpack.c.b16 %v313, %v313
      %v330 = vpack.c.b16 %v314, %v314
      %v331 = vpack.c.b16 %v315, %v315
      %v332 = vpack.c.b16 %v316, %v316
      %v333 = vpack.c.b16 %v317, %v317
      %v334 = vpack.c.b16 %v318, %v318
      %v335 = vpack.c.b16 %v319, %v319
      %v336 = vpack.c.b16 %v320, %v320
      %v337 = vpack.c.b16 %v321, %v321
      %v338 = vpack.c.b16 %v322, %v322
      %v339 = vpack.c.b16 %v323, %v323
      %v340 = vpack.c.b16 %v324, %v324
      %357 = vst [vmem:[%s213] sm:$0xf] %v325
      %358 = vst [vmem:[%s213 + $0x4] sm:$0xf] %v326
      %359 = vst [vmem:[%s213 + $0x8] sm:$0xf] %v327
      %360 = vst [vmem:[%s213 + $0xc] sm:$0xf] %v328
      %361 = vst [vmem:[%s213 + $0x10] sm:$0xf] %v329
      %362 = vst [vmem:[%s213 + $0x14] sm:$0xf] %v330
      %363 = vst [vmem:[%s213 + $0x18] sm:$0xf] %v331
      %364 = vst [vmem:[%s213 + $0x1c] sm:$0xf] %v332
      %365 = vst [vmem:[%s213 + $0x20] sm:$0xf] %v333
      %366 = vst [vmem:[%s213 + $0x24] sm:$0xf] %v334
      %367 = vst [vmem:[%s213 + $0x28] sm:$0xf] %v335
      %368 = vst [vmem:[%s213 + $0x2c] sm:$0xf] %v336
      %369 = vst [vmem:[%s213 + $0x30] sm:$0xf] %v337
      %370 = vst [vmem:[%s213 + $0x34] sm:$0xf] %v338
      %371 = vst [vmem:[%s213 + $0x38] sm:$0xf] %v339
      %372 = vst [vmem:[%s213 + $0x3c] sm:$0xf] %v340
      %s373 = smul.u32 8, %s19
      %p374 = scmp.lt.s32.totalorder %s18, 1
      %s375 = scalar_select %p374, %s18, 1
      %p376 = scmp.lt.s32.totalorder %s373, 15
      %s377 = scalar_select %p376, %s373, 15
      %s378 = smul.addr %s377, 2
      %s379 = smul.addr %s375, 32
      %s380 = sadd.s32 %s378, %s379
      %s381 = smul.addr %s380, 4
      %s382 = scalar_lea.vmem %s3, %s381
      // Predicated region
      $region33: #{conv_block_forward.5} parent=31 // pred_check
        %p383 = pneg %p116
      $region34: #{conv_block_forward.5} parent=31 // pred_check_branch
        %385 = sbr.rel (%p383) target = $region36
      $region35: #{conv_block_forward.5} parent=31 // pred_region
        %s386 = smul.u32 8, %s19
      $region36: #{conv_block_forward.5} parent=31 // pred_fallthru
        _
    $region32: #{conv_block_forward.5} parent=5 // pred_fallthru
      _
    %p387 = scmp.le.s32.totalorder 2, %s9
    // Predicated region
    $region37: #{conv_block_forward.5} parent=5 // pred_check
      %p388 = pneg %p387
    $region38: #{conv_block_forward.5} parent=5 // pred_check_branch
      %390 = sbr.rel (%p388) target = $region40
    $region39: #{conv_block_forward.5} parent=5 // pred_region
      %s391 = ssub.s32 %s9, 2
      // Predicated region
      $region41: #{conv_block_forward.5} parent=39 // pred_check
        %p392 = pneg %p122
      $region42: #{conv_block_forward.5} parent=39 // pred_check_branch
        %394 = sbr.rel (%p392) target = $region44
      $region43: #{conv_block_forward.5} parent=39 // pred_region
        %s395 = smul.u32 8, %s21
        %p396 = scmp.lt.s32.totalorder %s20, 1
        %s397 = scalar_select %p396, %s20, 1
        %p398 = scmp.lt.s32.totalorder %s395, 15
        %s399 = scalar_select %p398, %s395, 15
        %s400 = smul.addr %s399, 2
        %s401 = smul.addr %s397, 32
        %s402 = sadd.s32 %s400, %s401
        %s403 = smul.addr %s402, 4
        %s404 = scalar_lea.vmem %s3, %s403
      $region44: #{conv_block_forward.5} parent=39 // pred_fallthru
        _
    $region40: #{conv_block_forward.5} parent=5 // pred_fallthru
      _
  $region6: #{conv_block_forward.5} parent=0 // loop_footer
    %s13 = sadd.s32 1, %s9
  $region7: #{conv_block_forward.5} parent=0 // loop_footer_branch
    %8 = sbr.rel target = $region3
  $region8: #{conv_block_forward.5} parent=0 // loop_exit
    _

// kernel: conv_block_forward.4
$region0: #{conv_block_forward.4}
  #allocation0 [shape = 'u32[]', space=smem, size = 0x4, offset = 0x4, fixed_abs, tag = 'smem constant byte address 0x4 - core index']
  #allocation1 [shape = 'u32[144,128]{1,0:T(1,128)}', space=vmem, size = 0x12000, scoped, tag = 'internal scratch']
  %s0 = inlined_call_operand.vmem [shape: bf16[2,2,10,18,128], index: 0, kind: input, shape index: {}]
  %s1 = inlined_call_operand.vmem [shape: bf16[1152,128], index: 1, kind: input, shape index: {}]
  %s2 = inlined_call_operand.vmem [shape: f32[2,16,16,128], index: 2, kind: output, shape index: {0}]
  %s3 = inlined_call_operand.vmem [shape: f32[2,2,8,128], index: 3, kind: output, shape index: {1}]
  %4 = xla_tuple %s2, %s3
  %s5 = sld [smem:[#allocation0]]
  $region49: #{conv_block_forward.4} parent=0
    _
  %s7 = ssub.s32 1, %s5
  %s8 = scalar_select 0, %s7, %s5
  loop: start=0, step=1, limit=6
  $region2: #{conv_block_forward.4} parent=0 // loop_pre_header
    _
  $region3: #{conv_block_forward.4} parent=0 // loop_header
    %s10 = sphi 0, %s14
    %p11 = scmp.ge.s32.totalorder %s10, 6
    %s17 = sphi 0, %s29
    %s18 = sphi 0, %s25
    %s19 = sphi 0, %s17
    %s20 = sphi 0, %s18
    %s21 = sphi 0, %s19
    %s22 = sphi 0, %s20
    %s34 = sphi 0, %s36
    %s37 = sphi 0, %s34
    %s38 = sphi 0, %s37
    %s54 = sphi 0, %s38
    %s58 = sphi 0, %s58
    %s60 = sphi 0, %s58
    %s61 = sphi 0, %s60
    %s75 = sphi 0, %s61
    %s83 = sphi 0, %s85
    %s86 = sphi 0, %s83
    %s87 = sphi 0, %s86
    %s103 = sphi 0, %s87
    %s111 = sphi 0, %s113
    %s114 = sphi 0, %s111
    %s115 = sphi 0, %s114
    %s131 = sphi 0, %s115
  $region4: #{conv_block_forward.4} parent=0 // loop_header_branch
    %13 = sbr.rel (%p11) target = $region8
  $region5: #{conv_block_forward.4} parent=0 // loop_body
    %s15 = ssub.s32 %s10, 1
    %s16 = ssub.s32 %s10, 2
    %s23 = sadd.s32 1, %s18
    %p24 = scmp.ge.s32.totalorder %s23, 2
    %s25 = scalar_select %p24, 0, %s23
    %s26 = sadd.s32 1, %s17
    %s27 = scalar_select %p24, %s26, %s17
    %p28 = scmp.ge.s32.totalorder %s27, 2
    %s29 = scalar_select %p28, 0, %s27
    %s30 = ssub.s32 %s17, %s29
    %s31 = ssub.s32 %s18, %s25
    %s32 = sor.u32 %s30, %s31
    %p33 = scmp.eq.s32.totalorder %s32, 0
    %s35 = sadd.s32 %s34, 1
    %s36 = scalar_select %p33, %s34, %s35
    %p39 = pneg %p33
    %p40 = scmp.eq.s32.totalorder %s10, 3
    %p41 = por %p39, %p40
    %p42 = scmp.ne.s32.totalorder %s34, %s37
    %p43 = scmp.eq.s32.totalorder %s10, 0
    %p44 = por %p42, %p43
    %p45 = scmp.ne.s32.totalorder %s34, %s37
    %p46 = scmp.eq.s32.totalorder %s15, 3
    %p47 = por %p45, %p46
    %p48 = scmp.ne.s32.totalorder %s37, %s38
    %p49 = scmp.eq.s32.totalorder %s15, 0
    %p50 = por %p48, %p49
    %p51 = scmp.ne.s32.totalorder %s37, %s38
    %p52 = scmp.eq.s32.totalorder %s16, 3
    %p53 = por %p51, %p52
    %p55 = scmp.ne.s32.totalorder %s38, %s54
    %p56 = scmp.eq.s32.totalorder %s16, 0
    %p57 = por %p55, %p56
    %s59 = sadd.s32 %s58, 1
    %p62 = scmp.eq.s32.totalorder %s10, 3
    %p63 = scmp.ne.s32.totalorder %s58, %s60
    %p64 = scmp.eq.s32.totalorder %s10, 0
    %p65 = por %p63, %p64
    %p66 = scmp.ne.s32.totalorder %s58, %s60
    %p67 = scmp.eq.s32.totalorder %s15, 3
    %p68 = por %p66, %p67
    %p69 = scmp.ne.s32.totalorder %s60, %s61
    %p70 = scmp.eq.s32.totalorder %s15, 0
    %p71 = por %p69, %p70
    %p72 = scmp.ne.s32.totalorder %s60, %s61
    %p73 = scmp.eq.s32.totalorder %s16, 3
    %p74 = por %p72, %p73
    %p76 = scmp.ne.s32.totalorder %s61, %s75
    %p77 = scmp.eq.s32.totalorder %s16, 0
    %p78 = por %p76, %p77
    %s79 = ssub.s32 %s17, %s29
    %s80 = ssub.s32 %s18, %s25
    %s81 = sor.u32 %s79, %s80
    %p82 = scmp.eq.s32.totalorder %s81, 0
    %s84 = sadd.s32 %s83, 1
    %s85 = scalar_select %p82, %s83, %s84
    %p88 = pneg %p82
    %p89 = scmp.eq.s32.totalorder %s10, 3
    %p90 = por %p88, %p89
    %p91 = scmp.ne.s32.totalorder %s83, %s86
    %p92 = scmp.eq.s32.totalorder %s10, 0
    %p93 = por %p91, %p92
    %p94 = scmp.ne.s32.totalorder %s83, %s86
    %p95 = scmp.eq.s32.totalorder %s15, 3
    %p96 = por %p94, %p95
    %p97 = scmp.ne.s32.totalorder %s86, %s87
    %p98 = scmp.eq.s32.totalorder %s15, 0
    %p99 = por %p97, %p98
    %p100 = scmp.ne.s32.totalorder %s86, %s87
    %p101 = scmp.eq.s32.totalorder %s16, 3
    %p102 = por %p100, %p101
    %p104 = scmp.ne.s32.totalorder %s87, %s103
    %p105 = scmp.eq.s32.totalorder %s16, 0
    %p106 = por %p104, %p105
    %s107 = ssub.s32 %s17, %s29
    %s108 = ssub.s32 %s18, %s25
    %s109 = sor.u32 %s107, %s108
    %p110 = scmp.eq.s32.totalorder %s109, 0
    %s112 = sadd.s32 %s111, 1
    %s113 = scalar_select %p110, %s111, %s112
    %p116 = pneg %p110
    %p117 = scmp.eq.s32.totalorder %s10, 3
    %p118 = por %p116, %p117
    %p119 = scmp.ne.s32.totalorder %s111, %s114
    %p120 = scmp.eq.s32.totalorder %s10, 0
    %p121 = por %p119, %p120
    %p122 = scmp.ne.s32.totalorder %s111, %s114
    %p123 = scmp.eq.s32.totalorder %s15, 3
    %p124 = por %p122, %p123
    %p125 = scmp.ne.s32.totalorder %s114, %s115
    %p126 = scmp.eq.s32.totalorder %s15, 0
    %p127 = por %p125, %p126
    %p128 = scmp.ne.s32.totalorder %s114, %s115
    %p129 = scmp.eq.s32.totalorder %s16, 3
    %p130 = por %p128, %p129
    %p132 = scmp.ne.s32.totalorder %s115, %s131
    %p133 = scmp.eq.s32.totalorder %s16, 0
    %p134 = por %p132, %p133
    %p135 = scmp.le.s32.totalorder 1, %s10
    %p136 = scmp.lt.s32.totalorder %s10, 5
    %p137 = pnand %p135, %p136
    %p138 = pneg %p137
    // Predicated region
    $region9: #{conv_block_forward.4} parent=5 // pred_check
      _
    $region10: #{conv_block_forward.4} parent=5 // pred_check_branch
      %140 = sbr.rel (%p137) target = $region12
    $region11: #{conv_block_forward.4} parent=5 // pred_region
      %s141 = ssub.s32 %s10, 1
      // Predicated region
      $region13: #{conv_block_forward.4} parent=11 // pred_check
        %p142 = pneg %p71
      $region14: #{conv_block_forward.4} parent=11 // pred_check_branch
        %144 = sbr.rel (%p142) target = $region16
      $region15: #{conv_block_forward.4} parent=11 // pred_region
        _
      $region16: #{conv_block_forward.4} parent=11 // pred_fallthru
        _
    $region12: #{conv_block_forward.4} parent=5 // pred_fallthru
      _
    %p145 = scmp.lt.s32.totalorder %s10, 4
    // Predicated region
    $region17: #{conv_block_forward.4} parent=5 // pred_check
      %p146 = pneg %p145
    $region18: #{conv_block_forward.4} parent=5 // pred_check_branch
      %148 = sbr.rel (%p146) target = $region20
    $region19: #{conv_block_forward.4} parent=5 // pred_region
      // Predicated region
      $region21: #{conv_block_forward.4} parent=19 // pred_check
        %p149 = pneg %p44
      $region22: #{conv_block_forward.4} parent=19 // pred_check_branch
        %151 = sbr.rel (%p149) target = $region24
      $region23: #{conv_block_forward.4} parent=19 // pred_region
        %p152 = scmp.lt.s32.totalorder %s17, 1
        %s153 = scalar_select %p152, %s17, 1
        %p154 = scmp.lt.s32.totalorder %s18, 1
        %s155 = scalar_select %p154, %s18, 1
        %s156 = smul.addr %s155, 30
        %s157 = smul.addr %s153, 60
        %s158 = sadd.s32 %s156, %s157
        %s159 = smul.addr %s158, 4
        %s160 = scalar_lea.vmem %s0, %s159
      $region24: #{conv_block_forward.4} parent=19 // pred_fallthru
        _
    $region20: #{conv_block_forward.4} parent=5 // pred_fallthru
      _
    %p161 = scmp.le.s32.totalorder 1, %s10
    %p162 = scmp.lt.s32.totalorder %s10, 5
    %p163 = pnand %p161, %p162
    %p164 = pneg %p163
    // Predicated region
    $region25: #{conv_block_forward.4} parent=5 // pred_check
      _
    $region26: #{conv_block_forward.4} parent=5 // pred_check_branch
      %166 = sbr.rel (%p163) target = $region28
    $region27: #{conv_block_forward.4} parent=5 // pred_region
      %s167 = ssub.s32 %s10, 1
      %p168 = scmp.lt.s32.totalorder %s19, 1
      %s169 = scalar_select %p168, %s19, 1
      %p170 = scmp.lt.s32.totalorder %s20, 1
      %s171 = scalar_select %p170, %s20, 1
      %s172 = smul.addr %s171, 30
      %s173 = smul.addr %s169, 60
      %s174 = sadd.s32 %s172, %s173
      %s175 = smul.addr %s174, 4
      %s176 = scalar_lea.vmem %s0, %s175
      %p177 = pneg %p50
      %p178 = pneg %p47
      %p179 = pneg %p71
      %p180 = pneg %p68
      %p181 = pneg %p99
      %p182 = pneg %p96
      %s183 = smul.u32 8, %s20
      %p184 = scmp.lt.s32.totalorder %s19, 1
      %s185 = scalar_select %p184, %s19, 1
      %p186 = scmp.lt.s32.totalorder %s183, 15
      %s187 = scalar_select %p186, %s183, 15
      %s188 = smul.addr %s187, 2
      %s189 = smul.addr %s185, 32
      %s190 = sadd.s32 %s188, %s189
      %s191 = smul.addr %s190, 8
      %s192 = scalar_lea.vmem %s2, %s191
      %p193 = pneg %p127
      %p194 = pneg %p124
      %p195 = scmp.lt.s32.totalorder %s19, 1
      %s196 = scalar_select %p195, %s19, 1
      %p197 = scmp.lt.s32.totalorder %s20, 1
      %s198 = scalar_select %p197, %s20, 1
      %s199 = smul.addr %s196, 2
      %s200 = sadd.s32 %s198, %s199
      %s201 = smul.addr %s200, 8
      %s202 = scalar_lea.vmem %s3, %s201
      %p203 = scmp.lt.s32.totalorder %s19, 1
      %s204 = scalar_select %p203, %s19, 1
      %p205 = scmp.lt.s32.totalorder %s20, 1
      %s206 = scalar_select %p205, %s20, 1
      %s207 = smul.addr %s206, 30
      %s208 = smul.addr %s204, 60
      %s209 = sadd.s32 %s207, %s208
      %s210 = smul.addr %s209, 4
      %s211 = scalar_lea.vmem %s0, %s210
      %s212 = smul.u32 8, %s20
      %p213 = scmp.lt.s32.totalorder %s19, 1
      %s214 = scalar_select %p213, %s19, 1
      %p215 = scmp.lt.s32.totalorder %s212, 15
      %s216 = scalar_select %p215, %s212, 15
      %s217 = smul.addr %s216, 2
      %s218 = smul.addr %s214, 32
      %s219 = sadd.s32 %s217, %s218
      %s220 = smul.addr %s219, 8
      %s221 = scalar_lea.vmem %s2, %s220
      %s222 = smul.u32 8, %s20
      %p223 = scmp.lt.s32.totalorder %s19, 1
      %s224 = scalar_select %p223, %s19, 1
      %p225 = scmp.lt.s32.totalorder %s20, 1
      %s226 = scalar_select %p225, %s20, 1
      %s227 = smul.addr %s224, 2
      %s228 = sadd.s32 %s226, %s227
      %s229 = smul.addr %s228, 8
      %s230 = scalar_lea.vmem %s3, %s229
      %v232 = vld [vmem:[%s211] sm:$0xf]
      %v233 = vld [vmem:[%s211 + $0x4] sm:$0xf]
      %v234 = vld [vmem:[%s211 + $0xc] sm:$0xf]
      %v235 = vld [vmem:[%s211 + $0x10] sm:$0xf]
      %v236 = vld [vmem:[%s211 + $0x18] sm:$0xf]
      %v237 = vld [vmem:[%s211 + $0x1c] sm:$0xf]
      %v238 = vld [vmem:[%s211 + $0x24] sm:$0xf]
      %v239 = vld [vmem:[%s211 + $0x28] sm:$0xf]
      %v240 = vld [vmem:[%s211 + $0x30] sm:$0xf]
      %v241 = vld [vmem:[%s211 + $0x34] sm:$0xf]
      %v242 = vld [vmem:[%s211 + $0x3c] sm:$0xf]
      %v243 = vld [vmem:[%s211 + $0x40] sm:$0xf]
      %v244 = vld [vmem:[%s211 + $0x48] sm:$0xf]
      %v245 = vld [vmem:[%s211 + $0x4c] sm:$0xf]
      %v246 = vld [vmem:[%s211 + $0x54] sm:$0xf]
      %v247 = vld [vmem:[%s211 + $0x58] sm:$0xf]
      %v248 = vld [vmem:[%s211 + $0x8] sm:$0x1]
      %v249 = vld [vmem:[%s211 + $0x14] sm:$0x1]
      %v250 = vld [vmem:[%s211 + $0x20] sm:$0x1]
      %v251 = vld [vmem:[%s211 + $0x2c] sm:$0x1]
      %v252 = vld [vmem:[%s211 + $0x38] sm:$0x1]
      %v253 = vld [vmem:[%s211 + $0x44] sm:$0x1]
      %v254 = vld [vmem:[%s211 + $0x50] sm:$0x1]
      %v255 = vld [vmem:[%s211 + $0x5c] sm:$0x1]
      %vm256 = vsmask.f32 3328
      %vm257 = vsmask.f32 7440
      %vm258 = vmor %vm256, %vm257
      %v260 = vshrl.u32 %v232, 16
      %v262 = vrot.slane %v260, 4
      %v263 = vshll.u32 %v232, 16
      %v265 = vrot.slane %v263, 5
      %v266 = vor.u32 %v262, %v265
      %v267 = vrot.slane %v266, 4
      %v269 = vshll.u32 %v233, 16
      %v271 = vrot.slane %v269, 5
      %v272 = vsel %vm258, %v267, %v271
      %v273 = vshrl.u32 %v233, 16
      %v275 = vrot.slane %v273, 4
      %v276 = vor.u32 %v275, %v271
      %v277 = vrot.slane %v276, 4
      %v279 = vshll.u32 %v248, 16
      %v281 = vrot.slane %v279, 5
      %v282 = vsel %vm258, %v277, %v281
      %v284 = vshrl.u32 %v234, 16
      %v286 = vrot.slane %v284, 4
      %v287 = vshll.u32 %v234, 16
      %v289 = vrot.slane %v287, 5
      %v290 = vor.u32 %v286, %v289
      %v291 = vrot.slane %v290, 4
      %v293 = vshll.u32 %v235, 16
      %v295 = vrot.slane %v293, 5
      %v296 = vsel %vm258, %v291, %v295
      %v297 = vshrl.u32 %v235, 16
      %v299 = vrot.slane %v297, 4
      %v300 = vor.u32 %v299, %v295
      %v301 = vrot.slane %v300, 4
      %v303 = vshll.u32 %v249, 16
      %v305 = vrot.slane %v303, 5
      %v306 = vsel %vm258, %v301, %v305
      %v308 = vshrl.u32 %v236, 16
      %v310 = vrot.slane %v308, 4
      %v311 = vshll.u32 %v236, 16
      %v313 = vrot.slane %v311, 5
      %v314 = vor.u32 %v310, %v313
      %v315 = vrot.slane %v314, 4
      %v317 = vshll.u32 %v237, 16
      %v319 = vrot.slane %v317, 5
      %v320 = vsel %vm258, %v315, %v319
      %v321 = vshrl.u32 %v237, 16
      %v323 = vrot.slane %v321, 4
      %v324 = vor.u32 %v323, %v319
      %v325 = vrot.slane %v324, 4
      %v327 = vshll.u32 %v250, 16
      %v329 = vrot.slane %v327, 5
      %v330 = vsel %vm258, %v325, %v329
      %v332 = vshrl.u32 %v238, 16
      %v334 = vrot.slane %v332, 4
      %v335 = vshll.u32 %v238, 16
      %v337 = vrot.slane %v335, 5
      %v338 = vor.u32 %v334, %v337
      %v339 = vrot.slane %v338, 4
      %v341 = vshll.u32 %v239, 16
      %v343 = vrot.slane %v341, 5
      %v344 = vsel %vm258, %v339, %v343
      %v345 = vshrl.u32 %v239, 16
      %v347 = vrot.slane %v345, 4
      %v348 = vor.u32 %v347, %v343
      %v349 = vrot.slane %v348, 4
      %v351 = vshll.u32 %v251, 16
      %v353 = vrot.slane %v351, 5
      %v354 = vsel %vm258, %v349, %v353
      %v356 = vshrl.u32 %v240, 16
      %v358 = vrot.slane %v356, 4
      %v359 = vshll.u32 %v240, 16
      %v361 = vrot.slane %v359, 5
      %v362 = vor.u32 %v358, %v361
      %v363 = vrot.slane %v362, 4
      %v365 = vshll.u32 %v241, 16
      %v367 = vrot.slane %v365, 5
      %v368 = vsel %vm258, %v363, %v367
      %v369 = vshrl.u32 %v241, 16
      %v371 = vrot.slane %v369, 4
      %v372 = vor.u32 %v371, %v367
      %v373 = vrot.slane %v372, 4
      %v375 = vshll.u32 %v252, 16
      %v377 = vrot.slane %v375, 5
      %v378 = vsel %vm258, %v373, %v377
      %v380 = vshrl.u32 %v242, 16
      %v382 = vrot.slane %v380, 4
      %v383 = vshll.u32 %v242, 16
      %v385 = vrot.slane %v383, 5
      %v386 = vor.u32 %v382, %v385
      %v387 = vrot.slane %v386, 4
      %v389 = vshll.u32 %v243, 16
      %v391 = vrot.slane %v389, 5
      %v392 = vsel %vm258, %v387, %v391
      %v393 = vshrl.u32 %v243, 16
      %v395 = vrot.slane %v393, 4
      %v396 = vor.u32 %v395, %v391
      %v397 = vrot.slane %v396, 4
      %v399 = vshll.u32 %v253, 16
      %v401 = vrot.slane %v399, 5
      %v402 = vsel %vm258, %v397, %v401
      %v404 = vshrl.u32 %v244, 16
      %v406 = vrot.slane %v404, 4
      %v407 = vshll.u32 %v244, 16
      %v409 = vrot.slane %v407, 5
      %v410 = vor.u32 %v406, %v409
      %v411 = vrot.slane %v410, 4
      %v413 = vshll.u32 %v245, 16
      %v415 = vrot.slane %v413, 5
      %v416 = vsel %vm258, %v411, %v415
      %v417 = vshrl.u32 %v245, 16
      %v419 = vrot.slane %v417, 4
      %v420 = vor.u32 %v419, %v415
      %v421 = vrot.slane %v420, 4
      %v423 = vshll.u32 %v254, 16
      %v425 = vrot.slane %v423, 5
      %v426 = vsel %vm258, %v421, %v425
      %v428 = vshrl.u32 %v246, 16
      %v430 = vrot.slane %v428, 4
      %v431 = vshll.u32 %v246, 16
      %v433 = vrot.slane %v431, 5
      %v434 = vor.u32 %v430, %v433
      %v435 = vrot.slane %v434, 4
      %v437 = vshll.u32 %v247, 16
      %v439 = vrot.slane %v437, 5
      %v440 = vsel %vm258, %v435, %v439
      %v441 = vshrl.u32 %v247, 16
      %v443 = vrot.slane %v441, 4
      %v444 = vor.u32 %v443, %v439
      %v445 = vrot.slane %v444, 4
      %v447 = vshll.u32 %v255, 16
      %v449 = vrot.slane %v447, 5
      %v450 = vsel %vm258, %v445, %v449
      %v451 = vld [vmem:[%s211] sm:$0xe]
      %v452 = vld [vmem:[%s211 + $0xc] sm:$0xe]
      %v453 = vld [vmem:[%s211 + $0x18] sm:$0xe]
      %v454 = vld [vmem:[%s211 + $0x24] sm:$0xe]
      %v455 = vld [vmem:[%s211 + $0x30] sm:$0xe]
      %v456 = vld [vmem:[%s211 + $0x3c] sm:$0xe]
      %v457 = vld [vmem:[%s211 + $0x48] sm:$0xe]
      %v458 = vld [vmem:[%s211 + $0x54] sm:$0xe]
      %vm483 = vcmask 1042432
      %vm484 = vcmask 1046532
      %vm485 = vmor %vm483, %vm484
      %v486 = vrot.slane %v451, 5
      %v487 = vrot.slane %v486, 4
      %v488 = vrot.slane %v233, 5
      %v489 = vsel %vm485, %v487, %v488
      %v490 = vrot.slane %v488, 4
      %v491 = vrot.slane %v248, 5
      %v492 = vsel %vm485, %v490, %v491
      %v493 = vrot.slane %v452, 5
      %v494 = vrot.slane %v493, 4
      %v495 = vrot.slane %v235, 5
      %v496 = vsel %vm485, %v494, %v495
      %v497 = vrot.slane %v495, 4
      %v498 = vrot.slane %v249, 5
      %v499 = vsel %vm485, %v497, %v498
      %v500 = vrot.slane %v453, 5
      %v501 = vrot.slane %v500, 4
      %v502 = vrot.slane %v237, 5
      %v503 = vsel %vm485, %v501, %v502
      %v504 = vrot.slane %v502, 4
      %v505 = vrot.slane %v250, 5
      %v506 = vsel %vm485, %v504, %v505
      %v507 = vrot.slane %v454, 5
      %v508 = vrot.slane %v507, 4
      %v509 = vrot.slane %v239, 5
      %v510 = vsel %vm485, %v508, %v509
      %v511 = vrot.slane %v509, 4
      %v512 = vrot.slane %v251, 5
      %v513 = vsel %vm485, %v511, %v512
      %v514 = vrot.slane %v455, 5
      %v515 = vrot.slane %v514, 4
      %v516 = vrot.slane %v241, 5
      %v517 = vsel %vm485, %v515, %v516
      %v518 = vrot.slane %v516, 4
      %v519 = vrot.slane %v252, 5
      %v520 = vsel %vm485, %v518, %v519
      %v521 = vrot.slane %v456, 5
      %v522 = vrot.slane %v521, 4
      %v523 = vrot.slane %v243, 5
      %v524 = vsel %vm485, %v522, %v523
      %v525 = vrot.slane %v523, 4
      %v526 = vrot.slane %v253, 5
      %v527 = vsel %vm485, %v525, %v526
      %v528 = vrot.slane %v457, 5
      %v529 = vrot.slane %v528, 4
      %v530 = vrot.slane %v245, 5
      %v531 = vsel %vm485, %v529, %v530
      %v532 = vrot.slane %v530, 4
      %v533 = vrot.slane %v254, 5
      %v534 = vsel %vm485, %v532, %v533
      %v535 = vrot.slane %v458, 5
      %v536 = vrot.slane %v535, 4
      %v537 = vrot.slane %v247, 5
      %v538 = vsel %vm485, %v536, %v537
      %v539 = vrot.slane %v537, 4
      %v540 = vrot.slane %v255, 5
      %v541 = vsel %vm485, %v539, %v540
      %s542 = scalar_lea.vmem %s211, 12
      %v543 = vld [vmem:[%s542] sm:$0xf]
      %v544 = vld [vmem:[%s542 + $0x4] sm:$0xf]
      %v545 = vld [vmem:[%s542 + $0xc] sm:$0xf]
      %v546 = vld [vmem:[%s542 + $0x10] sm:$0xf]
      %v547 = vld [vmem:[%s542 + $0x18] sm:$0xf]
      %v548 = vld [vmem:[%s542 + $0x1c] sm:$0xf]
      %v549 = vld [vmem:[%s542 + $0x24] sm:$0xf]
      %v550 = vld [vmem:[%s542 + $0x28] sm:$0xf]
      %v551 = vld [vmem:[%s542 + $0x30] sm:$0xf]
      %v552 = vld [vmem:[%s542 + $0x34] sm:$0xf]
      %v553 = vld [vmem:[%s542 + $0x3c] sm:$0xf]
      %v554 = vld [vmem:[%s542 + $0x40] sm:$0xf]
      %v555 = vld [vmem:[%s542 + $0x48] sm:$0xf]
      %v556 = vld [vmem:[%s542 + $0x4c] sm:$0xf]
      %v557 = vld [vmem:[%s542 + $0x54] sm:$0xf]
      %v558 = vld [vmem:[%s542 + $0x58] sm:$0xf]
      %v559 = vld [vmem:[%s542 + $0x8] sm:$0x1]
      %v560 = vld [vmem:[%s542 + $0x14] sm:$0x1]
      %v561 = vld [vmem:[%s542 + $0x20] sm:$0x1]
      %v562 = vld [vmem:[%s542 + $0x2c] sm:$0x1]
      %v563 = vld [vmem:[%s542 + $0x38] sm:$0x1]
      %v564 = vld [vmem:[%s542 + $0x44] sm:$0x1]
      %v565 = vld [vmem:[%s542 + $0x50] sm:$0x1]
      %v566 = vld [vmem:[%s542 + $0x5c] sm:$0x1]
      %v568 = vshrl.u32 %v543, 16
      %v570 = vrot.slane %v568, 4
      %v571 = vshll.u32 %v543, 16
      %v573 = vrot.slane %v571, 5
      %v574 = vor.u32 %v570, %v573
      %v575 = vrot.slane %v574, 4
      %v577 = vshll.u32 %v544, 16
      %v579 = vrot.slane %v577, 5
      %v580 = vsel %vm258, %v575, %v579
      %v581 = vshrl.u32 %v544, 16
      %v583 = vrot.slane %v581, 4
      %v584 = vor.u32 %v583, %v579
      %v585 = vrot.slane %v584, 4
      %v587 = vshll.u32 %v559, 16
      %v589 = vrot.slane %v587, 5
      %v590 = vsel %vm258, %v585, %v589
      %v592 = vshrl.u32 %v545, 16
      %v594 = vrot.slane %v592, 4
      %v595 = vshll.u32 %v545, 16
      %v597 = vrot.slane %v595, 5
      %v598 = vor.u32 %v594, %v597
      %v599 = vrot.slane %v598, 4
      %v601 = vshll.u32 %v546, 16
      %v603 = vrot.slane %v601, 5
      %v604 = vsel %vm258, %v599, %v603
      %v605 = vshrl.u32 %v546, 16
      %v607 = vrot.slane %v605, 4
      %v608 = vor.u32 %v607, %v603
      %v609 = vrot.slane %v608, 4
      %v611 = vshll.u32 %v560, 16
      %v613 = vrot.slane %v611, 5
      %v614 = vsel %vm258, %v609, %v613
      %v616 = vshrl.u32 %v547, 16
      %v618 = vrot.slane %v616, 4
      %v619 = vshll.u32 %v547, 16
      %v621 = vrot.slane %v619, 5
      %v622 = vor.u32 %v618, %v621
      %v623 = vrot.slane %v622, 4
      %v625 = vshll.u32 %v548, 16
      %v627 = vrot.slane %v625, 5
      %v628 = vsel %vm258, %v623, %v627
      %v629 = vshrl.u32 %v548, 16
      %v631 = vrot.slane %v629, 4
      %v632 = vor.u32 %v631, %v627
      %v633 = vrot.slane %v632, 4
      %v635 = vshll.u32 %v561, 16
      %v637 = vrot.slane %v635, 5
      %v638 = vsel %vm258, %v633, %v637
      %v640 = vshrl.u32 %v549, 16
      %v642 = vrot.slane %v640, 4
      %v643 = vshll.u32 %v549, 16
      %v645 = vrot.slane %v643, 5
      %v646 = vor.u32 %v642, %v645
      %v647 = vrot.slane %v646, 4
      %v649 = vshll.u32 %v550, 16
      %v651 = vrot.slane %v649, 5
      %v652 = vsel %vm258, %v647, %v651
      %v653 = vshrl.u32 %v550, 16
      %v655 = vrot.slane %v653, 4
      %v656 = vor.u32 %v655, %v651
      %v657 = vrot.slane %v656, 4
      %v659 = vshll.u32 %v562, 16
      %v661 = vrot.slane %v659, 5
      %v662 = vsel %vm258, %v657, %v661
      %v664 = vshrl.u32 %v551, 16
      %v666 = vrot.slane %v664, 4
      %v667 = vshll.u32 %v551, 16
      %v669 = vrot.slane %v667, 5
      %v670 = vor.u32 %v666, %v669
      %v671 = vrot.slane %v670, 4
      %v673 = vshll.u32 %v552, 16
      %v675 = vrot.slane %v673, 5
      %v676 = vsel %vm258, %v671, %v675
      %v677 = vshrl.u32 %v552, 16
      %v679 = vrot.slane %v677, 4
      %v680 = vor.u32 %v679, %v675
      %v681 = vrot.slane %v680, 4
      %v683 = vshll.u32 %v563, 16
      %v685 = vrot.slane %v683, 5
      %v686 = vsel %vm258, %v681, %v685
      %v688 = vshrl.u32 %v553, 16
      %v690 = vrot.slane %v688, 4
      %v691 = vshll.u32 %v553, 16
      %v693 = vrot.slane %v691, 5
      %v694 = vor.u32 %v690, %v693
      %v695 = vrot.slane %v694, 4
      %v697 = vshll.u32 %v554, 16
      %v699 = vrot.slane %v697, 5
      %v700 = vsel %vm258, %v695, %v699
      %v701 = vshrl.u32 %v554, 16
      %v703 = vrot.slane %v701, 4
      %v704 = vor.u32 %v703, %v699
      %v705 = vrot.slane %v704, 4
      %v707 = vshll.u32 %v564, 16
      %v709 = vrot.slane %v707, 5
      %v710 = vsel %vm258, %v705, %v709
      %v712 = vshrl.u32 %v555, 16
      %v714 = vrot.slane %v712, 4
      %v715 = vshll.u32 %v555, 16
      %v717 = vrot.slane %v715, 5
      %v718 = vor.u32 %v714, %v717
      %v719 = vrot.slane %v718, 4
      %v721 = vshll.u32 %v556, 16
      %v723 = vrot.slane %v721, 5
      %v724 = vsel %vm258, %v719, %v723
      %v725 = vshrl.u32 %v556, 16
      %v727 = vrot.slane %v725, 4
      %v728 = vor.u32 %v727, %v723
      %v729 = vrot.slane %v728, 4
      %v731 = vshll.u32 %v565, 16
      %v733 = vrot.slane %v731, 5
      %v734 = vsel %vm258, %v729, %v733
      %v736 = vshrl.u32 %v557, 16
      %v738 = vrot.slane %v736, 4
      %v739 = vshll.u32 %v557, 16
      %v741 = vrot.slane %v739, 5
      %v742 = vor.u32 %v738, %v741
      %v743 = vrot.slane %v742, 4
      %v745 = vshll.u32 %v558, 16
      %v747 = vrot.slane %v745, 5
      %v748 = vsel %vm258, %v743, %v747
      %v749 = vshrl.u32 %v558, 16
      %v751 = vrot.slane %v749, 4
      %v752 = vor.u32 %v751, %v747
      %v753 = vrot.slane %v752, 4
      %v755 = vshll.u32 %v566, 16
      %v757 = vrot.slane %v755, 5
      %v758 = vsel %vm258, %v753, %v757
      %v759 = vld [vmem:[%s542] sm:$0xe]
      %v760 = vld [vmem:[%s542 + $0xc] sm:$0xe]
      %v761 = vld [vmem:[%s542 + $0x18] sm:$0xe]
      %v762 = vld [vmem:[%s542 + $0x24] sm:$0xe]
      %v763 = vld [vmem:[%s542 + $0x30] sm:$0xe]
      %v764 = vld [vmem:[%s542 + $0x3c] sm:$0xe]
      %v765 = vld [vmem:[%s542 + $0x48] sm:$0xe]
      %v766 = vld [vmem:[%s542 + $0x54] sm:$0xe]
      %v791 = vrot.slane %v759, 5
      %v792 = vrot.slane %v791, 4
      %v793 = vrot.slane %v544, 5
      %v794 = vsel %vm485, %v792, %v793
      %v795 = vrot.slane %v793, 4
      %v796 = vrot.slane %v559, 5
      %v797 = vsel %vm485, %v795, %v796
      %v798 = vrot.slane %v760, 5
      %v799 = vrot.slane %v798, 4
      %v800 = vrot.slane %v546, 5
      %v801 = vsel %vm485, %v799, %v800
      %v802 = vrot.slane %v800, 4
      %v803 = vrot.slane %v560, 5
      %v804 = vsel %vm485, %v802, %v803
      %v805 = vrot.slane %v761, 5
      %v806 = vrot.slane %v805, 4
      %v807 = vrot.slane %v548, 5
      %v808 = vsel %vm485, %v806, %v807
      %v809 = vrot.slane %v807, 4
      %v810 = vrot.slane %v561, 5
      %v811 = vsel %vm485, %v809, %v810
      %v812 = vrot.slane %v762, 5
      %v813 = vrot.slane %v812, 4
      %v814 = vrot.slane %v550, 5
      %v815 = vsel %vm485, %v813, %v814
      %v816 = vrot.slane %v814, 4
      %v817 = vrot.slane %v562, 5
      %v818 = vsel %vm485, %v816, %v817
      %v819 = vrot.slane %v763, 5
      %v820 = vrot.slane %v819, 4
      %v821 = vrot.slane %v552, 5
      %v822 = vsel %vm485, %v820, %v821
      %v823 = vrot.slane %v821, 4
      %v824 = vrot.slane %v563, 5
      %v825 = vsel %vm485, %v823, %v824
      %v826 = vrot.slane %v764, 5
      %v827 = vrot.slane %v826, 4
      %v828 = vrot.slane %v554, 5
      %v829 = vsel %vm485, %v827, %v828
      %v830 = vrot.slane %v828, 4
      %v831 = vrot.slane %v564, 5
      %v832 = vsel %vm485, %v830, %v831
      %v833 = vrot.slane %v765, 5
      %v834 = vrot.slane %v833, 4
      %v835 = vrot.slane %v556, 5
      %v836 = vsel %vm485, %v834, %v835
      %v837 = vrot.slane %v835, 4
      %v838 = vrot.slane %v565, 5
      %v839 = vsel %vm485, %v837, %v838
      %v840 = vrot.slane %v766, 5
      %v841 = vrot.slane %v840, 4
      %v842 = vrot.slane %v558, 5
      %v843 = vsel %vm485, %v841, %v842
      %v844 = vrot.slane %v842, 4
      %v845 = vrot.slane %v566, 5
      %v846 = vsel %vm485, %v844, %v845
      %s847 = scalar_lea.vmem %s211, 24
      %v848 = vld [vmem:[%s847] sm:$0xf]
      %v849 = vld [vmem:[%s847 + $0x4] sm:$0xf]
      %v850 = vld [vmem:[%s847 + $0xc] sm:$0xf]
      %v851 = vld [vmem:[%s847 + $0x10] sm:$0xf]
      %v852 = vld [vmem:[%s847 + $0x18] sm:$0xf]
      %v853 = vld [vmem:[%s847 + $0x1c] sm:$0xf]
      %v854 = vld [vmem:[%s847 + $0x24] sm:$0xf]
      %v855 = vld [vmem:[%s847 + $0x28] sm:$0xf]
      %v856 = vld [vmem:[%s847 + $0x30] sm:$0xf]
      %v857 = vld [vmem:[%s847 + $0x34] sm:$0xf]
      %v858 = vld [vmem:[%s847 + $0x3c] sm:$0xf]
      %v859 = vld [vmem:[%s847 + $0x40] sm:$0xf]
      %v860 = vld [vmem:[%s847 + $0x48] sm:$0xf]
      %v861 = vld [vmem:[%s847 + $0x4c] sm:$0xf]
      %v862 = vld [vmem:[%s847 + $0x54] sm:$0xf]
      %v863 = vld [vmem:[%s847 + $0x58] sm:$0xf]
      %v864 = vld [vmem:[%s847 + $0x8] sm:$0x1]
      %v865 = vld [vmem:[%s847 + $0x14] sm:$0x1]
      %v866 = vld [vmem:[%s847 + $0x20] sm:$0x1]
      %v867 = vld [vmem:[%s847 + $0x2c] sm:$0x1]
      %v868 = vld [vmem:[%s847 + $0x38] sm:$0x1]
      %v869 = vld [vmem:[%s847 + $0x44] sm:$0x1]
      %v870 = vld [vmem:[%s847 + $0x50] sm:$0x1]
      %v871 = vld [vmem:[%s847 + $0x5c] sm:$0x1]
      %v873 = vshrl.u32 %v848, 16
      %v875 = vrot.slane %v873, 4
      %v876 = vshll.u32 %v848, 16
      %v878 = vrot.slane %v876, 5
      %v879 = vor.u32 %v875, %v878
      %v880 = vrot.slane %v879, 4
      %v882 = vshll.u32 %v849, 16
      %v884 = vrot.slane %v882, 5
      %v885 = vsel %vm258, %v880, %v884
      %v886 = vshrl.u32 %v849, 16
      %v888 = vrot.slane %v886, 4
      %v889 = vor.u32 %v888, %v884
      %v890 = vrot.slane %v889, 4
      %v892 = vshll.u32 %v864, 16
      %v894 = vrot.slane %v892, 5
      %v895 = vsel %vm258, %v890, %v894
      %v897 = vshrl.u32 %v850, 16
      %v899 = vrot.slane %v897, 4
      %v900 = vshll.u32 %v850, 16
      %v902 = vrot.slane %v900, 5
      %v903 = vor.u32 %v899, %v902
      %v904 = vrot.slane %v903, 4
      %v906 = vshll.u32 %v851, 16
      %v908 = vrot.slane %v906, 5
      %v909 = vsel %vm258, %v904, %v908
      %v910 = vshrl.u32 %v851, 16
      %v912 = vrot.slane %v910, 4
      %v913 = vor.u32 %v912, %v908
      %v914 = vrot.slane %v913, 4
      %v916 = vshll.u32 %v865, 16
      %v918 = vrot.slane %v916, 5
      %v919 = vsel %vm258, %v914, %v918
      %v921 = vshrl.u32 %v852, 16
      %v923 = vrot.slane %v921, 4
      %v924 = vshll.u32 %v852, 16
      %v926 = vrot.slane %v924, 5
      %v927 = vor.u32 %v923, %v926
      %v928 = vrot.slane %v927, 4
      %v930 = vshll.u32 %v853, 16
      %v932 = vrot.slane %v930, 5
      %v933 = vsel %vm258, %v928, %v932
      %v934 = vshrl.u32 %v853, 16
      %v936 = vrot.slane %v934, 4
      %v937 = vor.u32 %v936, %v932
      %v938 = vrot.slane %v937, 4
      %v940 = vshll.u32 %v866, 16
      %v942 = vrot.slane %v940, 5
      %v943 = vsel %vm258, %v938, %v942
      %v945 = vshrl.u32 %v854, 16
      %v947 = vrot.slane %v945, 4
      %v948 = vshll.u32 %v854, 16
      %v950 = vrot.slane %v948, 5
      %v951 = vor.u32 %v947, %v950
      %v952 = vrot.slane %v951, 4
      %v954 = vshll.u32 %v855, 16
      %v956 = vrot.slane %v954, 5
      %v957 = vsel %vm258, %v952, %v956
      %v958 = vshrl.u32 %v855, 16
      %v960 = vrot.slane %v958, 4
      %v961 = vor.u32 %v960, %v956
      %v962 = vrot.slane %v961, 4
      %v964 = vshll.u32 %v867, 16
      %v966 = vrot.slane %v964, 5
      %v967 = vsel %vm258, %v962, %v966
      %v969 = vshrl.u32 %v856, 16
      %v971 = vrot.slane %v969, 4
      %v972 = vshll.u32 %v856, 16
      %v974 = vrot.slane %v972, 5
      %v975 = vor.u32 %v971, %v974
      %v976 = vrot.slane %v975, 4
      %v978 = vshll.u32 %v857, 16
      %v980 = vrot.slane %v978, 5
      %v981 = vsel %vm258, %v976, %v980
      %v982 = vshrl.u32 %v857, 16
      %v984 = vrot.slane %v982, 4
      %v985 = vor.u32 %v984, %v980
      %v986 = vrot.slane %v985, 4
      %v988 = vshll.u32 %v868, 16
      %v990 = vrot.slane %v988, 5
      %v991 = vsel %vm258, %v986, %v990
      %v993 = vshrl.u32 %v858, 16
      %v995 = vrot.slane %v993, 4
      %v996 = vshll.u32 %v858, 16
      %v998 = vrot.slane %v996, 5
      %v999 = vor.u32 %v995, %v998
      %v1000 = vrot.slane %v999, 4
      %v1002 = vshll.u32 %v859, 16
      %v1004 = vrot.slane %v1002, 5
      %v1005 = vsel %vm258, %v1000, %v1004
      %v1006 = vshrl.u32 %v859, 16
      %v1008 = vrot.slane %v1006, 4
      %v1009 = vor.u32 %v1008, %v1004
      %v1010 = vrot.slane %v1009, 4
      %v1012 = vshll.u32 %v869, 16
      %v1014 = vrot.slane %v1012, 5
      %v1015 = vsel %vm258, %v1010, %v1014
      %v1017 = vshrl.u32 %v860, 16
      %v1019 = vrot.slane %v1017, 4
      %v1020 = vshll.u32 %v860, 16
      %v1022 = vrot.slane %v1020, 5
      %v1023 = vor.u32 %v1019, %v1022
      %v1024 = vrot.slane %v1023, 4
      %v1026 = vshll.u32 %v861, 16
      %v1028 = vrot.slane %v1026, 5
      %v1029 = vsel %vm258, %v1024, %v1028
      %v1030 = vshrl.u32 %v861, 16
      %v1032 = vrot.slane %v1030, 4
      %v1033 = vor.u32 %v1032, %v1028
      %v1034 = vrot.slane %v1033, 4
      %v1036 = vshll.u32 %v870, 16
      %v1038 = vrot.slane %v1036, 5
      %v1039 = vsel %vm258, %v1034, %v1038
      %v1041 = vshrl.u32 %v862, 16
      %v1043 = vrot.slane %v1041, 4
      %v1044 = vshll.u32 %v862, 16
      %v1046 = vrot.slane %v1044, 5
      %v1047 = vor.u32 %v1043, %v1046
      %v1048 = vrot.slane %v1047, 4
      %v1050 = vshll.u32 %v863, 16
      %v1052 = vrot.slane %v1050, 5
      %v1053 = vsel %vm258, %v1048, %v1052
      %v1054 = vshrl.u32 %v863, 16
      %v1056 = vrot.slane %v1054, 4
      %v1057 = vor.u32 %v1056, %v1052
      %v1058 = vrot.slane %v1057, 4
      %v1060 = vshll.u32 %v871, 16
      %v1062 = vrot.slane %v1060, 5
      %v1063 = vsel %vm258, %v1058, %v1062
      %v1064 = vld [vmem:[%s847] sm:$0xe]
      %v1065 = vld [vmem:[%s847 + $0xc] sm:$0xe]
      %v1066 = vld [vmem:[%s847 + $0x18] sm:$0xe]
      %v1067 = vld [vmem:[%s847 + $0x24] sm:$0xe]
      %v1068 = vld [vmem:[%s847 + $0x30] sm:$0xe]
      %v1069 = vld [vmem:[%s847 + $0x3c] sm:$0xe]
      %v1070 = vld [vmem:[%s847 + $0x48] sm:$0xe]
      %v1071 = vld [vmem:[%s847 + $0x54] sm:$0xe]
      %v1096 = vrot.slane %v1064, 5
      %v1097 = vrot.slane %v1096, 4
      %v1098 = vrot.slane %v849, 5
      %v1099 = vsel %vm485, %v1097, %v1098
      %v1100 = vrot.slane %v1098, 4
      %v1101 = vrot.slane %v864, 5
      %v1102 = vsel %vm485, %v1100, %v1101
      %v1103 = vrot.slane %v1065, 5
      %v1104 = vrot.slane %v1103, 4
      %v1105 = vrot.slane %v851, 5
      %v1106 = vsel %vm485, %v1104, %v1105
      %v1107 = vrot.slane %v1105, 4
      %v1108 = vrot.slane %v865, 5
      %v1109 = vsel %vm485, %v1107, %v1108
      %v1110 = vrot.slane %v1066, 5
      %v1111 = vrot.slane %v1110, 4
      %v1112 = vrot.slane %v853, 5
      %v1113 = vsel %vm485, %v1111, %v1112
      %v1114 = vrot.slane %v1112, 4
      %v1115 = vrot.slane %v866, 5
      %v1116 = vsel %vm485, %v1114, %v1115
      %v1117 = vrot.slane %v1067, 5
      %v1118 = vrot.slane %v1117, 4
      %v1119 = vrot.slane %v855, 5
      %v1120 = vsel %vm485, %v1118, %v1119
      %v1121 = vrot.slane %v1119, 4
      %v1122 = vrot.slane %v867, 5
      %v1123 = vsel %vm485, %v1121, %v1122
      %v1124 = vrot.slane %v1068, 5
      %v1125 = vrot.slane %v1124, 4
      %v1126 = vrot.slane %v857, 5
      %v1127 = vsel %vm485, %v1125, %v1126
      %v1128 = vrot.slane %v1126, 4
      %v1129 = vrot.slane %v868, 5
      %v1130 = vsel %vm485, %v1128, %v1129
      %v1131 = vrot.slane %v1069, 5
      %v1132 = vrot.slane %v1131, 4
      %v1133 = vrot.slane %v859, 5
      %v1134 = vsel %vm485, %v1132, %v1133
      %v1135 = vrot.slane %v1133, 4
      %v1136 = vrot.slane %v869, 5
      %v1137 = vsel %vm485, %v1135, %v1136
      %v1138 = vrot.slane %v1070, 5
      %v1139 = vrot.slane %v1138, 4
      %v1140 = vrot.slane %v861, 5
      %v1141 = vsel %vm485, %v1139, %v1140
      %v1142 = vrot.slane %v1140, 4
      %v1143 = vrot.slane %v870, 5
      %v1144 = vsel %vm485, %v1142, %v1143
      %v1145 = vrot.slane %v1071, 5
      %v1146 = vrot.slane %v1145, 4
      %v1147 = vrot.slane %v863, 5
      %v1148 = vsel %vm485, %v1146, %v1147
      %v1149 = vrot.slane %v1147, 4
      %v1150 = vrot.slane %v871, 5
      %v1151 = vsel %vm485, %v1149, %v1150
      %v1160 = vunpack.c.l.b16 %v232
      %v1161 = vunpack.c.l.b16 %v233
      %v1162 = vunpack.c.l.b16 %v234
      %v1163 = vunpack.c.l.b16 %v235
      %v1164 = vunpack.c.l.b16 %v236
      %v1165 = vunpack.c.l.b16 %v237
      %v1166 = vunpack.c.l.b16 %v238
      %v1167 = vunpack.c.l.b16 %v239
      %v1168 = vunpack.c.l.b16 %v240
      %v1169 = vunpack.c.l.b16 %v241
      %v1170 = vunpack.c.l.b16 %v242
      %v1171 = vunpack.c.l.b16 %v243
      %v1172 = vunpack.c.l.b16 %v244
      %v1173 = vunpack.c.l.b16 %v245
      %v1174 = vunpack.c.l.b16 %v246
      %v1175 = vunpack.c.l.b16 %v247
      %v1176 = vpack.c.b16 %v1161, %v1160
      %v1177 = vpack.c.b16 %v1163, %v1162
      %v1178 = vpack.c.b16 %v1165, %v1164
      %v1179 = vpack.c.b16 %v1167, %v1166
      %v1180 = vpack.c.b16 %v1169, %v1168
      %v1181 = vpack.c.b16 %v1171, %v1170
      %v1182 = vpack.c.b16 %v1173, %v1172
      %v1183 = vpack.c.b16 %v1175, %v1174
      %v1192 = vunpack.c.l.b16 %v272
      %v1193 = vunpack.c.l.b16 %v282
      %v1194 = vunpack.c.l.b16 %v296
      %v1195 = vunpack.c.l.b16 %v306
      %v1196 = vunpack.c.l.b16 %v320
      %v1197 = vunpack.c.l.b16 %v330
      %v1198 = vunpack.c.l.b16 %v344
      %v1199 = vunpack.c.l.b16 %v354
      %v1200 = vunpack.c.l.b16 %v368
      %v1201 = vunpack.c.l.b16 %v378
      %v1202 = vunpack.c.l.b16 %v392
      %v1203 = vunpack.c.l.b16 %v402
      %v1204 = vunpack.c.l.b16 %v416
      %v1205 = vunpack.c.l.b16 %v426
      %v1206 = vunpack.c.l.b16 %v440
      %v1207 = vunpack.c.l.b16 %v450
      %v1208 = vpack.c.b16 %v1193, %v1192
      %v1209 = vpack.c.b16 %v1195, %v1194
      %v1210 = vpack.c.b16 %v1197, %v1196
      %v1211 = vpack.c.b16 %v1199, %v1198
      %v1212 = vpack.c.b16 %v1201, %v1200
      %v1213 = vpack.c.b16 %v1203, %v1202
      %v1214 = vpack.c.b16 %v1205, %v1204
      %v1215 = vpack.c.b16 %v1207, %v1206
      %v1224 = vunpack.c.l.b16 %v489
      %v1225 = vunpack.c.l.b16 %v492
      %v1226 = vunpack.c.l.b16 %v496
      %v1227 = vunpack.c.l.b16 %v499
      %v1228 = vunpack.c.l.b16 %v503
      %v1229 = vunpack.c.l.b16 %v506
      %v1230 = vunpack.c.l.b16 %v510
      %v1231 = vunpack.c.l.b16 %v513
      %v1232 = vunpack.c.l.b16 %v517
      %v1233 = vunpack.c.l.b16 %v520
      %v1234 = vunpack.c.l.b16 %v524
      %v1235 = vunpack.c.l.b16 %v527
      %v1236 = vunpack.c.l.b16 %v531
      %v1237 = vunpack.c.l.b16 %v534
      %v1238 = vunpack.c.l.b16 %v538
      %v1239 = vunpack.c.l.b16 %v541
      %v1240 = vpack.c.b16 %v1225, %v1224
      %v1241 = vpack.c.b16 %v1227, %v1226
      %v1242 = vpack.c.b16 %v1229, %v1228
      %v1243 = vpack.c.b16 %v1231, %v1230
      %v1244 = vpack.c.b16 %v1233, %v1232
      %v1245 = vpack.c.b16 %v1235, %v1234
      %v1246 = vpack.c.b16 %v1237, %v1236
      %v1247 = vpack.c.b16 %v1239, %v1238
      %v1264 = vunpack.c.l.b16 %v543
      %v1265 = vunpack.c.l.b16 %v544
      %v1266 = vunpack.c.l.b16 %v545
      %v1267 = vunpack.c.l.b16 %v546
      %v1268 = vunpack.c.l.b16 %v547
      %v1269 = vunpack.c.l.b16 %v548
      %v1270 = vunpack.c.l.b16 %v549
      %v1271 = vunpack.c.l.b16 %v550
      %v1272 = vunpack.c.l.b16 %v551
      %v1273 = vunpack.c.l.b16 %v552
      %v1274 = vunpack.c.l.b16 %v553
      %v1275 = vunpack.c.l.b16 %v554
      %v1276 = vunpack.c.l.b16 %v555
      %v1277 = vunpack.c.l.b16 %v556
      %v1278 = vunpack.c.l.b16 %v557
      %v1279 = vunpack.c.l.b16 %v558
      %v1280 = vpack.c.b16 %v1265, %v1264
      %v1281 = vpack.c.b16 %v1267, %v1266
      %v1282 = vpack.c.b16 %v1269, %v1268
      %v1283 = vpack.c.b16 %v1271, %v1270
      %v1284 = vpack.c.b16 %v1273, %v1272
      %v1285 = vpack.c.b16 %v1275, %v1274
      %v1286 = vpack.c.b16 %v1277, %v1276
      %v1287 = vpack.c.b16 %v1279, %v1278
      %v1296 = vunpack.c.l.b16 %v580
      %v1297 = vunpack.c.l.b16 %v590
      %v1298 = vunpack.c.l.b16 %v604
      %v1299 = vunpack.c.l.b16 %v614
      %v1300 = vunpack.c.l.b16 %v628
      %v1301 = vunpack.c.l.b16 %v638
      %v1302 = vunpack.c.l.b16 %v652
      %v1303 = vunpack.c.l.b16 %v662
      %v1304 = vunpack.c.l.b16 %v676
      %v1305 = vunpack.c.l.b16 %v686
      %v1306 = vunpack.c.l.b16 %v700
      %v1307 = vunpack.c.l.b16 %v710
      %v1308 = vunpack.c.l.b16 %v724
      %v1309 = vunpack.c.l.b16 %v734
      %v1310 = vunpack.c.l.b16 %v748
      %v1311 = vunpack.c.l.b16 %v758
      %v1312 = vpack.c.b16 %v1297, %v1296
      %v1313 = vpack.c.b16 %v1299, %v1298
      %v1314 = vpack.c.b16 %v1301, %v1300
      %v1315 = vpack.c.b16 %v1303, %v1302
      %v1316 = vpack.c.b16 %v1305, %v1304
      %v1317 = vpack.c.b16 %v1307, %v1306
      %v1318 = vpack.c.b16 %v1309, %v1308
      %v1319 = vpack.c.b16 %v1311, %v1310
      %v1328 = vunpack.c.l.b16 %v794
      %v1329 = vunpack.c.l.b16 %v797
      %v1330 = vunpack.c.l.b16 %v801
      %v1331 = vunpack.c.l.b16 %v804
      %v1332 = vunpack.c.l.b16 %v808
      %v1333 = vunpack.c.l.b16 %v811
      %v1334 = vunpack.c.l.b16 %v815
      %v1335 = vunpack.c.l.b16 %v818
      %v1336 = vunpack.c.l.b16 %v822
      %v1337 = vunpack.c.l.b16 %v825
      %v1338 = vunpack.c.l.b16 %v829
      %v1339 = vunpack.c.l.b16 %v832
      %v1340 = vunpack.c.l.b16 %v836
      %v1341 = vunpack.c.l.b16 %v839
      %v1342 = vunpack.c.l.b16 %v843
      %v1343 = vunpack.c.l.b16 %v846
      %v1344 = vpack.c.b16 %v1329, %v1328
      %v1345 = vpack.c.b16 %v1331, %v1330
      %v1346 = vpack.c.b16 %v1333, %v1332
      %v1347 = vpack.c.b16 %v1335, %v1334
      %v1348 = vpack.c.b16 %v1337, %v1336
      %v1349 = vpack.c.b16 %v1339, %v1338
      %v1350 = vpack.c.b16 %v1341, %v1340
      %v1351 = vpack.c.b16 %v1343, %v1342
      %v1368 = vunpack.c.l.b16 %v848
      %v1369 = vunpack.c.l.b16 %v849
      %v1370 = vunpack.c.l.b16 %v850
      %v1371 = vunpack.c.l.b16 %v851
      %v1372 = vunpack.c.l.b16 %v852
      %v1373 = vunpack.c.l.b16 %v853
      %v1374 = vunpack.c.l.b16 %v854
      %v1375 = vunpack.c.l.b16 %v855
      %v1376 = vunpack.c.l.b16 %v856
      %v1377 = vunpack.c.l.b16 %v857
      %v1378 = vunpack.c.l.b16 %v858
      %v1379 = vunpack.c.l.b16 %v859
      %v1380 = vunpack.c.l.b16 %v860
      %v1381 = vunpack.c.l.b16 %v861
      %v1382 = vunpack.c.l.b16 %v862
      %v1383 = vunpack.c.l.b16 %v863
      %v1384 = vpack.c.b16 %v1369, %v1368
      %v1385 = vpack.c.b16 %v1371, %v1370
      %v1386 = vpack.c.b16 %v1373, %v1372
      %v1387 = vpack.c.b16 %v1375, %v1374
      %v1388 = vpack.c.b16 %v1377, %v1376
      %v1389 = vpack.c.b16 %v1379, %v1378
      %v1390 = vpack.c.b16 %v1381, %v1380
      %v1391 = vpack.c.b16 %v1383, %v1382
      %v1400 = vunpack.c.l.b16 %v885
      %v1401 = vunpack.c.l.b16 %v895
      %v1402 = vunpack.c.l.b16 %v909
      %v1403 = vunpack.c.l.b16 %v919
      %v1404 = vunpack.c.l.b16 %v933
      %v1405 = vunpack.c.l.b16 %v943
      %v1406 = vunpack.c.l.b16 %v957
      %v1407 = vunpack.c.l.b16 %v967
      %v1408 = vunpack.c.l.b16 %v981
      %v1409 = vunpack.c.l.b16 %v991
      %v1410 = vunpack.c.l.b16 %v1005
      %v1411 = vunpack.c.l.b16 %v1015
      %v1412 = vunpack.c.l.b16 %v1029
      %v1413 = vunpack.c.l.b16 %v1039
      %v1414 = vunpack.c.l.b16 %v1053
      %v1415 = vunpack.c.l.b16 %v1063
      %v1416 = vpack.c.b16 %v1401, %v1400
      %v1417 = vpack.c.b16 %v1403, %v1402
      %v1418 = vpack.c.b16 %v1405, %v1404
      %v1419 = vpack.c.b16 %v1407, %v1406
      %v1420 = vpack.c.b16 %v1409, %v1408
      %v1421 = vpack.c.b16 %v1411, %v1410
      %v1422 = vpack.c.b16 %v1413, %v1412
      %v1423 = vpack.c.b16 %v1415, %v1414
      %v1432 = vunpack.c.l.b16 %v1099
      %v1433 = vunpack.c.l.b16 %v1102
      %v1434 = vunpack.c.l.b16 %v1106
      %v1435 = vunpack.c.l.b16 %v1109
      %v1436 = vunpack.c.l.b16 %v1113
      %v1437 = vunpack.c.l.b16 %v1116
      %v1438 = vunpack.c.l.b16 %v1120
      %v1439 = vunpack.c.l.b16 %v1123
      %v1440 = vunpack.c.l.b16 %v1127
      %v1441 = vunpack.c.l.b16 %v1130
      %v1442 = vunpack.c.l.b16 %v1134
      %v1443 = vunpack.c.l.b16 %v1137
      %v1444 = vunpack.c.l.b16 %v1141
      %v1445 = vunpack.c.l.b16 %v1144
      %v1446 = vunpack.c.l.b16 %v1148
      %v1447 = vunpack.c.l.b16 %v1151
      %v1448 = vpack.c.b16 %v1433, %v1432
      %v1449 = vpack.c.b16 %v1435, %v1434
      %v1450 = vpack.c.b16 %v1437, %v1436
      %v1451 = vpack.c.b16 %v1439, %v1438
      %v1452 = vpack.c.b16 %v1441, %v1440
      %v1453 = vpack.c.b16 %v1443, %v1442
      %v1454 = vpack.c.b16 %v1445, %v1444
      %v1455 = vpack.c.b16 %v1447, %v1446
      %v1464 = vld [vmem:[%s1] sm:$0xf]
      %v1465 = vld [vmem:[%s1 + $0x4] sm:$0xf]
      %v1466 = vld [vmem:[%s1 + $0x8] sm:$0xf]
      %v1467 = vld [vmem:[%s1 + $0xc] sm:$0xf]
      %v1468 = vld [vmem:[%s1 + $0x10] sm:$0xf]
      %v1469 = vld [vmem:[%s1 + $0x14] sm:$0xf]
      %v1470 = vld [vmem:[%s1 + $0x18] sm:$0xf]
      %v1471 = vld [vmem:[%s1 + $0x1c] sm:$0xf]
      %v1472 = vld [vmem:[%s1 + $0x20] sm:$0xf]
      %v1473 = vld [vmem:[%s1 + $0x24] sm:$0xf]
      %v1474 = vld [vmem:[%s1 + $0x28] sm:$0xf]
      %v1475 = vld [vmem:[%s1 + $0x2c] sm:$0xf]
      %v1476 = vld [vmem:[%s1 + $0x30] sm:$0xf]
      %v1477 = vld [vmem:[%s1 + $0x34] sm:$0xf]
      %v1478 = vld [vmem:[%s1 + $0x38] sm:$0xf]
      %v1479 = vld [vmem:[%s1 + $0x3c] sm:$0xf]
      %v1480 = vld [vmem:[%s1 + $0x40] sm:$0xf]
      %v1481 = vld [vmem:[%s1 + $0x44] sm:$0xf]
      %v1482 = vld [vmem:[%s1 + $0x48] sm:$0xf]
      %v1483 = vld [vmem:[%s1 + $0x4c] sm:$0xf]
      %v1484 = vld [vmem:[%s1 + $0x50] sm:$0xf]
      %v1485 = vld [vmem:[%s1 + $0x54] sm:$0xf]
      %v1486 = vld [vmem:[%s1 + $0x58] sm:$0xf]
      %v1487 = vld [vmem:[%s1 + $0x5c] sm:$0xf]
      %v1488 = vld [vmem:[%s1 + $0x60] sm:$0xf]
      %v1489 = vld [vmem:[%s1 + $0x64] sm:$0xf]
      %v1490 = vld [vmem:[%s1 + $0x68] sm:$0xf]
      %v1491 = vld [vmem:[%s1 + $0x6c] sm:$0xf]
      %v1492 = vld [vmem:[%s1 + $0x70] sm:$0xf]
      %v1493 = vld [vmem:[%s1 + $0x74] sm:$0xf]
      %v1494 = vld [vmem:[%s1 + $0x78] sm:$0xf]
      %v1495 = vld [vmem:[%s1 + $0x7c] sm:$0xf]
      %v1496 = vld [vmem:[%s1 + $0x80] sm:$0xf]
      %v1497 = vld [vmem:[%s1 + $0x84] sm:$0xf]
      %v1498 = vld [vmem:[%s1 + $0x88] sm:$0xf]
      %v1499 = vld [vmem:[%s1 + $0x8c] sm:$0xf]
      %v1500 = vld [vmem:[%s1 + $0x90] sm:$0xf]
      %v1501 = vld [vmem:[%s1 + $0x94] sm:$0xf]
      %v1502 = vld [vmem:[%s1 + $0x98] sm:$0xf]
      %v1503 = vld [vmem:[%s1 + $0x9c] sm:$0xf]
      %v1504 = vld [vmem:[%s1 + $0xa0] sm:$0xf]
      %v1505 = vld [vmem:[%s1 + $0xa4] sm:$0xf]
      %v1506 = vld [vmem:[%s1 + $0xa8] sm:$0xf]
      %v1507 = vld [vmem:[%s1 + $0xac] sm:$0xf]
      %v1508 = vld [vmem:[%s1 + $0xb0] sm:$0xf]
      %v1509 = vld [vmem:[%s1 + $0xb4] sm:$0xf]
      %v1510 = vld [vmem:[%s1 + $0xb8] sm:$0xf]
      %v1511 = vld [vmem:[%s1 + $0xbc] sm:$0xf]
      %v1512 = vld [vmem:[%s1 + $0xc0] sm:$0xf]
      %v1513 = vld [vmem:[%s1 + $0xc4] sm:$0xf]
      %v1514 = vld [vmem:[%s1 + $0xc8] sm:$0xf]
      %v1515 = vld [vmem:[%s1 + $0xcc] sm:$0xf]
      %v1516 = vld [vmem:[%s1 + $0xd0] sm:$0xf]
      %v1517 = vld [vmem:[%s1 + $0xd4] sm:$0xf]
      %v1518 = vld [vmem:[%s1 + $0xd8] sm:$0xf]
      %v1519 = vld [vmem:[%s1 + $0xdc] sm:$0xf]
      %v1520 = vld [vmem:[%s1 + $0xe0] sm:$0xf]
      %v1521 = vld [vmem:[%s1 + $0xe4] sm:$0xf]
      %v1522 = vld [vmem:[%s1 + $0xe8] sm:$0xf]
      %v1523 = vld [vmem:[%s1 + $0xec] sm:$0xf]
      %v1524 = vld [vmem:[%s1 + $0xf0] sm:$0xf]
      %v1525 = vld [vmem:[%s1 + $0xf4] sm:$0xf]
      %v1526 = vld [vmem:[%s1 + $0xf8] sm:$0xf]
      %v1527 = vld [vmem:[%s1 + $0xfc] sm:$0xf]
      %v1528 = vld [vmem:[%s1 + $0x100] sm:$0xf]
      %v1529 = vld [vmem:[%s1 + $0x104] sm:$0xf]
      %v1530 = vld [vmem:[%s1 + $0x108] sm:$0xf]
      %v1531 = vld [vmem:[%s1 + $0x10c] sm:$0xf]
      %v1532 = vld [vmem:[%s1 + $0x110] sm:$0xf]
      %v1533 = vld [vmem:[%s1 + $0x114] sm:$0xf]
      %v1534 = vld [vmem:[%s1 + $0x118] sm:$0xf]
      %v1535 = vld [vmem:[%s1 + $0x11c] sm:$0xf]
      %v1536 = vld [vmem:[%s1 + $0x120] sm:$0xf]
      %v1537 = vld [vmem:[%s1 + $0x124] sm:$0xf]
      %v1538 = vld [vmem:[%s1 + $0x128] sm:$0xf]
      %v1539 = vld [vmem:[%s1 + $0x12c] sm:$0xf]
      %v1540 = vld [vmem:[%s1 + $0x130] sm:$0xf]
      %v1541 = vld [vmem:[%s1 + $0x134] sm:$0xf]
      %v1542 = vld [vmem:[%s1 + $0x138] sm:$0xf]
      %v1543 = vld [vmem:[%s1 + $0x13c] sm:$0xf]
      %v1544 = vld [vmem:[%s1 + $0x140] sm:$0xf]
      %v1545 = vld [vmem:[%s1 + $0x144] sm:$0xf]
      %v1546 = vld [vmem:[%s1 + $0x148] sm:$0xf]
      %v1547 = vld [vmem:[%s1 + $0x14c] sm:$0xf]
      %v1548 = vld [vmem:[%s1 + $0x150] sm:$0xf]
      %v1549 = vld [vmem:[%s1 + $0x154] sm:$0xf]
      %v1550 = vld [vmem:[%s1 + $0x158] sm:$0xf]
      %v1551 = vld [vmem:[%s1 + $0x15c] sm:$0xf]
      %v1552 = vld [vmem:[%s1 + $0x160] sm:$0xf]
      %v1553 = vld [vmem:[%s1 + $0x164] sm:$0xf]
      %v1554 = vld [vmem:[%s1 + $0x168] sm:$0xf]
      %v1555 = vld [vmem:[%s1 + $0x16c] sm:$0xf]
      %v1556 = vld [vmem:[%s1 + $0x170] sm:$0xf]
      %v1557 = vld [vmem:[%s1 + $0x174] sm:$0xf]
      %v1558 = vld [vmem:[%s1 + $0x178] sm:$0xf]
      %v1559 = vld [vmem:[%s1 + $0x17c] sm:$0xf]
      %v1560 = vld [vmem:[%s1 + $0x180] sm:$0xf]
      %v1561 = vld [vmem:[%s1 + $0x184] sm:$0xf]
      %v1562 = vld [vmem:[%s1 + $0x188] sm:$0xf]
      %v1563 = vld [vmem:[%s1 + $0x18c] sm:$0xf]
      %v1564 = vld [vmem:[%s1 + $0x190] sm:$0xf]
      %v1565 = vld [vmem:[%s1 + $0x194] sm:$0xf]
      %v1566 = vld [vmem:[%s1 + $0x198] sm:$0xf]
      %v1567 = vld [vmem:[%s1 + $0x19c] sm:$0xf]
      %v1568 = vld [vmem:[%s1 + $0x1a0] sm:$0xf]
      %v1569 = vld [vmem:[%s1 + $0x1a4] sm:$0xf]
      %v1570 = vld [vmem:[%s1 + $0x1a8] sm:$0xf]
      %v1571 = vld [vmem:[%s1 + $0x1ac] sm:$0xf]
      %v1572 = vld [vmem:[%s1 + $0x1b0] sm:$0xf]
      %v1573 = vld [vmem:[%s1 + $0x1b4] sm:$0xf]
      %v1574 = vld [vmem:[%s1 + $0x1b8] sm:$0xf]
      %v1575 = vld [vmem:[%s1 + $0x1bc] sm:$0xf]
      %v1576 = vld [vmem:[%s1 + $0x1c0] sm:$0xf]
      %v1577 = vld [vmem:[%s1 + $0x1c4] sm:$0xf]
      %v1578 = vld [vmem:[%s1 + $0x1c8] sm:$0xf]
      %v1579 = vld [vmem:[%s1 + $0x1cc] sm:$0xf]
      %v1580 = vld [vmem:[%s1 + $0x1d0] sm:$0xf]
      %v1581 = vld [vmem:[%s1 + $0x1d4] sm:$0xf]
      %v1582 = vld [vmem:[%s1 + $0x1d8] sm:$0xf]
      %v1583 = vld [vmem:[%s1 + $0x1dc] sm:$0xf]
      %v1584 = vld [vmem:[%s1 + $0x1e0] sm:$0xf]
      %v1585 = vld [vmem:[%s1 + $0x1e4] sm:$0xf]
      %v1586 = vld [vmem:[%s1 + $0x1e8] sm:$0xf]
      %v1587 = vld [vmem:[%s1 + $0x1ec] sm:$0xf]
      %v1588 = vld [vmem:[%s1 + $0x1f0] sm:$0xf]
      %v1589 = vld [vmem:[%s1 + $0x1f4] sm:$0xf]
      %v1590 = vld [vmem:[%s1 + $0x1f8] sm:$0xf]
      %v1591 = vld [vmem:[%s1 + $0x1fc] sm:$0xf]
      %v1592 = vld [vmem:[%s1 + $0x200] sm:$0xf]
      %v1593 = vld [vmem:[%s1 + $0x204] sm:$0xf]
      %v1594 = vld [vmem:[%s1 + $0x208] sm:$0xf]
      %v1595 = vld [vmem:[%s1 + $0x20c] sm:$0xf]
      %v1596 = vld [vmem:[%s1 + $0x210] sm:$0xf]
      %v1597 = vld [vmem:[%s1 + $0x214] sm:$0xf]
      %v1598 = vld [vmem:[%s1 + $0x218] sm:$0xf]
      %v1599 = vld [vmem:[%s1 + $0x21c] sm:$0xf]
      %v1600 = vld [vmem:[%s1 + $0x220] sm:$0xf]
      %v1601 = vld [vmem:[%s1 + $0x224] sm:$0xf]
      %v1602 = vld [vmem:[%s1 + $0x228] sm:$0xf]
      %v1603 = vld [vmem:[%s1 + $0x22c] sm:$0xf]
      %v1604 = vld [vmem:[%s1 + $0x230] sm:$0xf]
      %v1605 = vld [vmem:[%s1 + $0x234] sm:$0xf]
      %v1606 = vld [vmem:[%s1 + $0x238] sm:$0xf]
      %v1607 = vld [vmem:[%s1 + $0x23c] sm:$0xf]
      %v1752 = vunpack.c.l.b16 %v1464
      %v1753 = vunpack.c.l.b16 %v1465
      %v1754 = vunpack.c.l.b16 %v1466
      %v1755 = vunpack.c.l.b16 %v1467
      %v1756 = vunpack.c.l.b16 %v1468
      %v1757 = vunpack.c.l.b16 %v1469
      %v1758 = vunpack.c.l.b16 %v1470
      %v1759 = vunpack.c.l.b16 %v1471
      %v1760 = vunpack.c.l.b16 %v1472
      %v1761 = vunpack.c.l.b16 %v1473
      %v1762 = vunpack.c.l.b16 %v1474
      %v1763 = vunpack.c.l.b16 %v1475
      %v1764 = vunpack.c.l.b16 %v1476
      %v1765 = vunpack.c.l.b16 %v1477
      %v1766 = vunpack.c.l.b16 %v1478
      %v1767 = vunpack.c.l.b16 %v1479
      %v1768 = vunpack.c.l.b16 %v1480
      %v1769 = vunpack.c.l.b16 %v1481
      %v1770 = vunpack.c.l.b16 %v1482
      %v1771 = vunpack.c.l.b16 %v1483
      %v1772 = vunpack.c.l.b16 %v1484
      %v1773 = vunpack.c.l.b16 %v1485
      %v1774 = vunpack.c.l.b16 %v1486
      %v1775 = vunpack.c.l.b16 %v1487
      %v1776 = vunpack.c.l.b16 %v1488
      %v1777 = vunpack.c.l.b16 %v1489
      %v1778 = vunpack.c.l.b16 %v1490
      %v1779 = vunpack.c.l.b16 %v1491
      %v1780 = vunpack.c.l.b16 %v1492
      %v1781 = vunpack.c.l.b16 %v1493
      %v1782 = vunpack.c.l.b16 %v1494
      %v1783 = vunpack.c.l.b16 %v1495
      %v1784 = vunpack.c.l.b16 %v1496
      %v1785 = vunpack.c.l.b16 %v1497
      %v1786 = vunpack.c.l.b16 %v1498
      %v1787 = vunpack.c.l.b16 %v1499
      %v1788 = vunpack.c.l.b16 %v1500
      %v1789 = vunpack.c.l.b16 %v1501
      %v1790 = vunpack.c.l.b16 %v1502
      %v1791 = vunpack.c.l.b16 %v1503
      %v1792 = vunpack.c.l.b16 %v1504
      %v1793 = vunpack.c.l.b16 %v1505
      %v1794 = vunpack.c.l.b16 %v1506
      %v1795 = vunpack.c.l.b16 %v1507
      %v1796 = vunpack.c.l.b16 %v1508
      %v1797 = vunpack.c.l.b16 %v1509
      %v1798 = vunpack.c.l.b16 %v1510
      %v1799 = vunpack.c.l.b16 %v1511
      %v1800 = vunpack.c.l.b16 %v1512
      %v1801 = vunpack.c.l.b16 %v1513
      %v1802 = vunpack.c.l.b16 %v1514
      %v1803 = vunpack.c.l.b16 %v1515
      %v1804 = vunpack.c.l.b16 %v1516
      %v1805 = vunpack.c.l.b16 %v1517
      %v1806 = vunpack.c.l.b16 %v1518
      %v1807 = vunpack.c.l.b16 %v1519
      %v1808 = vunpack.c.l.b16 %v1520
      %v1809 = vunpack.c.l.b16 %v1521
      %v1810 = vunpack.c.l.b16 %v1522
      %v1811 = vunpack.c.l.b16 %v1523
      %v1812 = vunpack.c.l.b16 %v1524
      %v1813 = vunpack.c.l.b16 %v1525
      %v1814 = vunpack.c.l.b16 %v1526
      %v1815 = vunpack.c.l.b16 %v1527
      %v1816 = vunpack.c.l.b16 %v1528
      %v1817 = vunpack.c.l.b16 %v1529
      %v1818 = vunpack.c.l.b16 %v1530
      %v1819 = vunpack.c.l.b16 %v1531
      %v1820 = vunpack.c.l.b16 %v1532
      %v1821 = vunpack.c.l.b16 %v1533
      %v1822 = vunpack.c.l.b16 %v1534
      %v1823 = vunpack.c.l.b16 %v1535
      %v1824 = vunpack.c.l.b16 %v1536
      %v1825 = vunpack.c.l.b16 %v1537
      %v1826 = vunpack.c.l.b16 %v1538
      %v1827 = vunpack.c.l.b16 %v1539
      %v1828 = vunpack.c.l.b16 %v1540
      %v1829 = vunpack.c.l.b16 %v1541
      %v1830 = vunpack.c.l.b16 %v1542
      %v1831 = vunpack.c.l.b16 %v1543
      %v1832 = vunpack.c.l.b16 %v1544
      %v1833 = vunpack.c.l.b16 %v1545
      %v1834 = vunpack.c.l.b16 %v1546
      %v1835 = vunpack.c.l.b16 %v1547
      %v1836 = vunpack.c.l.b16 %v1548
      %v1837 = vunpack.c.l.b16 %v1549
      %v1838 = vunpack.c.l.b16 %v1550
      %v1839 = vunpack.c.l.b16 %v1551
      %v1840 = vunpack.c.l.b16 %v1552
      %v1841 = vunpack.c.l.b16 %v1553
      %v1842 = vunpack.c.l.b16 %v1554
      %v1843 = vunpack.c.l.b16 %v1555
      %v1844 = vunpack.c.l.b16 %v1556
      %v1845 = vunpack.c.l.b16 %v1557
      %v1846 = vunpack.c.l.b16 %v1558
      %v1847 = vunpack.c.l.b16 %v1559
      %v1848 = vunpack.c.l.b16 %v1560
      %v1849 = vunpack.c.l.b16 %v1561
      %v1850 = vunpack.c.l.b16 %v1562
      %v1851 = vunpack.c.l.b16 %v1563
      %v1852 = vunpack.c.l.b16 %v1564
      %v1853 = vunpack.c.l.b16 %v1565
      %v1854 = vunpack.c.l.b16 %v1566
      %v1855 = vunpack.c.l.b16 %v1567
      %v1856 = vunpack.c.l.b16 %v1568
      %v1857 = vunpack.c.l.b16 %v1569
      %v1858 = vunpack.c.l.b16 %v1570
      %v1859 = vunpack.c.l.b16 %v1571
      %v1860 = vunpack.c.l.b16 %v1572
      %v1861 = vunpack.c.l.b16 %v1573
      %v1862 = vunpack.c.l.b16 %v1574
      %v1863 = vunpack.c.l.b16 %v1575
      %v1864 = vunpack.c.l.b16 %v1576
      %v1865 = vunpack.c.l.b16 %v1577
      %v1866 = vunpack.c.l.b16 %v1578
      %v1867 = vunpack.c.l.b16 %v1579
      %v1868 = vunpack.c.l.b16 %v1580
      %v1869 = vunpack.c.l.b16 %v1581
      %v1870 = vunpack.c.l.b16 %v1582
      %v1871 = vunpack.c.l.b16 %v1583
      %v1872 = vunpack.c.l.b16 %v1584
      %v1873 = vunpack.c.l.b16 %v1585
      %v1874 = vunpack.c.l.b16 %v1586
      %v1875 = vunpack.c.l.b16 %v1587
      %v1876 = vunpack.c.l.b16 %v1588
      %v1877 = vunpack.c.l.b16 %v1589
      %v1878 = vunpack.c.l.b16 %v1590
      %v1879 = vunpack.c.l.b16 %v1591
      %v1880 = vunpack.c.l.b16 %v1592
      %v1881 = vunpack.c.l.b16 %v1593
      %v1882 = vunpack.c.l.b16 %v1594
      %v1883 = vunpack.c.l.b16 %v1595
      %v1884 = vunpack.c.l.b16 %v1596
      %v1885 = vunpack.c.l.b16 %v1597
      %v1886 = vunpack.c.l.b16 %v1598
      %v1887 = vunpack.c.l.b16 %v1599
      %v1888 = vunpack.c.l.b16 %v1600
      %v1889 = vunpack.c.l.b16 %v1601
      %v1890 = vunpack.c.l.b16 %v1602
      %v1891 = vunpack.c.l.b16 %v1603
      %v1892 = vunpack.c.l.b16 %v1604
      %v1893 = vunpack.c.l.b16 %v1605
      %v1894 = vunpack.c.l.b16 %v1606
      %v1895 = vunpack.c.l.b16 %v1607
      %v1896 = vpack.c.b16 %v1753, %v1752
      %v1897 = vpack.c.b16 %v1755, %v1754
      %v1898 = vpack.c.b16 %v1757, %v1756
      %v1899 = vpack.c.b16 %v1759, %v1758
      %v1900 = vpack.c.b16 %v1761, %v1760
      %v1901 = vpack.c.b16 %v1763, %v1762
      %v1902 = vpack.c.b16 %v1765, %v1764
      %v1903 = vpack.c.b16 %v1767, %v1766
      %v1904 = vpack.c.b16 %v1769, %v1768
      %v1905 = vpack.c.b16 %v1771, %v1770
      %v1906 = vpack.c.b16 %v1773, %v1772
      %v1907 = vpack.c.b16 %v1775, %v1774
      %v1908 = vpack.c.b16 %v1777, %v1776
      %v1909 = vpack.c.b16 %v1779, %v1778
      %v1910 = vpack.c.b16 %v1781, %v1780
      %v1911 = vpack.c.b16 %v1783, %v1782
      %v1912 = vpack.c.b16 %v1785, %v1784
      %v1913 = vpack.c.b16 %v1787, %v1786
      %v1914 = vpack.c.b16 %v1789, %v1788
      %v1915 = vpack.c.b16 %v1791, %v1790
      %v1916 = vpack.c.b16 %v1793, %v1792
      %v1917 = vpack.c.b16 %v1795, %v1794
      %v1918 = vpack.c.b16 %v1797, %v1796
      %v1919 = vpack.c.b16 %v1799, %v1798
      %v1920 = vpack.c.b16 %v1801, %v1800
      %v1921 = vpack.c.b16 %v1803, %v1802
      %v1922 = vpack.c.b16 %v1805, %v1804
      %v1923 = vpack.c.b16 %v1807, %v1806
      %v1924 = vpack.c.b16 %v1809, %v1808
      %v1925 = vpack.c.b16 %v1811, %v1810
      %v1926 = vpack.c.b16 %v1813, %v1812
      %v1927 = vpack.c.b16 %v1815, %v1814
      %v1928 = vpack.c.b16 %v1817, %v1816
      %v1929 = vpack.c.b16 %v1819, %v1818
      %v1930 = vpack.c.b16 %v1821, %v1820
      %v1931 = vpack.c.b16 %v1823, %v1822
      %v1932 = vpack.c.b16 %v1825, %v1824
      %v1933 = vpack.c.b16 %v1827, %v1826
      %v1934 = vpack.c.b16 %v1829, %v1828
      %v1935 = vpack.c.b16 %v1831, %v1830
      %v1936 = vpack.c.b16 %v1833, %v1832
      %v1937 = vpack.c.b16 %v1835, %v1834
      %v1938 = vpack.c.b16 %v1837, %v1836
      %v1939 = vpack.c.b16 %v1839, %v1838
      %v1940 = vpack.c.b16 %v1841, %v1840
      %v1941 = vpack.c.b16 %v1843, %v1842
      %v1942 = vpack.c.b16 %v1845, %v1844
      %v1943 = vpack.c.b16 %v1847, %v1846
      %v1944 = vpack.c.b16 %v1849, %v1848
      %v1945 = vpack.c.b16 %v1851, %v1850
      %v1946 = vpack.c.b16 %v1853, %v1852
      %v1947 = vpack.c.b16 %v1855, %v1854
      %v1948 = vpack.c.b16 %v1857, %v1856
      %v1949 = vpack.c.b16 %v1859, %v1858
      %v1950 = vpack.c.b16 %v1861, %v1860
      %v1951 = vpack.c.b16 %v1863, %v1862
      %v1952 = vpack.c.b16 %v1865, %v1864
      %v1953 = vpack.c.b16 %v1867, %v1866
      %v1954 = vpack.c.b16 %v1869, %v1868
      %v1955 = vpack.c.b16 %v1871, %v1870
      %v1956 = vpack.c.b16 %v1873, %v1872
      %v1957 = vpack.c.b16 %v1875, %v1874
      %v1958 = vpack.c.b16 %v1877, %v1876
      %v1959 = vpack.c.b16 %v1879, %v1878
      %v1960 = vpack.c.b16 %v1881, %v1880
      %v1961 = vpack.c.b16 %v1883, %v1882
      %v1962 = vpack.c.b16 %v1885, %v1884
      %v1963 = vpack.c.b16 %v1887, %v1886
      %v1964 = vpack.c.b16 %v1889, %v1888
      %v1965 = vpack.c.b16 %v1891, %v1890
      %v1966 = vpack.c.b16 %v1893, %v1892
      %v1967 = vpack.c.b16 %v1895, %v1894
      %2040 = vmatprep.subr.bf16.mxu0 0
      %2041 = vmatpush1.bf16.msra.mxu0 %v1896
      %2042 = vmatprep.subr.bf16.mxu0 0
      %2043 = vmatpush1.bf16.msra.mxu0 %v1897
      %2044 = vmatprep.subr.bf16.mxu0 0
      %2045 = vmatpush1.bf16.msra.mxu0 %v1898
      %2046 = vmatprep.subr.bf16.mxu0 0
      %2047 = vmatpush1.bf16.msra.mxu0 %v1899
      %2048 = vmatprep.subr.bf16.mxu0 0
      %2049 = vmatpush1.bf16.msra.mxu0 %v1900
      %2050 = vmatprep.subr.bf16.mxu0 0
      %2051 = vmatpush1.bf16.msra.mxu0 %v1901
      %2052 = vmatprep.subr.bf16.mxu0 0
      %2053 = vmatpush1.bf16.msra.mxu0 %v1902
      %2054 = vmatprep.subr.bf16.mxu0 0
      %2055 = vmatpush1.bf16.msra.mxu0 %v1903
      %2056 = vmatprep.subr.bf16.mxu0 0
      %2057 = vmatpush1.bf16.msra.mxu0 %v1904
      %2058 = vmatprep.subr.bf16.mxu0 0
      %2059 = vmatpush1.bf16.msra.mxu0 %v1905
      %2060 = vmatprep.subr.bf16.mxu0 0
      %2061 = vmatpush1.bf16.msra.mxu0 %v1906
      %2062 = vmatprep.subr.bf16.mxu0 0
      %2063 = vmatpush1.bf16.msra.mxu0 %v1907
      %2064 = vmatprep.subr.bf16.mxu0 0
      %2065 = vmatpush1.bf16.msra.mxu0 %v1908
      %2066 = vmatprep.subr.bf16.mxu0 0
      %2067 = vmatpush1.bf16.msra.mxu0 %v1909
      %2068 = vmatprep.subr.bf16.mxu0 0
      %2069 = vmatpush1.bf16.msra.mxu0 %v1910
      %2070 = vmatprep.subr.bf16.mxu0 0
      %2071 = vmatpush1.bf16.msra.mxu0 %v1911
      %2072 = vmatprep.mubr.bf16.mxu0 %v1208
      %2073 = vmatmul.mubr.bf16.gmra.mrb[0].mxu0 %v1176
      %v2074 = vpop.f32.mrb[0].mxu0
      %v2075 = vadd.f32 0.0, %v2074
      %v2076 = vpop.f32.mrb[0].mxu0
      %v2077 = vpop.f32.mrb[0].mxu0
      %v2078 = vadd.f32 0.0, %v2077
      %v2079 = vpop.f32.mrb[0].mxu0
      %2080 = vmatprep.mubr.bf16.mxu0 %v1209
      %2081 = vmatmul.mubr.bf16.gmra.mrb[0].mxu0 %v1177
      %v2082 = vpop.f32.mrb[0].mxu0
      %v2083 = vadd.f32 0.0, %v2082
      %v2084 = vpop.f32.mrb[0].mxu0
      %v2085 = vpop.f32.mrb[0].mxu0
      %v2086 = vadd.f32 0.0, %v2085
      %v2087 = vpop.f32.mrb[0].mxu0
      %2088 = vmatprep.mubr.bf16.mxu0 %v1210
      %2089 = vmatmul.mubr.bf16.gmra.mrb[0].mxu0 %v1178
      %v2090 = vpop.f32.mrb[0].mxu0
      %v2091 = vadd.f32 0.0, %v2090
      %v2092 = vpop.f32.mrb[0].mxu0
      %v2093 = vpop.f32.mrb[0].mxu0
      %v2094 = vadd.f32 0.0, %v2093
      %v2095 = vpop.f32.mrb[0].mxu0
      %2096 = vmatprep.mubr.bf16.mxu0 %v1211
      %2097 = vmatmul.mubr.bf16.gmra.mrb[0].mxu0 %v1179
      %v2098 = vpop.f32.mrb[0].mxu0
      %v2099 = vadd.f32 0.0, %v2098
      %v2100 = vpop.f32.mrb[0].mxu0
      %v2101 = vpop.f32.mrb[0].mxu0
      %v2102 = vadd.f32 0.0, %v2101
      %v2103 = vpop.f32.mrb[0].mxu0
      %2104 = vmatprep.mubr.bf16.mxu0 %v1212
      %2105 = vmatmul.mubr.bf16.gmra.mrb[0].mxu0 %v1180
      %v2106 = vpop.f32.mrb[0].mxu0
      %v2107 = vadd.f32 0.0, %v2106
      %v2108 = vpop.f32.mrb[0].mxu0
      %v2109 = vpop.f32.mrb[0].mxu0
      %v2110 = vadd.f32 0.0, %v2109
      %v2111 = vpop.f32.mrb[0].mxu0
      %2112 = vmatprep.mubr.bf16.mxu0 %v1213
      %2113 = vmatmul.mubr.bf16.gmra.mrb[0].mxu0 %v1181
      %v2114 = vpop.f32.mrb[0].mxu0
      %v2115 = vadd.f32 0.0, %v2114
      %v2116 = vpop.f32.mrb[0].mxu0
      %v2117 = vpop.f32.mrb[0].mxu0
      %v2118 = vadd.f32 0.0, %v2117
      %v2119 = vpop.f32.mrb[0].mxu0
      %2120 = vmatprep.mubr.bf16.mxu0 %v1214
      %2121 = vmatmul.mubr.bf16.gmra.mrb[0].mxu0 %v1182
      %v2122 = vpop.f32.mrb[0].mxu0
      %v2123 = vadd.f32 0.0, %v2122
      %v2124 = vpop.f32.mrb[0].mxu0
      %v2125 = vpop.f32.mrb[0].mxu0
      %v2126 = vadd.f32 0.0, %v2125
      %v2127 = vpop.f32.mrb[0].mxu0
      %2128 = vmatprep.mubr.bf16.mxu0 %v1215
      %2129 = vmatmul.mubr.bf16.gmra.mrb[0].mxu0 %v1183
      %v2130 = vpop.f32.mrb[0].mxu0
      %v2131 = vadd.f32 0.0, %v2130
      %v2132 = vpop.f32.mrb[0].mxu0
      %v2133 = vpop.f32.mrb[0].mxu0
      %v2134 = vadd.f32 0.0, %v2133
      %v2135 = vpop.f32.mrb[0].mxu0
      %2136 = vdwg.mxu0
      %2137 = vmatprep.subr.bf16.mxu0 0
      %2138 = vmatpush1.bf16.msra.mxu0 %v1912
      %2139 = vmatprep.subr.bf16.mxu0 0
      %2140 = vmatpush1.bf16.msra.mxu0 %v1913
      %2141 = vmatprep.subr.bf16.mxu0 0
      %2142 = vmatpush1.bf16.msra.mxu0 %v1914
      %2143 = vmatprep.subr.bf16.mxu0 0
      %2144 = vmatpush1.bf16.msra.mxu0 %v1915
      %2145 = vmatprep.subr.bf16.mxu0 0
      %2146 = vmatpush1.bf16.msra.mxu0 %v1916
      %2147 = vmatprep.subr.bf16.mxu0 0
      %2148 = vmatpush1.bf16.msra.mxu0 %v1917
      %2149 = vmatprep.subr.bf16.mxu0 0
      %2150 = vmatpush1.bf16.msra.mxu0 %v1918
      %2151 = vmatprep.subr.bf16.mxu0 0
      %2152 = vmatpush1.bf16.msra.mxu0 %v1919
      %2153 = vmatprep.subr.bf16.mxu0 0
      %2154 = vmatpush1.bf16.msra.mxu0 %v1920
      %2155 = vmatprep.subr.bf16.mxu0 0
      %2156 = vmatpush1.bf16.msra.mxu0 %v1921
      %2157 = vmatprep.subr.bf16.mxu0 0
      %2158 = vmatpush1.bf16.msra.mxu0 %v1922
      %2159 = vmatprep.subr.bf16.mxu0 0
      %2160 = vmatpush1.bf16.msra.mxu0 %v1923
      %2161 = vmatprep.subr.bf16.mxu0 0
      %2162 = vmatpush1.bf16.msra.mxu0 %v1924
      %2163 = vmatprep.subr.bf16.mxu0 0
      %2164 = vmatpush1.bf16.msra.mxu0 %v1925
      %2165 = vmatprep.subr.bf16.mxu0 0
      %2166 = vmatpush1.bf16.msra.mxu0 %v1926
      %2167 = vmatprep.subr.bf16.mxu0 0
      %2168 = vmatpush1.bf16.msra.mxu0 %v1927
      %2169 = vmatprep.mubr.bf16.mxu0 %v1280
      %2170 = vmatmul.mubr.bf16.gmra.mrb[0].mxu0 %v1240
      %v2171 = vpop.f32.mrb[0].mxu0
      %v2172 = vadd.f32 %v2075, %v2171
      %v2173 = vpop.f32.mrb[0].mxu0
      %v2174 = vpop.f32.mrb[0].mxu0
      %v2175 = vadd.f32 %v2078, %v2174
      %v2176 = vpop.f32.mrb[0].mxu0
      %2177 = vmatprep.mubr.bf16.mxu0 %v1281
      %2178 = vmatmul.mubr.bf16.gmra.mrb[0].mxu0 %v1241
      %v2179 = vpop.f32.mrb[0].mxu0
      %v2180 = vadd.f32 %v2083, %v2179
      %v2181 = vpop.f32.mrb[0].mxu0
      %v2182 = vpop.f32.mrb[0].mxu0
      %v2183 = vadd.f32 %v2086, %v2182
      %v2184 = vpop.f32.mrb[0].mxu0
      %2185 = vmatprep.mubr.bf16.mxu0 %v1282
      %2186 = vmatmul.mubr.bf16.gmra.mrb[0].mxu0 %v1242
      %v2187 = vpop.f32.mrb[0].mxu0
      %v2188 = vadd.f32 %v2091, %v2187
      %v2189 = vpop.f32.mrb[0].mxu0
      %v2190 = vpop.f32.mrb[0].mxu0
      %v2191 = vadd.f32 %v2094, %v2190
      %v2192 = vpop.f32.mrb[0].mxu0
      %2193 = vmatprep.mubr.bf16.mxu0 %v1283
      %2194 = vmatmul.mubr.bf16.gmra.mrb[0].mxu0 %v1243
      %v2195 = vpop.f32.mrb[0].mxu0
      %v2196 = vadd.f32 %v2099, %v2195
      %v2197 = vpop.f32.mrb[0].mxu0
      %v2198 = vpop.f32.mrb[0].mxu0
      %v2199 = vadd.f32 %v2102, %v2198
      %v2200 = vpop.f32.mrb[0].mxu0
      %2201 = vmatprep.mubr.bf16.mxu0 %v1284
      %2202 = vmatmul.mubr.bf16.gmra.mrb[0].mxu0 %v1244
      %v2203 = vpop.f32.mrb[0].mxu0
      %v2204 = vadd.f32 %v2107, %v2203
      %v2205 = vpop.f32.mrb[0].mxu0
      %v2206 = vpop.f32.mrb[0].mxu0
      %v2207 = vadd.f32 %v2110, %v2206
      %v2208 = vpop.f32.mrb[0].mxu0
      %2209 = vmatprep.mubr.bf16.mxu0 %v1285
      %2210 = vmatmul.mubr.bf16.gmra.mrb[0].mxu0 %v1245
      %v2211 = vpop.f32.mrb[0].mxu0
      %v2212 = vadd.f32 %v2115, %v2211
      %v2213 = vpop.f32.mrb[0].mxu0
      %v2214 = vpop.f32.mrb[0].mxu0
      %v2215 = vadd.f32 %v2118, %v2214
      %v2216 = vpop.f32.mrb[0].mxu0
      %2217 = vmatprep.mubr.bf16.mxu0 %v1286
      %2218 = vmatmul.mubr.bf16.gmra.mrb[0].mxu0 %v1246
      %v2219 = vpop.f32.mrb[0].mxu0
      %v2220 = vadd.f32 %v2123, %v2219
      %v2221 = vpop.f32.mrb[0].mxu0
      %v2222 = vpop.f32.mrb[0].mxu0
      %v2223 = vadd.f32 %v2126, %v2222
      %v2224 = vpop.f32.mrb[0].mxu0
      %2225 = vmatprep.mubr.bf16.mxu0 %v1287
      %2226 = vmatmul.mubr.bf16.gmra.mrb[0].mxu0 %v1247
      %v2227 = vpop.f32.mrb[0].mxu0
      %v2228 = vadd.f32 %v2131, %v2227
      %v2229 = vpop.f32.mrb[0].mxu0
      %v2230 = vpop.f32.mrb[0].mxu0
      %v2231 = vadd.f32 %v2134, %v2230
      %v2232 = vpop.f32.mrb[0].mxu0
      %2233 = vdwg.mxu0
      %2234 = vmatprep.subr.bf16.mxu0 0
      %2235 = vmatpush1.bf16.msra.mxu0 %v1928
      %2236 = vmatprep.subr.bf16.mxu0 0
      %2237 = vmatpush1.bf16.msra.mxu0 %v1929
      %2238 = vmatprep.subr.bf16.mxu0 0
      %2239 = vmatpush1.bf16.msra.mxu0 %v1930
      %2240 = vmatprep.subr.bf16.mxu0 0
      %2241 = vmatpush1.bf16.msra.mxu0 %v1931
      %2242 = vmatprep.subr.bf16.mxu0 0
      %2243 = vmatpush1.bf16.msra.mxu0 %v1932
      %2244 = vmatprep.subr.bf16.mxu0 0
      %2245 = vmatpush1.bf16.msra.mxu0 %v1933
      %2246 = vmatprep.subr.bf16.mxu0 0
      %2247 = vmatpush1.bf16.msra.mxu0 %v1934
      %2248 = vmatprep.subr.bf16.mxu0 0
      %2249 = vmatpush1.bf16.msra.mxu0 %v1935
      %2250 = vmatprep.subr.bf16.mxu0 0
      %2251 = vmatpush1.bf16.msra.mxu0 %v1936
      %2252 = vmatprep.subr.bf16.mxu0 0
      %2253 = vmatpush1.bf16.msra.mxu0 %v1937
      %2254 = vmatprep.subr.bf16.mxu0 0
      %2255 = vmatpush1.bf16.msra.mxu0 %v1938
      %2256 = vmatprep.subr.bf16.mxu0 0
      %2257 = vmatpush1.bf16.msra.mxu0 %v1939
      %2258 = vmatprep.subr.bf16.mxu0 0
      %2259 = vmatpush1.bf16.msra.mxu0 %v1940
      %2260 = vmatprep.subr.bf16.mxu0 0
      %2261 = vmatpush1.bf16.msra.mxu0 %v1941
      %2262 = vmatprep.subr.bf16.mxu0 0
      %2263 = vmatpush1.bf16.msra.mxu0 %v1942
      %2264 = vmatprep.subr.bf16.mxu0 0
      %2265 = vmatpush1.bf16.msra.mxu0 %v1943
      %2266 = vmatprep.mubr.bf16.mxu0 %v1344
      %2267 = vmatmul.mubr.bf16.gmra.mrb[0].mxu0 %v1312
      %v2268 = vpop.f32.mrb[0].mxu0
      %v2269 = vadd.f32 %v2172, %v2268
      %v2270 = vpop.f32.mrb[0].mxu0
      %v2271 = vpop.f32.mrb[0].mxu0
      %v2272 = vadd.f32 %v2175, %v2271
      %v2273 = vpop.f32.mrb[0].mxu0
      %2274 = vmatprep.mubr.bf16.mxu0 %v1345
      %2275 = vmatmul.mubr.bf16.gmra.mrb[0].mxu0 %v1313
      %v2276 = vpop.f32.mrb[0].mxu0
      %v2277 = vadd.f32 %v2180, %v2276
      %v2278 = vpop.f32.mrb[0].mxu0
      %v2279 = vpop.f32.mrb[0].mxu0
      %v2280 = vadd.f32 %v2183, %v2279
      %v2281 = vpop.f32.mrb[0].mxu0
      %2282 = vmatprep.mubr.bf16.mxu0 %v1346
      %2283 = vmatmul.mubr.bf16.gmra.mrb[0].mxu0 %v1314
      %v2284 = vpop.f32.mrb[0].mxu0
      %v2285 = vadd.f32 %v2188, %v2284
      %v2286 = vpop.f32.mrb[0].mxu0
      %v2287 = vpop.f32.mrb[0].mxu0
      %v2288 = vadd.f32 %v2191, %v2287
      %v2289 = vpop.f32.mrb[0].mxu0
      %2290 = vmatprep.mubr.bf16.mxu0 %v1347
      %2291 = vmatmul.mubr.bf16.gmra.mrb[0].mxu0 %v1315
      %v2292 = vpop.f32.mrb[0].mxu0
      %v2293 = vadd.f32 %v2196, %v2292
      %v2294 = vpop.f32.mrb[0].mxu0
      %v2295 = vpop.f32.mrb[0].mxu0
      %v2296 = vadd.f32 %v2199, %v2295
      %v2297 = vpop.f32.mrb[0].mxu0
      %2298 = vmatprep.mubr.bf16.mxu0 %v1348
      %2299 = vmatmul.mubr.bf16.gmra.mrb[0].mxu0 %v1316
      %v2300 = vpop.f32.mrb[0].mxu0
      %v2301 = vadd.f32 %v2204, %v2300
      %v2302 = vpop.f32.mrb[0].mxu0
      %v2303 = vpop.f32.mrb[0].mxu0
      %v2304 = vadd.f32 %v2207, %v2303
      %v2305 = vpop.f32.mrb[0].mxu0
      %2306 = vmatprep.mubr.bf16.mxu0 %v1349
      %2307 = vmatmul.mubr.bf16.gmra.mrb[0].mxu0 %v1317
      %v2308 = vpop.f32.mrb[0].mxu0
      %v2309 = vadd.f32 %v2212, %v2308
      %v2310 = vpop.f32.mrb[0].mxu0
      %v2311 = vpop.f32.mrb[0].mxu0
      %v2312 = vadd.f32 %v2215, %v2311
      %v2313 = vpop.f32.mrb[0].mxu0
      %2314 = vmatprep.mubr.bf16.mxu0 %v1350
      %2315 = vmatmul.mubr.bf16.gmra.mrb[0].mxu0 %v1318
      %v2316 = vpop.f32.mrb[0].mxu0
      %v2317 = vadd.f32 %v2220, %v2316
      %v2318 = vpop.f32.mrb[0].mxu0
      %v2319 = vpop.f32.mrb[0].mxu0
      %v2320 = vadd.f32 %v2223, %v2319
      %v2321 = vpop.f32.mrb[0].mxu0
      %2322 = vmatprep.mubr.bf16.mxu0 %v1351
      %2323 = vmatmul.mubr.bf16.gmra.mrb[0].mxu0 %v1319
      %v2324 = vpop.f32.mrb[0].mxu0
      %v2325 = vadd.f32 %v2228, %v2324
      %v2326 = vpop.f32.mrb[0].mxu0
      %v2327 = vpop.f32.mrb[0].mxu0
      %v2328 = vadd.f32 %v2231, %v2327
      %v2329 = vpop.f32.mrb[0].mxu0
      %2330 = vdwg.mxu0
      %2331 = vmatprep.subr.bf16.mxu0 0
      %2332 = vmatpush1.bf16.msra.mxu0 %v1944
      %2333 = vmatprep.subr.bf16.mxu0 0
      %2334 = vmatpush1.bf16.msra.mxu0 %v1945
      %2335 = vmatprep.subr.bf16.mxu0 0
      %2336 = vmatpush1.bf16.msra.mxu0 %v1946
      %2337 = vmatprep.subr.bf16.mxu0 0
      %2338 = vmatpush1.bf16.msra.mxu0 %v1947
      %2339 = vmatprep.subr.bf16.mxu0 0
      %2340 = vmatpush1.bf16.msra.mxu0 %v1948
      %2341 = vmatprep.subr.bf16.mxu0 0
      %2342 = vmatpush1.bf16.msra.mxu0 %v1949
      %2343 = vmatprep.subr.bf16.mxu0 0
      %2344 = vmatpush1.bf16.msra.mxu0 %v1950
      %2345 = vmatprep.subr.bf16.mxu0 0
      %2346 = vmatpush1.bf16.msra.mxu0 %v1951
      %2347 = vmatprep.subr.bf16.mxu0 0
      %2348 = vmatpush1.bf16.msra.mxu0 %v1952
      %2349 = vmatprep.subr.bf16.mxu0 0
      %2350 = vmatpush1.bf16.msra.mxu0 %v1953
      %2351 = vmatprep.subr.bf16.mxu0 0
      %2352 = vmatpush1.bf16.msra.mxu0 %v1954
      %2353 = vmatprep.subr.bf16.mxu0 0
      %2354 = vmatpush1.bf16.msra.mxu0 %v1955
      %2355 = vmatprep.subr.bf16.mxu0 0
      %2356 = vmatpush1.bf16.msra.mxu0 %v1956
      %2357 = vmatprep.subr.bf16.mxu0 0
      %2358 = vmatpush1.bf16.msra.mxu0 %v1957
      %2359 = vmatprep.subr.bf16.mxu0 0
      %2360 = vmatpush1.bf16.msra.mxu0 %v1958
      %2361 = vmatprep.subr.bf16.mxu0 0
      %2362 = vmatpush1.bf16.msra.mxu0 %v1959
      %2363 = vmatprep.mubr.bf16.mxu0 %v1416
      %2364 = vmatmul.mubr.bf16.gmra.mrb[0].mxu0 %v1384
      %v2365 = vpop.f32.mrb[0].mxu0
      %v2366 = vadd.f32 %v2269, %v2365
      %v2367 = vpop.f32.mrb[0].mxu0
      %v2368 = vpop.f32.mrb[0].mxu0
      %v2369 = vadd.f32 %v2272, %v2368
      %v2370 = vpop.f32.mrb[0].mxu0
      %2371 = vmatprep.mubr.bf16.mxu0 %v1417
      %2372 = vmatmul.mubr.bf16.gmra.mrb[0].mxu0 %v1385
      %v2373 = vpop.f32.mrb[0].mxu0
      %v2374 = vadd.f32 %v2277, %v2373
      %v2375 = vpop.f32.mrb[0].mxu0
      %v2376 = vpop.f32.mrb[0].mxu0
      %v2377 = vadd.f32 %v2280, %v2376
      %v2378 = vpop.f32.mrb[0].mxu0
      %2379 = vmatprep.mubr.bf16.mxu0 %v1418
      %2380 = vmatmul.mubr.bf16.gmra.mrb[0].mxu0 %v1386
      %v2381 = vpop.f32.mrb[0].mxu0
      %v2382 = vadd.f32 %v2285, %v2381
      %v2383 = vpop.f32.mrb[0].mxu0
      %v2384 = vpop.f32.mrb[0].mxu0
      %v2385 = vadd.f32 %v2288, %v2384
      %v2386 = vpop.f32.mrb[0].mxu0
      %2387 = vmatprep.mubr.bf16.mxu0 %v1419
      %2388 = vmatmul.mubr.bf16.gmra.mrb[0].mxu0 %v1387
      %v2389 = vpop.f32.mrb[0].mxu0
      %v2390 = vadd.f32 %v2293, %v2389
      %v2391 = vpop.f32.mrb[0].mxu0
      %v2392 = vpop.f32.mrb[0].mxu0
      %v2393 = vadd.f32 %v2296, %v2392
      %v2394 = vpop.f32.mrb[0].mxu0
      %2395 = vmatprep.mubr.bf16.mxu0 %v1420
      %2396 = vmatmul.mubr.bf16.gmra.mrb[0].mxu0 %v1388
      %v2397 = vpop.f32.mrb[0].mxu0
      %v2398 = vadd.f32 %v2301, %v2397
      %v2399 = vpop.f32.mrb[0].mxu0
      %v2400 = vpop.f32.mrb[0].mxu0
      %v2401 = vadd.f32 %v2304, %v2400
      %v2402 = vpop.f32.mrb[0].mxu0
      %2403 = vmatprep.mubr.bf16.mxu0 %v1421
      %2404 = vmatmul.mubr.bf16.gmra.mrb[0].mxu0 %v1389
      %v2405 = vpop.f32.mrb[0].mxu0
      %v2406 = vadd.f32 %v2309, %v2405
      %v2407 = vpop.f32.mrb[0].mxu0
      %v2408 = vpop.f32.mrb[0].mxu0
      %v2409 = vadd.f32 %v2312, %v2408
      %v2410 = vpop.f32.mrb[0].mxu0
      %2411 = vmatprep.mubr.bf16.mxu0 %v1422
      %2412 = vmatmul.mubr.bf16.gmra.mrb[0].mxu0 %v1390
      %v2413 = vpop.f32.mrb[0].mxu0
      %v2414 = vadd.f32 %v2317, %v2413
      %v2415 = vpop.f32.mrb[0].mxu0
      %v2416 = vpop.f32.mrb[0].mxu0
      %v2417 = vadd.f32 %v2320, %v2416
      %v2418 = vpop.f32.mrb[0].mxu0
      %2419 = vmatprep.mubr.bf16.mxu0 %v1423
      %2420 = vmatmul.mubr.bf16.gmra.mrb[0].mxu0 %v1391
      %v2421 = vpop.f32.mrb[0].mxu0
      %v2422 = vadd.f32 %v2325, %v2421
      %v2423 = vpop.f32.mrb[0].mxu0
      %v2424 = vpop.f32.mrb[0].mxu0
      %v2425 = vadd.f32 %v2328, %v2424
      %v2426 = vpop.f32.mrb[0].mxu0
      %2427 = vdwg.mxu0
      %2428 = vmatprep.subr.bf16.mxu0 0
      %2429 = vmatpush1.bf16.msra.mxu0 %v1960
      %2430 = vmatprep.subr.bf16.mxu0 0
      %2431 = vmatpush1.bf16.msra.mxu0 %v1961
      %2432 = vmatprep.subr.bf16.mxu0 0
      %2433 = vmatpush1.bf16.msra.mxu0 %v1962
      %2434 = vmatprep.subr.bf16.mxu0 0
      %2435 = vmatpush1.bf16.msra.mxu0 %v1963
      %2436 = vmatprep.subr.bf16.mxu0 0
      %2437 = vmatpush1.bf16.msra.mxu0 %v1964
      %2438 = vmatprep.subr.bf16.mxu0 0
      %2439 = vmatpush1.bf16.msra.mxu0 %v1965
      %2440 = vmatprep.subr.bf16.mxu0 0
      %2441 = vmatpush1.bf16.msra.mxu0 %v1966
      %2442 = vmatprep.subr.bf16.mxu0 0
      %2443 = vmatpush1.bf16.msra.mxu0 %v1967
      %2444 = vmatprep.subr.bf16.mxu0 0
      %2445 = vmatpush1.bf16.msra.mxu0 0
      %2446 = vmatprep.subr.bf16.mxu0 0
      %2447 = vmatpush1.bf16.msra.mxu0 0
      %2448 = vmatprep.subr.bf16.mxu0 0
      %2449 = vmatpush1.bf16.msra.mxu0 0
      %2450 = vmatprep.subr.bf16.mxu0 0
      %2451 = vmatpush1.bf16.msra.mxu0 0
      %2452 = vmatprep.subr.bf16.mxu0 0
      %2453 = vmatpush1.bf16.msra.mxu0 0
      %2454 = vmatprep.subr.bf16.mxu0 0
      %2455 = vmatpush1.bf16.msra.mxu0 0
      %2456 = vmatprep.subr.bf16.mxu0 0
      %2457 = vmatpush1.bf16.msra.mxu0 0
      %2458 = vmatprep.subr.bf16.mxu0 0
      %2459 = vmatpush1.bf16.msra.mxu0 0
      %2460 = vmatprep.mubr.bf16.mxu0 0
      %2461 = vmatmul.mubr.bf16.gmra.mrb[0].mxu0 %v1448
      %v2462 = vpop.f32.mrb[0].mxu0
      %v2463 = vadd.f32 %v2366, %v2462
      %v2464 = vpop.f32.mrb[0].mxu0
      %v2465 = vpop.f32.mrb[0].mxu0
      %v2466 = vadd.f32 %v2369, %v2465
      %v2467 = vpop.f32.mrb[0].mxu0
      %2468 = vmatprep.mubr.bf16.mxu0 0
      %2469 = vmatmul.mubr.bf16.gmra.mrb[0].mxu0 %v1449
      %v2470 = vpop.f32.mrb[0].mxu0
      %v2471 = vadd.f32 %v2374, %v2470
      %v2472 = vpop.f32.mrb[0].mxu0
      %v2473 = vpop.f32.mrb[0].mxu0
      %v2474 = vadd.f32 %v2377, %v2473
      %v2475 = vpop.f32.mrb[0].mxu0
      %2476 = vmatprep.mubr.bf16.mxu0 0
      %2477 = vmatmul.mubr.bf16.gmra.mrb[0].mxu0 %v1450
      %v2478 = vpop.f32.mrb[0].mxu0
      %v2479 = vadd.f32 %v2382, %v2478
      %v2480 = vpop.f32.mrb[0].mxu0
      %v2481 = vpop.f32.mrb[0].mxu0
      %v2482 = vadd.f32 %v2385, %v2481
      %v2483 = vpop.f32.mrb[0].mxu0
      %2484 = vmatprep.mubr.bf16.mxu0 0
      %2485 = vmatmul.mubr.bf16.gmra.mrb[0].mxu0 %v1451
      %v2486 = vpop.f32.mrb[0].mxu0
      %v2487 = vadd.f32 %v2390, %v2486
      %v2488 = vpop.f32.mrb[0].mxu0
      %v2489 = vpop.f32.mrb[0].mxu0
      %v2490 = vadd.f32 %v2393, %v2489
      %v2491 = vpop.f32.mrb[0].mxu0
      %2492 = vmatprep.mubr.bf16.mxu0 0
      %2493 = vmatmul.mubr.bf16.gmra.mrb[0].mxu0 %v1452
      %v2494 = vpop.f32.mrb[0].mxu0
      %v2495 = vadd.f32 %v2398, %v2494
      %v2496 = vpop.f32.mrb[0].mxu0
      %v2497 = vpop.f32.mrb[0].mxu0
      %v2498 = vadd.f32 %v2401, %v2497
      %v2499 = vpop.f32.mrb[0].mxu0
      %2500 = vmatprep.mubr.bf16.mxu0 0
      %2501 = vmatmul.mubr.bf16.gmra.mrb[0].mxu0 %v1453
      %v2502 = vpop.f32.mrb[0].mxu0
      %v2503 = vadd.f32 %v2406, %v2502
      %v2504 = vpop.f32.mrb[0].mxu0
      %v2505 = vpop.f32.mrb[0].mxu0
      %v2506 = vadd.f32 %v2409, %v2505
      %v2507 = vpop.f32.mrb[0].mxu0
      %2508 = vmatprep.mubr.bf16.mxu0 0
      %2509 = vmatmul.mubr.bf16.gmra.mrb[0].mxu0 %v1454
      %v2510 = vpop.f32.mrb[0].mxu0
      %v2511 = vadd.f32 %v2414, %v2510
      %v2512 = vpop.f32.mrb[0].mxu0
      %v2513 = vpop.f32.mrb[0].mxu0
      %v2514 = vadd.f32 %v2417, %v2513
      %v2515 = vpop.f32.mrb[0].mxu0
      %2516 = vmatprep.mubr.bf16.mxu0 0
      %2517 = vmatmul.mubr.bf16.gmra.mrb[0].mxu0 %v1455
      %v2518 = vpop.f32.mrb[0].mxu0
      %v2519 = vadd.f32 %v2422, %v2518
      %v2520 = vpop.f32.mrb[0].mxu0
      %v2521 = vpop.f32.mrb[0].mxu0
      %v2522 = vadd.f32 %v2425, %v2521
      %v2523 = vpop.f32.mrb[0].mxu0
      %2524 = vdwg.mxu0
      %2525 = vst [vmem:[%s221] sm:$0xff] %v2463
      %2526 = vst [vmem:[%s221 + $0x8] sm:$0xff] %v2466
      %2527 = vst [vmem:[%s221 + $0x10] sm:$0xff] %v2471
      %2528 = vst [vmem:[%s221 + $0x18] sm:$0xff] %v2474
      %2529 = vst [vmem:[%s221 + $0x20] sm:$0xff] %v2479
      %2530 = vst [vmem:[%s221 + $0x28] sm:$0xff] %v2482
      %2531 = vst [vmem:[%s221 + $0x30] sm:$0xff] %v2487
      %2532 = vst [vmem:[%s221 + $0x38] sm:$0xff] %v2490
      %2533 = vst [vmem:[%s221 + $0x40] sm:$0xff] %v2495
      %2534 = vst [vmem:[%s221 + $0x48] sm:$0xff] %v2498
      %2535 = vst [vmem:[%s221 + $0x50] sm:$0xff] %v2503
      %2536 = vst [vmem:[%s221 + $0x58] sm:$0xff] %v2506
      %2537 = vst [vmem:[%s221 + $0x60] sm:$0xff] %v2511
      %2538 = vst [vmem:[%s221 + $0x68] sm:$0xff] %v2514
      %2539 = vst [vmem:[%s221 + $0x70] sm:$0xff] %v2519
      %2540 = vst [vmem:[%s221 + $0x78] sm:$0xff] %v2522
      %v2541 = vadd.f32 %v2463, %v2466
      %v2542 = vadd.f32 %v2541, %v2471
      %v2543 = vadd.f32 %v2542, %v2474
      %v2544 = vadd.f32 %v2543, %v2479
      %v2545 = vadd.f32 %v2544, %v2482
      %v2546 = vadd.f32 %v2545, %v2487
      %v2547 = vadd.f32 %v2546, %v2490
      %v2548 = vadd.f32 %v2547, %v2495
      %v2549 = vadd.f32 %v2548, %v2498
      %v2550 = vadd.f32 %v2549, %v2503
      %v2551 = vadd.f32 %v2550, %v2506
      %v2552 = vadd.f32 %v2551, %v2511
      %v2553 = vadd.f32 %v2552, %v2514
      %v2554 = vadd.f32 %v2553, %v2519
      %v2555 = vadd.f32 %v2554, %v2522
      %v2556 = vrot.slane %v2555, 4
      %v2557 = vadd.f32 %v2555, %v2556
      %v2558 = vrot.slane %v2557, 2
      %v2559 = vadd.f32 %v2557, %v2558
      %v2560 = vrot.slane %v2559, 1
      %v2561 = vadd.f32 %v2559, %v2560
      %v2562 = vmul.f32 %v2463, %v2463
      %v2563 = vmul.f32 %v2466, %v2466
      %v2564 = vmul.f32 %v2471, %v2471
      %v2565 = vmul.f32 %v2474, %v2474
      %v2566 = vmul.f32 %v2479, %v2479
      %v2567 = vmul.f32 %v2482, %v2482
      %v2568 = vmul.f32 %v2487, %v2487
      %v2569 = vmul.f32 %v2490, %v2490
      %v2570 = vmul.f32 %v2495, %v2495
      %v2571 = vmul.f32 %v2498, %v2498
      %v2572 = vmul.f32 %v2503, %v2503
      %v2573 = vmul.f32 %v2506, %v2506
      %v2574 = vmul.f32 %v2511, %v2511
      %v2575 = vmul.f32 %v2514, %v2514
      %v2576 = vmul.f32 %v2519, %v2519
      %v2577 = vmul.f32 %v2522, %v2522
      %v2578 = vadd.f32 %v2562, %v2563
      %v2579 = vadd.f32 %v2578, %v2564
      %v2580 = vadd.f32 %v2579, %v2565
      %v2581 = vadd.f32 %v2580, %v2566
      %v2582 = vadd.f32 %v2581, %v2567
      %v2583 = vadd.f32 %v2582, %v2568
      %v2584 = vadd.f32 %v2583, %v2569
      %v2585 = vadd.f32 %v2584, %v2570
      %v2586 = vadd.f32 %v2585, %v2571
      %v2587 = vadd.f32 %v2586, %v2572
      %v2588 = vadd.f32 %v2587, %v2573
      %v2589 = vadd.f32 %v2588, %v2574
      %v2590 = vadd.f32 %v2589, %v2575
      %v2591 = vadd.f32 %v2590, %v2576
      %v2592 = vadd.f32 %v2591, %v2577
      %v2593 = vrot.slane %v2592, 4
      %v2594 = vadd.f32 %v2592, %v2593
      %v2595 = vrot.slane %v2594, 2
      %v2596 = vadd.f32 %v2594, %v2595
      %v2597 = vrot.slane %v2596, 1
      %v2598 = vadd.f32 %v2596, %v2597
      %vm2599 = vcmask 1040384
      %v2600 = vsel %vm2599, %v2561, %v2598
      %vm2601 = vcmask 1041408
      %v2602 = vsel %vm2601, %v2600, 0.0
      %2603 = vst [vmem:[%s230] sm:$0xff] %v2602
      %s2604 = smul.u32 8, %s20
      %p2605 = scmp.lt.s32.totalorder %s19, 1
      %s2606 = scalar_select %p2605, %s19, 1
      %p2607 = scmp.lt.s32.totalorder %s2604, 15
      %s2608 = scalar_select %p2607, %s2604, 15
      %s2609 = smul.addr %s2608, 2
      %s2610 = smul.addr %s2606, 32
      %s2611 = sadd.s32 %s2609, %s2610
      %s2612 = smul.addr %s2611, 8
      %s2613 = scalar_lea.vmem %s2, %s2612
      %p2614 = scmp.lt.s32.totalorder %s19, 1
      %s2615 = scalar_select %p2614, %s19, 1
      %p2616 = scmp.lt.s32.totalorder %s20, 1
      %s2617 = scalar_select %p2616, %s20, 1
      %s2618 = smul.addr %s2615, 2
      %s2619 = sadd.s32 %s2617, %s2618
      %s2620 = smul.addr %s2619, 8
      %s2621 = scalar_lea.vmem %s3, %s2620
      // Predicated region
      $region29: #{conv_block_forward.4} parent=27 // pred_check
        %p2622 = pneg %p96
      $region30: #{conv_block_forward.4} parent=27 // pred_check_branch
        %2624 = sbr.rel (%p2622) target = $region32
      $region31: #{conv_block_forward.4} parent=27 // pred_region
        %s2625 = smul.u32 8, %s20
      $region32: #{conv_block_forward.4} parent=27 // pred_fallthru
        _
      // Predicated region
      $region33: #{conv_block_forward.4} parent=27 // pred_check
        %p2626 = pneg %p124
      $region34: #{conv_block_forward.4} parent=27 // pred_check_branch
        %2628 = sbr.rel (%p2626) target = $region36
      $region35: #{conv_block_forward.4} parent=27 // pred_region
        _
      $region36: #{conv_block_forward.4} parent=27 // pred_fallthru
        _
    $region28: #{conv_block_forward.4} parent=5 // pred_fallthru
      _
    %p2629 = scmp.le.s32.totalorder 2, %s10
    // Predicated region
    $region37: #{conv_block_forward.4} parent=5 // pred_check
      %p2630 = pneg %p2629
    $region38: #{conv_block_forward.4} parent=5 // pred_check_branch
      %2632 = sbr.rel (%p2630) target = $region40
    $region39: #{conv_block_forward.4} parent=5 // pred_region
      %s2633 = ssub.s32 %s10, 2
      // Predicated region
      $region41: #{conv_block_forward.4} parent=39 // pred_check
        %p2634 = pneg %p102
      $region42: #{conv_block_forward.4} parent=39 // pred_check_branch
        %2636 = sbr.rel (%p2634) target = $region44
      $region43: #{conv_block_forward.4} parent=39 // pred_region
        %s2637 = smul.u32 8, %s22
        %p2638 = scmp.lt.s32.totalorder %s21, 1
        %s2639 = scalar_select %p2638, %s21, 1
        %p2640 = scmp.lt.s32.totalorder %s2637, 15
        %s2641 = scalar_select %p2640, %s2637, 15
        %s2642 = smul.addr %s2641, 2
        %s2643 = smul.addr %s2639, 32
        %s2644 = sadd.s32 %s2642, %s2643
        %s2645 = smul.addr %s2644, 8
        %s2646 = scalar_lea.vmem %s2, %s2645
      $region44: #{conv_block_forward.4} parent=39 // pred_fallthru
        _
      // Predicated region
      $region45: #{conv_block_forward.4} parent=39 // pred_check
        %p2647 = pneg %p130
      $region46: #{conv_block_forward.4} parent=39 // pred_check_branch
        %2649 = sbr.rel (%p2647) target = $region48
      $region47: #{conv_block_forward.4} parent=39 // pred_region
        %p2650 = scmp.lt.s32.totalorder %s21, 1
        %s2651 = scalar_select %p2650, %s21, 1
        %p2652 = scmp.lt.s32.totalorder %s22, 1
        %s2653 = scalar_select %p2652, %s22, 1
        %s2654 = smul.addr %s2651, 2
        %s2655 = sadd.s32 %s2653, %s2654
        %s2656 = smul.addr %s2655, 8
        %s2657 = scalar_lea.vmem %s3, %s2656
      $region48: #{conv_block_forward.4} parent=39 // pred_fallthru
        _
    $region40: #{conv_block_forward.4} parent=5 // pred_fallthru
      _
  $region6: #{conv_block_forward.4} parent=0 // loop_footer
    %s14 = sadd.s32 1, %s10
  $region7: #{conv_block_forward.4} parent=0 // loop_footer_branch
    %9 = sbr.rel target = $region3
  $region8: #{conv_block_forward.4} parent=0 // loop_exit
    _

// kernel: conv_block_forward.7
$region0: #{conv_block_forward.7}
  #allocation0 [shape = 'u32[]', space=smem, size = 0x4, offset = 0x4, fixed_abs, tag = 'smem constant byte address 0x4 - core index']
  #allocation1 [shape = 'u32[144,128]{1,0:T(1,128)}', space=vmem, size = 0x12000, scoped, tag = 'internal scratch']
  %s0 = inlined_call_operand.vmem [shape: f32[2,16,16,128], index: 0, kind: input, shape index: {}]
  %s1 = inlined_call_operand.vmem [shape: f32[1,128], index: 1, kind: input, shape index: {}]
  %s2 = inlined_call_operand.vmem [shape: f32[1,128], index: 2, kind: input, shape index: {}]
  %s3 = inlined_call_operand.vmem [shape: f32[2,16,16,128], index: 3, kind: output, shape index: {}]
  %s4 = sld [smem:[#allocation0]]
  $region45: #{conv_block_forward.7} parent=0
    _
  %s6 = ssub.s32 1, %s4
  %s7 = scalar_select 0, %s6, %s4
  loop: start=0, step=1, limit=6
  $region2: #{conv_block_forward.7} parent=0 // loop_pre_header
    _
  $region3: #{conv_block_forward.7} parent=0 // loop_header
    %s9 = sphi 0, %s13
    %p10 = scmp.ge.s32.totalorder %s9, 6
    %s16 = sphi 0, %s28
    %s17 = sphi 0, %s24
    %s18 = sphi 0, %s16
    %s19 = sphi 0, %s17
    %s20 = sphi 0, %s18
    %s21 = sphi 0, %s19
    %s33 = sphi 0, %s35
    %s36 = sphi 0, %s33
    %s37 = sphi 0, %s36
    %s53 = sphi 0, %s37
    %s57 = sphi 0, %s57
    %s59 = sphi 0, %s57
    %s60 = sphi 0, %s59
    %s74 = sphi 0, %s60
    %s78 = sphi 0, %s78
    %s80 = sphi 0, %s78
    %s81 = sphi 0, %s80
    %s95 = sphi 0, %s81
    %s103 = sphi 0, %s105
    %s106 = sphi 0, %s103
    %s107 = sphi 0, %s106
    %s123 = sphi 0, %s107
  $region4: #{conv_block_forward.7} parent=0 // loop_header_branch
    %12 = sbr.rel (%p10) target = $region8
  $region5: #{conv_block_forward.7} parent=0 // loop_body
    %s14 = ssub.s32 %s9, 1
    %s15 = ssub.s32 %s9, 2
    %s22 = sadd.s32 1, %s17
    %p23 = scmp.ge.s32.totalorder %s22, 2
    %s24 = scalar_select %p23, 0, %s22
    %s25 = sadd.s32 1, %s16
    %s26 = scalar_select %p23, %s25, %s16
    %p27 = scmp.ge.s32.totalorder %s26, 2
    %s28 = scalar_select %p27, 0, %s26
    %s29 = ssub.s32 %s16, %s28
    %s30 = ssub.s32 %s17, %s24
    %s31 = sor.u32 %s29, %s30
    %p32 = scmp.eq.s32.totalorder %s31, 0
    %s34 = sadd.s32 %s33, 1
    %s35 = scalar_select %p32, %s33, %s34
    %p38 = pneg %p32
    %p39 = scmp.eq.s32.totalorder %s9, 3
    %p40 = por %p38, %p39
    %p41 = scmp.ne.s32.totalorder %s33, %s36
    %p42 = scmp.eq.s32.totalorder %s9, 0
    %p43 = por %p41, %p42
    %p44 = scmp.ne.s32.totalorder %s33, %s36
    %p45 = scmp.eq.s32.totalorder %s14, 3
    %p46 = por %p44, %p45
    %p47 = scmp.ne.s32.totalorder %s36, %s37
    %p48 = scmp.eq.s32.totalorder %s14, 0
    %p49 = por %p47, %p48
    %p50 = scmp.ne.s32.totalorder %s36, %s37
    %p51 = scmp.eq.s32.totalorder %s15, 3
    %p52 = por %p50, %p51
    %p54 = scmp.ne.s32.totalorder %s37, %s53
    %p55 = scmp.eq.s32.totalorder %s15, 0
    %p56 = por %p54, %p55
    %s58 = sadd.s32 %s57, 1
    %p61 = scmp.eq.s32.totalorder %s9, 3
    %p62 = scmp.ne.s32.totalorder %s57, %s59
    %p63 = scmp.eq.s32.totalorder %s9, 0
    %p64 = por %p62, %p63
    %p65 = scmp.ne.s32.totalorder %s57, %s59
    %p66 = scmp.eq.s32.totalorder %s14, 3
    %p67 = por %p65, %p66
    %p68 = scmp.ne.s32.totalorder %s59, %s60
    %p69 = scmp.eq.s32.totalorder %s14, 0
    %p70 = por %p68, %p69
    %p71 = scmp.ne.s32.totalorder %s59, %s60
    %p72 = scmp.eq.s32.totalorder %s15, 3
    %p73 = por %p71, %p72
    %p75 = scmp.ne.s32.totalorder %s60, %s74
    %p76 = scmp.eq.s32.totalorder %s15, 0
    %p77 = por %p75, %p76
    %s79 = sadd.s32 %s78, 1
    %p82 = scmp.eq.s32.totalorder %s9, 3
    %p83 = scmp.ne.s32.totalorder %s78, %s80
    %p84 = scmp.eq.s32.totalorder %s9, 0
    %p85 = por %p83, %p84
    %p86 = scmp.ne.s32.totalorder %s78, %s80
    %p87 = scmp.eq.s32.totalorder %s14, 3
    %p88 = por %p86, %p87
    %p89 = scmp.ne.s32.totalorder %s80, %s81
    %p90 = scmp.eq.s32.totalorder %s14, 0
    %p91 = por %p89, %p90
    %p92 = scmp.ne.s32.totalorder %s80, %s81
    %p93 = scmp.eq.s32.totalorder %s15, 3
    %p94 = por %p92, %p93
    %p96 = scmp.ne.s32.totalorder %s81, %s95
    %p97 = scmp.eq.s32.totalorder %s15, 0
    %p98 = por %p96, %p97
    %s99 = ssub.s32 %s16, %s28
    %s100 = ssub.s32 %s17, %s24
    %s101 = sor.u32 %s99, %s100
    %p102 = scmp.eq.s32.totalorder %s101, 0
    %s104 = sadd.s32 %s103, 1
    %s105 = scalar_select %p102, %s103, %s104
    %p108 = pneg %p102
    %p109 = scmp.eq.s32.totalorder %s9, 3
    %p110 = por %p108, %p109
    %p111 = scmp.ne.s32.totalorder %s103, %s106
    %p112 = scmp.eq.s32.totalorder %s9, 0
    %p113 = por %p111, %p112
    %p114 = scmp.ne.s32.totalorder %s103, %s106
    %p115 = scmp.eq.s32.totalorder %s14, 3
    %p116 = por %p114, %p115
    %p117 = scmp.ne.s32.totalorder %s106, %s107
    %p118 = scmp.eq.s32.totalorder %s14, 0
    %p119 = por %p117, %p118
    %p120 = scmp.ne.s32.totalorder %s106, %s107
    %p121 = scmp.eq.s32.totalorder %s15, 3
    %p122 = por %p120, %p121
    %p124 = scmp.ne.s32.totalorder %s107, %s123
    %p125 = scmp.eq.s32.totalorder %s15, 0
    %p126 = por %p124, %p125
    %p127 = scmp.le.s32.totalorder 1, %s9
    %p128 = scmp.lt.s32.totalorder %s9, 5
    %p129 = pnand %p127, %p128
    %p130 = pneg %p129
    // Predicated region
    $region9: #{conv_block_forward.7} parent=5 // pred_check
      _
    $region10: #{conv_block_forward.7} parent=5 // pred_check_branch
      %132 = sbr.rel (%p129) target = $region12
    $region11: #{conv_block_forward.7} parent=5 // pred_region
      %s133 = ssub.s32 %s9, 1
      // Predicated region
      $region13: #{conv_block_forward.7} parent=11 // pred_check
        %p134 = pneg %p70
      $region14: #{conv_block_forward.7} parent=11 // pred_check_branch
        %136 = sbr.rel (%p134) target = $region16
      $region15: #{conv_block_forward.7} parent=11 // pred_region
        _
      $region16: #{conv_block_forward.7} parent=11 // pred_fallthru
        _
      // Predicated region
      $region17: #{conv_block_forward.7} parent=11 // pred_check
        %p137 = pneg %p91
      $region18: #{conv_block_forward.7} parent=11 // pred_check_branch
        %139 = sbr.rel (%p137) target = $region20
      $region19: #{conv_block_forward.7} parent=11 // pred_region
        _
      $region20: #{conv_block_forward.7} parent=11 // pred_fallthru
        _
    $region12: #{conv_block_forward.7} parent=5 // pred_fallthru
      _
    %p140 = scmp.lt.s32.totalorder %s9, 4
    // Predicated region
    $region21: #{conv_block_forward.7} parent=5 // pred_check
      %p141 = pneg %p140
    $region22: #{conv_block_forward.7} parent=5 // pred_check_branch
      %143 = sbr.rel (%p141) target = $region24
    $region23: #{conv_block_forward.7} parent=5 // pred_region
      // Predicated region
      $region25: #{conv_block_forward.7} parent=23 // pred_check
        %p144 = pneg %p43
      $region26: #{conv_block_forward.7} parent=23 // pred_check_branch
        %146 = sbr.rel (%p144) target = $region28
      $region27: #{conv_block_forward.7} parent=23 // pred_region
        %s147 = smul.u32 8, %s17
        %p148 = scmp.lt.s32.totalorder %s16, 1
        %s149 = scalar_select %p148, %s16, 1
        %p150 = scmp.lt.s32.totalorder %s147, 15
        %s151 = scalar_select %p150, %s147, 15
        %s152 = smul.addr %s151, 2
        %s153 = smul.addr %s149, 32
        %s154 = sadd.s32 %s152, %s153
        %s155 = smul.addr %s154, 8
        %s156 = scalar_lea.vmem %s0, %s155
        %s157 = smul.u32 8, %s17
      $region28: #{conv_block_forward.7} parent=23 // pred_fallthru
        _
    $region24: #{conv_block_forward.7} parent=5 // pred_fallthru
      _
    %p158 = scmp.le.s32.totalorder 1, %s9
    %p159 = scmp.lt.s32.totalorder %s9, 5
    %p160 = pnand %p158, %p159
    %p161 = pneg %p160
    // Predicated region
    $region29: #{conv_block_forward.7} parent=5 // pred_check
      _
    $region30: #{conv_block_forward.7} parent=5 // pred_check_branch
      %163 = sbr.rel (%p160) target = $region32
    $region31: #{conv_block_forward.7} parent=5 // pred_region
      %s164 = ssub.s32 %s9, 1
      %s165 = smul.u32 8, %s19
      %p166 = scmp.lt.s32.totalorder %s18, 1
      %s167 = scalar_select %p166, %s18, 1
      %p168 = scmp.lt.s32.totalorder %s165, 15
      %s169 = scalar_select %p168, %s165, 15
      %s170 = smul.addr %s169, 2
      %s171 = smul.addr %s167, 32
      %s172 = sadd.s32 %s170, %s171
      %s173 = smul.addr %s172, 8
      %s174 = scalar_lea.vmem %s0, %s173
      %p175 = pneg %p49
      %p176 = pneg %p46
      %p177 = pneg %p70
      %p178 = pneg %p67
      %p179 = pneg %p91
      %p180 = pneg %p88
      %p181 = pneg %p119
      %p182 = pneg %p116
      %s183 = smul.u32 8, %s19
      %p184 = scmp.lt.s32.totalorder %s18, 1
      %s185 = scalar_select %p184, %s18, 1
      %p186 = scmp.lt.s32.totalorder %s183, 15
      %s187 = scalar_select %p186, %s183, 15
      %s188 = smul.addr %s187, 2
      %s189 = smul.addr %s185, 32
      %s190 = sadd.s32 %s188, %s189
      %s191 = smul.addr %s190, 8
      %s192 = scalar_lea.vmem %s3, %s191
      %s193 = smul.u32 8, %s19
      %p194 = scmp.lt.s32.totalorder %s18, 1
      %s195 = scalar_select %p194, %s18, 1
      %p196 = scmp.lt.s32.totalorder %s193, 15
      %s197 = scalar_select %p196, %s193, 15
      %s198 = smul.addr %s197, 2
      %s199 = smul.addr %s195, 32
      %s200 = sadd.s32 %s198, %s199
      %s201 = smul.addr %s200, 8
      %s202 = scalar_lea.vmem %s0, %s201
      %s203 = smul.u32 8, %s19
      %s204 = smul.u32 8, %s19
      %p205 = scmp.lt.s32.totalorder %s18, 1
      %s206 = scalar_select %p205, %s18, 1
      %p207 = scmp.lt.s32.totalorder %s204, 15
      %s208 = scalar_select %p207, %s204, 15
      %s209 = smul.addr %s208, 2
      %s210 = smul.addr %s206, 32
      %s211 = sadd.s32 %s209, %s210
      %s212 = smul.addr %s211, 8
      %s213 = scalar_lea.vmem %s3, %s212
      %s214 = smul.u32 8, %s19
      %v215 = vld [vmem:[%s202] sm:$0xff]
      %v216 = vld [vmem:[%s202 + $0x8] sm:$0xff]
      %v217 = vld [vmem:[%s202 + $0x10] sm:$0xff]
      %v218 = vld [vmem:[%s202 + $0x18] sm:$0xff]
      %v219 = vld [vmem:[%s202 + $0x20] sm:$0xff]
      %v220 = vld [vmem:[%s202 + $0x28] sm:$0xff]
      %v221 = vld [vmem:[%s202 + $0x30] sm:$0xff]
      %v222 = vld [vmem:[%s202 + $0x38] sm:$0xff]
      %v223 = vld [vmem:[%s202 + $0x40] sm:$0xff]
      %v224 = vld [vmem:[%s202 + $0x48] sm:$0xff]
      %v225 = vld [vmem:[%s202 + $0x50] sm:$0xff]
      %v226 = vld [vmem:[%s202 + $0x58] sm:$0xff]
      %v227 = vld [vmem:[%s202 + $0x60] sm:$0xff]
      %v228 = vld [vmem:[%s202 + $0x68] sm:$0xff]
      %v229 = vld [vmem:[%s202 + $0x70] sm:$0xff]
      %v230 = vld [vmem:[%s202 + $0x78] sm:$0xff]
      %v231 = vld [vmem:[%s1] sm:$0x1]
      %v233 = vlaneseq
      %v234 = vshrl.u32 %v233, 7
      %v235 = vsub.s32 0, %v234
      %v236 = vrot.slane %v231, %v235
      %v238 = vmul.f32 %v215, %v236
      %v239 = vmul.f32 %v216, %v236
      %v240 = vmul.f32 %v217, %v236
      %v241 = vmul.f32 %v218, %v236
      %v242 = vmul.f32 %v219, %v236
      %v243 = vmul.f32 %v220, %v236
      %v244 = vmul.f32 %v221, %v236
      %v245 = vmul.f32 %v222, %v236
      %v246 = vmul.f32 %v223, %v236
      %v247 = vmul.f32 %v224, %v236
      %v248 = vmul.f32 %v225, %v236
      %v249 = vmul.f32 %v226, %v236
      %v250 = vmul.f32 %v227, %v236
      %v251 = vmul.f32 %v228, %v236
      %v252 = vmul.f32 %v229, %v236
      %v253 = vmul.f32 %v230, %v236
      %v254 = vld [vmem:[%s2] sm:$0x1]
      %v256 = vlaneseq
      %v257 = vshrl.u32 %v256, 7
      %v258 = vsub.s32 0, %v257
      %v259 = vrot.slane %v254, %v258
      %v261 = vadd.f32 %v238, %v259
      %v262 = vadd.f32 %v239, %v259
      %v263 = vadd.f32 %v240, %v259
      %v264 = vadd.f32 %v241, %v259
      %v265 = vadd.f32 %v242, %v259
      %v266 = vadd.f32 %v243, %v259
      %v267 = vadd.f32 %v244, %v259
      %v268 = vadd.f32 %v245, %v259
      %v269 = vadd.f32 %v246, %v259
      %v270 = vadd.f32 %v247, %v259
      %v271 = vadd.f32 %v248, %v259
      %v272 = vadd.f32 %v249, %v259
      %v273 = vadd.f32 %v250, %v259
      %v274 = vadd.f32 %v251, %v259
      %v275 = vadd.f32 %v252, %v259
      %v276 = vadd.f32 %v253, %v259
      %v277 = vmax.f32 %v261, 0.0
      %v278 = vmax.f32 %v262, 0.0
      %v279 = vmax.f32 %v263, 0.0
      %v280 = vmax.f32 %v264, 0.0
      %v281 = vmax.f32 %v265, 0.0
      %v282 = vmax.f32 %v266, 0.0
      %v283 = vmax.f32 %v267, 0.0
      %v284 = vmax.f32 %v268, 0.0
      %v285 = vmax.f32 %v269, 0.0
      %v286 = vmax.f32 %v270, 0.0
      %v287 = vmax.f32 %v271, 0.0
      %v288 = vmax.f32 %v272, 0.0
      %v289 = vmax.f32 %v273, 0.0
      %v290 = vmax.f32 %v274, 0.0
      %v291 = vmax.f32 %v275, 0.0
      %v292 = vmax.f32 %v276, 0.0
      %293 = vst [vmem:[%s213] sm:$0xff] %v277
      %294 = vst [vmem:[%s213 + $0x8] sm:$0xff] %v278
      %295 = vst [vmem:[%s213 + $0x10] sm:$0xff] %v279
      %296 = vst [vmem:[%s213 + $0x18] sm:$0xff] %v280
      %297 = vst [vmem:[%s213 + $0x20] sm:$0xff] %v281
      %298 = vst [vmem:[%s213 + $0x28] sm:$0xff] %v282
      %299 = vst [vmem:[%s213 + $0x30] sm:$0xff] %v283
      %300 = vst [vmem:[%s213 + $0x38] sm:$0xff] %v284
      %301 = vst [vmem:[%s213 + $0x40] sm:$0xff] %v285
      %302 = vst [vmem:[%s213 + $0x48] sm:$0xff] %v286
      %303 = vst [vmem:[%s213 + $0x50] sm:$0xff] %v287
      %304 = vst [vmem:[%s213 + $0x58] sm:$0xff] %v288
      %305 = vst [vmem:[%s213 + $0x60] sm:$0xff] %v289
      %306 = vst [vmem:[%s213 + $0x68] sm:$0xff] %v290
      %307 = vst [vmem:[%s213 + $0x70] sm:$0xff] %v291
      %308 = vst [vmem:[%s213 + $0x78] sm:$0xff] %v292
      %s309 = smul.u32 8, %s19
      %p310 = scmp.lt.s32.totalorder %s18, 1
      %s311 = scalar_select %p310, %s18, 1
      %p312 = scmp.lt.s32.totalorder %s309, 15
      %s313 = scalar_select %p312, %s309, 15
      %s314 = smul.addr %s313, 2
      %s315 = smul.addr %s311, 32
      %s316 = sadd.s32 %s314, %s315
      %s317 = smul.addr %s316, 8
      %s318 = scalar_lea.vmem %s3, %s317
      // Predicated region
      $region33: #{conv_block_forward.7} parent=31 // pred_check
        %p319 = pneg %p116
      $region34: #{conv_block_forward.7} parent=31 // pred_check_branch
        %321 = sbr.rel (%p319) target = $region36
      $region35: #{conv_block_forward.7} parent=31 // pred_region
        %s322 = smul.u32 8, %s19
      $region36: #{conv_block_forward.7} parent=31 // pred_fallthru
        _
    $region32: #{conv_block_forward.7} parent=5 // pred_fallthru
      _
    %p323 = scmp.le.s32.totalorder 2, %s9
    // Predicated region
    $region37: #{conv_block_forward.7} parent=5 // pred_check
      %p324 = pneg %p323
    $region38: #{conv_block_forward.7} parent=5 // pred_check_branch
      %326 = sbr.rel (%p324) target = $region40
    $region39: #{conv_block_forward.7} parent=5 // pred_region
      %s327 = ssub.s32 %s9, 2
      // Predicated region
      $region41: #{conv_block_forward.7} parent=39 // pred_check
        %p328 = pneg %p122
      $region42: #{conv_block_forward.7} parent=39 // pred_check_branch
        %330 = sbr.rel (%p328) target = $region44
      $region43: #{conv_block_forward.7} parent=39 // pred_region
        %s331 = smul.u32 8, %s21
        %p332 = scmp.lt.s32.totalorder %s20, 1
        %s333 = scalar_select %p332, %s20, 1
        %p334 = scmp.lt.s32.totalorder %s331, 15
        %s335 = scalar_select %p334, %s331, 15
        %s336 = smul.addr %s335, 2
        %s337 = smul.addr %s333, 32
        %s338 = sadd.s32 %s336, %s337
        %s339 = smul.addr %s338, 8
        %s340 = scalar_lea.vmem %s3, %s339
      $region44: #{conv_block_forward.7} parent=39 // pred_fallthru
        _
    $region40: #{conv_block_forward.7} parent=5 // pred_fallthru
      _
  $region6: #{conv_block_forward.7} parent=0 // loop_footer
    %s13 = sadd.s32 1, %s9
  $region7: #{conv_block_forward.7} parent=0 // loop_footer_branch
    %8 = sbr.rel target = $region3
  $region8: #{conv_block_forward.7} parent=0 // loop_exit
    _

</llo_original>
